<compile_context>
chip_gen: v5e
topology: v5e:2x2
jax: 0.10.0
libtpu: 0.0.40
codegen_flags: <defaults>
</compile_context>

<pallas_src>
import functools
import numpy as np

import jax
import jax.numpy as jnp
from jax.experimental import pallas as pl
from jax.experimental.pallas import tpu as pltpu


# ----------------------------------------------------------------------------
# Fused kernel: encoder (num_layers, unrolled) + short-memory compression +
# long-memory gated update + output head, for one block of BB batch rows.
# ----------------------------------------------------------------------------
def _fused_forward_kernel(src_ref, smext_ref, long_ref,
                          wqkv_ref, bqkv_ref, wo_ref, bo_ref,
                          ln1g_ref, ln1b_ref, w1_ref, b1_ref,
                          w2_ref, b2_ref, ln2g_ref, ln2b_ref,
                          smw_ref, smb_ref, lmw_ref, lmb_ref,
                          outw_ref, outb_ref,
                          comp_ref, newlong_ref, prob_ref,
                          *, num_layers, num_heads, eps):
    BB, S, D = src_ref.shape
    Dh = D // num_heads
    V = outw_ref.shape[1]
    scale = 1.0 / float(np.sqrt(Dh))
    bf16 = jnp.bfloat16
    f32 = jnp.float32

    x = src_ref[...].reshape(BB * S, D)                     # (BB*S, D) f32

    for l in range(num_layers):                             # static unroll
        wqkv_l = wqkv_ref[l]                                # (D, 3D) bf16
        wo_l = wo_ref[l]                                    # (D, D)  bf16

        # fused QKV projection (bf16 operands, f32 MXU accumulation)
        qkv = jnp.dot(x.astype(bf16), wqkv_l,
                      preferred_element_type=f32) + bqkv_ref[l]        # (BB*S, 3D)
        qkv3 = qkv.reshape(BB, S, 3 * D)

        # attention: batched over the BB rows of this block; heads are a short
        # static loop accumulated through the matching Wo row-slice — no
        # lane-axis concatenate of head outputs.
        a = bo_ref[l]                                                   # (1, D)
        for h in range(num_heads):
            qh = qkv3[:, :, h * Dh:(h + 1) * Dh].astype(bf16)
            kh = qkv3[:, :, D + h * Dh:D + (h + 1) * Dh].astype(bf16)
            vh = qkv3[:, :, 2 * D + h * Dh:2 * D + (h + 1) * Dh].astype(bf16)
            s = jnp.einsum('bqd,bkd->bqk', qh, kh,
                           preferred_element_type=f32) * scale          # (BB,S,S)
            s = s - jnp.max(s, axis=-1, keepdims=True)
            p = jnp.exp(s)
            p = p / jnp.sum(p, axis=-1, keepdims=True)                   # exact
            hv = jnp.einsum('bqk,bkd->bqd', p.astype(bf16), vh,
                            preferred_element_type=f32)                  # (BB,S,Dh)
            a = a + jnp.dot(hv.reshape(BB * S, Dh).astype(bf16),
                            wo_l[h * Dh:(h + 1) * Dh, :],
                            preferred_element_type=f32)                  # (BB*S, D)

        # residual + LayerNorm 1 (f32 VPU math, v5e-safe)
        y = x + a
        mu = jnp.mean(y, axis=-1, keepdims=True)
        var = jnp.mean((y - mu) * (y - mu), axis=-1, keepdims=True)
        x1 = (y - mu) * jax.lax.rsqrt(var + eps) * ln1g_ref[l] + ln1b_ref[l]

        # FFN (ReLU)
        h1 = jnp.dot(x1.astype(bf16), w1_ref[l],
                     preferred_element_type=f32) + b1_ref[l]
        h1 = jnp.maximum(h1, 0.0)
        h2 = jnp.dot(h1.astype(bf16), w2_ref[l],
                     preferred_element_type=f32) + b2_ref[l]

        # residual + LayerNorm 2
        y2 = x1 + h2
        mu2 = jnp.mean(y2, axis=-1, keepdims=True)
        var2 = jnp.mean((y2 - mu2) * (y2 - mu2), axis=-1, keepdims=True)
        x = (y2 - mu2) * jax.lax.rsqrt(var2 + eps) * ln2g_ref[l] + ln2b_ref[l]

    enc = x.reshape(BB, S, D)                                            # (BB,S,D)

    # ShortMemory compressor: Conv1d(max_length -> 1, k=1) == weighted sum over
    # sequence positions (VPU).  sm_w is pre-broadcast to (S, D).
    comp_ref[...] = (jnp.sum(smw_ref[...][None] * enc, axis=1, keepdims=True)
                     + smb_ref[...])                                     # (BB,1,D)

    # LongMemory gated update on the extracted (pre-update) short memory:
    # c = Conv1d(Sm -> Lm, k=1)(short_ext);  new_long = long*sig(c) + sig(c)*tanh(c)
    # (matches the reference `long *= sig; long += sig*tanh(c)` exactly).
    for b in range(BB):                                                  # static BB
        c = jnp.dot(lmw_ref[...], smext_ref[b],
                    preferred_element_type=f32) + lmb_ref[...]           # (Lm, D)
        sig = jax.nn.sigmoid(c)
        newlong_ref[b] = long_ref[b] * sig + sig * jnp.tanh(c)

    # Output head: softmax(Linear(mean(enc, seq))) — exact division in f32.
    m = jnp.mean(enc, axis=1)                                            # (BB, D)
    logits = jnp.dot(m.astype(bf16), outw_ref[...],
                     preferred_element_type=f32) + outb_ref[...]         # (BB, V)
    z = logits - jnp.max(logits, axis=-1, keepdims=True)
    e = jnp.exp(z)
    prob = e / jnp.sum(e, axis=-1, keepdims=True)
    prob_ref[...] = prob.reshape(BB, 1, V)


def fused_forward(src_perm, short_ext, long_mem, params, *, num_heads):
    """One pallas_call for the whole forward. Returns (comp, new_long, probs)."""
    B, S, D = src_perm.shape
    Sm = short_ext.shape[1]
    Lm = long_mem.shape[1]
    e = params["enc"]
    L = e["wqkv"].shape[0]
    F = e["w1"].shape[2]
    V = params["out_w"].shape[1]

    # 2 batch rows per grid step keeps a >=2-way "parallel" axis (v7x megacore)
    # while the matmuls still run on the flattened (BB*S, D) slab.
    BB = 2 if (B % 2 == 0 and B >= 2) else 1
    NB = B // BB

    kernel = functools.partial(_fused_forward_kernel,
                               num_layers=L, num_heads=num_heads, eps=1e-5)

    # NOTE: weight blocks are grid-invariant; at these sizes double-buffering
    # them is harmless (whole kernel << VMEM).  Mark pipeline_mode=pl.Buffered(1)
    # before scaling D/F (v7x has only 64 MiB VMEM).
    const3 = lambda b: (0, 0, 0)
    const2 = lambda b: (0, 0)
    batch3 = lambda b: (b, 0, 0)

    comp, new_long, probs = pl.pallas_call(
        kernel,
        grid=(NB,),
        in_specs=[
            pl.BlockSpec((BB, S, D), batch3),        # src (permuted, selected-first)
            pl.BlockSpec((BB, Sm, D), batch3),       # extracted short memory
            pl.BlockSpec((BB, Lm, D), batch3),       # current long memory
            pl.BlockSpec((L, D, 3 * D), const3),     # wqkv (bf16, stacked)
            pl.BlockSpec((L, 1, 3 * D), const3),     # bqkv
            pl.BlockSpec((L, D, D), const3),         # wo (bf16)
            pl.BlockSpec((L, 1, D), const3),         # bo
            pl.BlockSpec((L, 1, D), const3),         # ln1_g
            pl.BlockSpec((L, 1, D), const3),         # ln1_b
            pl.BlockSpec((L, D, F), const3),         # w1 (bf16)
            pl.BlockSpec((L, 1, F), const3),         # b1
            pl.BlockSpec((L, F, D), const3),         # w2 (bf16)
            pl.BlockSpec((L, 1, D), const3),         # b2
            pl.BlockSpec((L, 1, D), const3),         # ln2_g
            pl.BlockSpec((L, 1, D), const3),         # ln2_b
            pl.BlockSpec((S, D), const2),            # sm_w (pre-broadcast on D)
            pl.BlockSpec((1, D), const2),            # sm_b
            pl.BlockSpec((Lm, Sm), const2),          # lm_w (f32, tiny — keeps memory state exact)
            pl.BlockSpec((Lm, D), const2),           # lm_b (pre-broadcast on D)
            pl.BlockSpec((D, V), const2),            # out_w (bf16)
            pl.BlockSpec((1, V), const2),            # out_b
        ],
        out_specs=(
            pl.BlockSpec((BB, 1, D), batch3),        # compressed short memory row
            pl.BlockSpec((BB, Lm, D), batch3),       # updated long memory
            pl.BlockSpec((BB, 1, V), batch3),        # softmax probs (lane-dense V)
        ),
        out_shape=(
            jax.ShapeDtypeStruct((B, 1, D), jnp.float32),
            jax.ShapeDtypeStruct((B, Lm, D), jnp.float32),
            jax.ShapeDtypeStruct((B, 1, V), jnp.float32),
        ),
        compiler_params=pltpu.CompilerParams(
            dimension_semantics=("parallel",),
            vmem_limit_bytes=32 * 1024 * 1024),
    )(src_perm, short_ext, long_mem,
      e["wqkv"], e["bqkv"], e["wo"], e["bo"], e["ln1_g"], e["ln1_b"],
      e["w1"], e["b1"], e["w2"], e["b2"], e["ln2_g"], e["ln2_b"],
      params["sm_w"], params["sm_b"], params["lm_w"], params["lm_b"],
      params["out_w"], params["out_b"])
    return comp[:, 0, :], new_long, probs[:, 0, :]


# ----------------------------------------------------------------------------
# Plain-JAX glue (embedding gather, position encoding, fixed-shape batch
# selection, memory-buffer scatter) — shape-stable, jitted once.
# ----------------------------------------------------------------------------
def position_encoding(seq_len, d_model):
    # assumes even d_model (standard sinusoidal interleave)
    pos = jnp.arange(seq_len, dtype=jnp.float32)[:, None]
    i = jnp.arange(0, d_model, 2, dtype=jnp.float32)
    angle = pos / jnp.power(10000.0, i / d_model)
    pe = jnp.zeros((seq_len, d_model), jnp.float32)
    pe = pe.at[:, 0::2].set(jnp.sin(angle))
    pe = pe.at[:, 1::2].set(jnp.cos(angle))
    return pe


@functools.partial(jax.jit, static_argnames=("num_heads",))
def _forward_core(params, short, long_mem, memory_index, source_ids, target,
                  mask, *, num_heads):
    B, S = source_ids.shape
    D = params["embedding"].shape[1]
    Sm = short.shape[1]

    # token embedding + position encoding (data-dependent gather stays in XLA)
    emb = jnp.take(params["embedding"], source_ids, axis=0)            # (B, S, D)
    src = emb + position_encoding(S, D)[None]

    # fixed-shape batch selection: stable-permute selected rows to the front and
    # keep a validity mask — every Pallas block stays shape-stable.
    order = jnp.argsort(jnp.logical_not(mask).astype(jnp.int32), stable=True)
    valid = jnp.take(mask, order)                                      # (B,)
    src_perm = jnp.take(src, order, axis=0)

    # extract short memory (circular window, pre-update; buffer rows 0..B-1)
    idx = (jnp.arange(Sm) + memory_index) % Sm
    short_ext = jnp.take(short, idx, axis=1)                           # (B, Sm, D)

    # fused encoder + tail (the reference encoder ignores the memories, so the
    # sentence_index==0 branch is functionally identical).
    comp, new_long_all, probs = fused_forward(src_perm, short_ext, long_mem,
                                              params, num_heads=num_heads)

    # ShortMemory.update_memory: write compressed rows into slot memory_index of
    # buffer rows 0..bsel-1 only.
    old_row = jax.lax.dynamic_slice_in_dim(short, memory_index, 1, axis=1)[:, 0, :]
    new_row = jnp.where(valid[:, None], comp, old_row)
    new_short = jax.lax.dynamic_update_slice_in_dim(
        short, new_row[:, None, :], memory_index, axis=1)
    new_index = (memory_index + 1) % Sm

    # LongMemory.update_memory: only buffer rows 0..bsel-1 get updated.
    new_long = jnp.where(valid[:, None, None], new_long_all, long_mem)

    tgt_perm = jnp.take(target, order, axis=0)
    return probs, tgt_perm, new_short, new_long, new_index


def forward(params, state, cfg, source_ids, target, sentence_index,
            sentence_lengths):
    mask = jnp.asarray(sentence_lengths) >= jnp.int32(sentence_index)
    probs, tgt_perm, new_short, new_long, new_index = _forward_core(
        params, state["short"], state["long"], state["memory_index"],
        source_ids, target, mask, num_heads=cfg["num_heads"])

    # final output has bsel rows (reference semantics); slice host-side.
    bsel = int(jnp.sum(mask))
    out = probs[:bsel]
    tgt = tgt_perm[:bsel]
    new_state = {"short": new_short, "long": new_long, "memory_index": new_index}
    return out, tgt, new_state


# ----------------------------------------------------------------------------
# Deterministic parameter init (per-layer weights stacked, matmul weights bf16,
# conv / LN / bias params f32, conv weights pre-broadcast along the lane axis).
# ----------------------------------------------------------------------------
def init_params(key, cfg):
    D = cfg["dim_model"]
    F = cfg["dim_feedforward"]
    V = cfg["embedding_size"]
    Sm = cfg["short_memory_size"]
    Lm = cfg["long_memory_size"]
    Smax = cfg["max_length"]
    L = cfg["num_encoder_layers"]

    def nrm(k, shape, s):
        return s * jax.random.normal(k, shape, jnp.float32)

    keys = iter(jax.random.split(key, 8 + 6 * L))

    sm_w = nrm(next(keys), (Smax, 1), 0.2)       # Conv1d(max_length -> 1, k=1)
    sm_b = nrm(next(keys), (1, 1), 0.1)
    lm_w = nrm(next(keys), (Lm, Sm), 0.2)        # Conv1d(Sm -> Lm, k=1)
    lm_b = nrm(next(keys), (Lm, 1), 0.1)

    wqkv_l, wo_l, w1_l, w2_l = [], [], [], []
    for _ in range(L):
        wq = nrm(next(keys), (D, D), 1.0 / np.sqrt(D))
        wk = nrm(next(keys), (D, D), 1.0 / np.sqrt(D))
        wv = nrm(next(keys), (D, D), 1.0 / np.sqrt(D))
        wo = nrm(next(keys), (D, D), 1.0 / np.sqrt(D))
        w1 = nrm(next(keys), (D, F), 1.0 / np.sqrt(D))
        w2 = nrm(next(keys), (F, D), 1.0 / np.sqrt(F))
        wqkv_l.append(jnp.concatenate([wq, wk, wv], axis=1))   # no scale folding
        wo_l.append(wo)
        w1_l.append(w1)
        w2_l.append(w2)

    enc = {
        "wqkv": jnp.stack(wqkv_l).astype(jnp.bfloat16),        # (L, D, 3D)
        "bqkv": jnp.zeros((L, 1, 3 * D), jnp.float32),
        "wo": jnp.stack(wo_l).astype(jnp.bfloat16),            # (L, D, D)
        "bo": jnp.zeros((L, 1, D), jnp.float32),
        "ln1_g": jnp.ones((L, 1, D), jnp.float32),
        "ln1_b": jnp.zeros((L, 1, D), jnp.float32),
        "w1": jnp.stack(w1_l).astype(jnp.bfloat16),            # (L, D, F)
        "b1": jnp.zeros((L, 1, F), jnp.float32),
        "w2": jnp.stack(w2_l).astype(jnp.bfloat16),            # (L, F, D)
        "b2": jnp.zeros((L, 1, D), jnp.float32),
        "ln2_g": jnp.ones((L, 1, D), jnp.float32),
        "ln2_b": jnp.zeros((L, 1, D), jnp.float32),
    }

    params = {
        "embedding": nrm(next(keys), (V, D), 0.1),
        # pre-broadcast along the lane (D) axis -> lane-dense blocks in kernel
        "sm_w": jnp.broadcast_to(sm_w, (Smax, D)).astype(jnp.float32),
        "sm_b": jnp.broadcast_to(sm_b, (1, D)).astype(jnp.float32),
        "lm_w": lm_w,                                           # (Lm, Sm) f32
        "lm_b": jnp.broadcast_to(lm_b, (Lm, D)).astype(jnp.float32),
        "out_w": nrm(next(keys), (D, V), 0.1).astype(jnp.bfloat16),
        "out_b": nrm(next(keys), (1, V), 0.1),
        "enc": enc,
    }
    return params


if __name__ == "__main__":
    cfg = dict(
        num_encoder_layers=2,
        dim_model=32,
        num_heads=4,
        dim_feedforward=64,
        short_memory_size=4,
        long_memory_size=8,
        embedding_size=128,
        batch_size=4,
        max_length=8,
    )

    key = jax.random.PRNGKey(0)
    k_par, k_src, k_tgt = jax.random.split(key, 3)
    params = init_params(k_par, cfg)

    # initialize_memory()
    state = {
        "short": jnp.zeros((cfg["batch_size"], cfg["short_memory_size"],
                            cfg["dim_model"]), jnp.float32),
        "long": jnp.zeros((cfg["batch_size"], cfg["long_memory_size"],
                           cfg["dim_model"]), jnp.float32),
        "memory_index": jnp.array(0, jnp.int32),
    }

    B, S = cfg["batch_size"], cfg["max_length"]
    source = jax.random.randint(k_src, (B, S), 0, cfg["embedding_size"],
                                dtype=jnp.int32)
    target = jax.random.randint(k_tgt, (B, S), 0, cfg["embedding_size"],
                                dtype=jnp.int32)
    sentence_index = 1
    sentence_lengths = jnp.array([3, 0, 5, 2], dtype=jnp.int32)   # -> 3 selected

    out, tgt, new_state = forward(params, state, cfg, source, target,
                                  sentence_index, sentence_lengths)
    jax.block_until_ready(out)
    jax.block_until_ready(tgt)
    jax.block_until_ready(new_state["short"])
    jax.block_until_ready(new_state["long"])

    assert out.shape == (3, cfg["embedding_size"])
    assert tgt.shape == (3, cfg["max_length"])
    out_np = np.asarray(out)
    assert np.all(np.isfinite(out_np))
    assert np.allclose(out_np.sum(axis=-1), 1.0, atol=1e-4)
    print("KERNEL_OK")
</pallas_src>

<mosaic_0001>
module attributes {stable_mosaic.version = 11 : i64} {
  func.func @_fused_forward_kernel(%arg0: i32, %arg1: memref<2x8x32xf32, #tpu.memory_space<vmem>>, %arg2: memref<2x4x32xf32, #tpu.memory_space<vmem>>, %arg3: memref<2x8x32xf32, #tpu.memory_space<vmem>>, %arg4: memref<2x32x96xbf16, #tpu.memory_space<vmem>>, %arg5: memref<2x1x96xf32, #tpu.memory_space<vmem>>, %arg6: memref<2x32x32xbf16, #tpu.memory_space<vmem>>, %arg7: memref<2x1x32xf32, #tpu.memory_space<vmem>>, %arg8: memref<2x1x32xf32, #tpu.memory_space<vmem>>, %arg9: memref<2x1x32xf32, #tpu.memory_space<vmem>>, %arg10: memref<2x32x64xbf16, #tpu.memory_space<vmem>>, %arg11: memref<2x1x64xf32, #tpu.memory_space<vmem>>, %arg12: memref<2x64x32xbf16, #tpu.memory_space<vmem>>, %arg13: memref<2x1x32xf32, #tpu.memory_space<vmem>>, %arg14: memref<2x1x32xf32, #tpu.memory_space<vmem>>, %arg15: memref<2x1x32xf32, #tpu.memory_space<vmem>>, %arg16: memref<8x32xf32, #tpu.memory_space<vmem>>, %arg17: memref<1x32xf32, #tpu.memory_space<vmem>>, %arg18: memref<8x4xf32, #tpu.memory_space<vmem>>, %arg19: memref<8x32xf32, #tpu.memory_space<vmem>>, %arg20: memref<32x128xbf16, #tpu.memory_space<vmem>>, %arg21: memref<1x128xf32, #tpu.memory_space<vmem>>, %arg22: memref<2x1x32xf32, #tpu.memory_space<vmem>>, %arg23: memref<2x8x32xf32, #tpu.memory_space<vmem>>, %arg24: memref<2x1x128xf32, #tpu.memory_space<vmem>>) attributes {dimension_semantics = [#tpu.dimension_semantics<parallel>], iteration_bounds = array<i64: 2>, scalar_prefetch = 0 : i64, scratch_operands = 0 : i64, tpu.core_type = #tpu.core_type<tc>, window_params = [{transform_indices = @transform_0, window_bounds = array<i64: 2, 8, 32>}, {transform_indices = @transform_1, window_bounds = array<i64: 2, 4, 32>}, {transform_indices = @transform_2, window_bounds = array<i64: 2, 8, 32>}, {pipeline_mode = #tpu.pipeline_mode<synchronous>, transform_indices = @transform_3, window_bounds = array<i64: 2, 32, 96>}, {pipeline_mode = #tpu.pipeline_mode<synchronous>, transform_indices = @transform_4, window_bounds = array<i64: 2, 1, 96>}, {pipeline_mode = #tpu.pipeline_mode<synchronous>, transform_indices = @transform_5, window_bounds = array<i64: 2, 32, 32>}, {pipeline_mode = #tpu.pipeline_mode<synchronous>, transform_indices = @transform_6, window_bounds = array<i64: 2, 1, 32>}, {pipeline_mode = #tpu.pipeline_mode<synchronous>, transform_indices = @transform_7, window_bounds = array<i64: 2, 1, 32>}, {pipeline_mode = #tpu.pipeline_mode<synchronous>, transform_indices = @transform_8, window_bounds = array<i64: 2, 1, 32>}, {pipeline_mode = #tpu.pipeline_mode<synchronous>, transform_indices = @transform_9, window_bounds = array<i64: 2, 32, 64>}, {pipeline_mode = #tpu.pipeline_mode<synchronous>, transform_indices = @transform_10, window_bounds = array<i64: 2, 1, 64>}, {pipeline_mode = #tpu.pipeline_mode<synchronous>, transform_indices = @transform_11, window_bounds = array<i64: 2, 64, 32>}, {pipeline_mode = #tpu.pipeline_mode<synchronous>, transform_indices = @transform_12, window_bounds = array<i64: 2, 1, 32>}, {pipeline_mode = #tpu.pipeline_mode<synchronous>, transform_indices = @transform_13, window_bounds = array<i64: 2, 1, 32>}, {pipeline_mode = #tpu.pipeline_mode<synchronous>, transform_indices = @transform_14, window_bounds = array<i64: 2, 1, 32>}, {pipeline_mode = #tpu.pipeline_mode<synchronous>, transform_indices = @transform_15, window_bounds = array<i64: 8, 32>}, {pipeline_mode = #tpu.pipeline_mode<synchronous>, transform_indices = @transform_16, window_bounds = array<i64: 1, 32>}, {pipeline_mode = #tpu.pipeline_mode<synchronous>, transform_indices = @transform_17, window_bounds = array<i64: 8, 4>}, {pipeline_mode = #tpu.pipeline_mode<synchronous>, transform_indices = @transform_18, window_bounds = array<i64: 8, 32>}, {pipeline_mode = #tpu.pipeline_mode<synchronous>, transform_indices = @transform_19, window_bounds = array<i64: 32, 128>}, {pipeline_mode = #tpu.pipeline_mode<synchronous>, transform_indices = @transform_20, window_bounds = array<i64: 1, 128>}, {transform_indices = @transform_21, window_bounds = array<i64: 2, 1, 32>}, {transform_indices = @transform_22, window_bounds = array<i64: 2, 8, 32>}, {transform_indices = @transform_23, window_bounds = array<i64: 2, 1, 128>}]} {
    %c0 = arith.constant 0 : index
    %c0_0 = arith.constant 0 : index
    %c0_1 = arith.constant 0 : index
    %0 = vector.load %arg1[%c0, %c0_0, %c0_1] : memref<2x8x32xf32, #tpu.memory_space<vmem>>, vector<2x8x32xf32>
    %1 = vector.shape_cast %0 : vector<2x8x32xf32> to vector<16x32xf32>
    %c0_2 = arith.constant 0 : index
    %c0_3 = arith.constant 0 : index
    %c0_4 = arith.constant 0 : index
    %2 = vector.load %arg4[%c0_2, %c0_3, %c0_4] : memref<2x32x96xbf16, #tpu.memory_space<vmem>>, vector<1x32x96xbf16>
    %3 = vector.shape_cast %2 : vector<1x32x96xbf16> to vector<32x96xbf16>
    %c0_5 = arith.constant 0 : index
    %c0_6 = arith.constant 0 : index
    %c0_7 = arith.constant 0 : index
    %4 = vector.load %arg6[%c0_5, %c0_6, %c0_7] : memref<2x32x32xbf16, #tpu.memory_space<vmem>>, vector<1x32x32xbf16>
    %5 = vector.shape_cast %4 : vector<1x32x32xbf16> to vector<32x32xbf16>
    %6 = arith.truncf %1 : vector<16x32xf32> to vector<16x32xbf16>
    %cst = arith.constant dense<0.000000e+00> : vector<16x96xf32>
    %7 = tpu.matmul %6, %3, %cst {dimension_numbers = #tpu.dot_dimension_numbers<[1], [0], [0], [1], [0, 0, 1, 1], [], []>} : vector<16x32xbf16>, vector<32x96xbf16>, vector<16x96xf32> -> vector<16x96xf32>
    %c0_8 = arith.constant 0 : index
    %c0_9 = arith.constant 0 : index
    %c0_10 = arith.constant 0 : index
    %8 = vector.load %arg5[%c0_8, %c0_9, %c0_10] : memref<2x1x96xf32, #tpu.memory_space<vmem>>, vector<1x1x96xf32>
    %9 = vector.shape_cast %8 : vector<1x1x96xf32> to vector<1x96xf32>
    %10 = vector.broadcast %9 : vector<1x96xf32> to vector<16x96xf32>
    %11 = arith.addf %7, %10 : vector<16x96xf32>
    %12 = vector.shape_cast %11 : vector<16x96xf32> to vector<2x8x96xf32>
    %c0_11 = arith.constant 0 : index
    %c0_12 = arith.constant 0 : index
    %c0_13 = arith.constant 0 : index
    %13 = vector.load %arg7[%c0_11, %c0_12, %c0_13] : memref<2x1x32xf32, #tpu.memory_space<vmem>>, vector<1x1x32xf32>
    %14 = vector.shape_cast %13 : vector<1x1x32xf32> to vector<1x32xf32>
    %15 = vector.extract_strided_slice %12 {offsets = [0, 0, 0], sizes = [2, 8, 8], strides = [1, 1, 1]} : vector<2x8x96xf32> to vector<2x8x8xf32>
    %16 = arith.truncf %15 : vector<2x8x8xf32> to vector<2x8x8xbf16>
    %17 = vector.extract_strided_slice %12 {offsets = [0, 0, 32], sizes = [2, 8, 8], strides = [1, 1, 1]} : vector<2x8x96xf32> to vector<2x8x8xf32>
    %18 = arith.truncf %17 : vector<2x8x8xf32> to vector<2x8x8xbf16>
    %19 = vector.extract_strided_slice %12 {offsets = [0, 0, 64], sizes = [2, 8, 8], strides = [1, 1, 1]} : vector<2x8x96xf32> to vector<2x8x8xf32>
    %20 = arith.truncf %19 : vector<2x8x8xf32> to vector<2x8x8xbf16>
    "tpu.trace_start"() <{level = 10 : i32, message = "bqd,bkd->bqk"}> : () -> ()
    %cst_14 = arith.constant dense<0.000000e+00> : vector<2x8x8xf32>
    %21 = tpu.matmul %16, %18, %cst_14 {dimension_numbers = #tpu.dot_dimension_numbers<[2], [2], [1], [1], [0, 0, 0, 1, 1, 1], [0], [0]>} : vector<2x8x8xbf16>, vector<2x8x8xbf16>, vector<2x8x8xf32> -> vector<2x8x8xf32>
    "tpu.trace_stop"() : () -> ()
    %cst_15 = arith.constant 0.353553385 : f32
    %22 = vector.broadcast %cst_15 : f32 to vector<2x8x8xf32>
    %23 = arith.mulf %21, %22 : vector<2x8x8xf32>
    %cst_16 = arith.constant dense<0xFF800000> : vector<2x8xf32>
    %24 = vector.multi_reduction <maximumf>, %23, %cst_16 [2] : vector<2x8x8xf32> to vector<2x8xf32>
    %25 = vector.shape_cast %24 : vector<2x8xf32> to vector<2x8x1xf32>
    %26 = vector.broadcast %25 : vector<2x8x1xf32> to vector<2x8x8xf32>
    %27 = arith.subf %23, %26 : vector<2x8x8xf32>
    %28 = math.exp %27 : vector<2x8x8xf32>
    %cst_17 = arith.constant dense<0.000000e+00> : vector<2x8xf32>
    %29 = vector.multi_reduction <add>, %28, %cst_17 [2] : vector<2x8x8xf32> to vector<2x8xf32>
    %30 = vector.shape_cast %29 : vector<2x8xf32> to vector<2x8x1xf32>
    %31 = vector.broadcast %30 : vector<2x8x1xf32> to vector<2x8x8xf32>
    %32 = arith.divf %28, %31 : vector<2x8x8xf32>
    %33 = arith.truncf %32 : vector<2x8x8xf32> to vector<2x8x8xbf16>
    "tpu.trace_start"() <{level = 10 : i32, message = "bqk,bkd->bqd"}> : () -> ()
    %cst_18 = arith.constant dense<0.000000e+00> : vector<2x8x8xf32>
    %34 = tpu.matmul %33, %20, %cst_18 {dimension_numbers = #tpu.dot_dimension_numbers<[2], [1], [1], [2], [0, 0, 0, 1, 1, 2], [0], [0]>} : vector<2x8x8xbf16>, vector<2x8x8xbf16>, vector<2x8x8xf32> -> vector<2x8x8xf32>
    "tpu.trace_stop"() : () -> ()
    %35 = vector.shape_cast %34 : vector<2x8x8xf32> to vector<16x8xf32>
    %36 = arith.truncf %35 : vector<16x8xf32> to vector<16x8xbf16>
    %37 = vector.extract_strided_slice %5 {offsets = [0, 0], sizes = [8, 32], strides = [1, 1]} : vector<32x32xbf16> to vector<8x32xbf16>
    %cst_19 = arith.constant dense<0.000000e+00> : vector<16x32xf32>
    %38 = tpu.matmul %36, %37, %cst_19 {dimension_numbers = #tpu.dot_dimension_numbers<[1], [0], [0], [1], [0, 0, 1, 1], [], []>} : vector<16x8xbf16>, vector<8x32xbf16>, vector<16x32xf32> -> vector<16x32xf32>
    %39 = vector.broadcast %14 : vector<1x32xf32> to vector<16x32xf32>
    %40 = arith.addf %39, %38 : vector<16x32xf32>
    %41 = vector.extract_strided_slice %12 {offsets = [0, 0, 8], sizes = [2, 8, 8], strides = [1, 1, 1]} : vector<2x8x96xf32> to vector<2x8x8xf32>
    %42 = arith.truncf %41 : vector<2x8x8xf32> to vector<2x8x8xbf16>
    %43 = vector.extract_strided_slice %12 {offsets = [0, 0, 40], sizes = [2, 8, 8], strides = [1, 1, 1]} : vector<2x8x96xf32> to vector<2x8x8xf32>
    %44 = arith.truncf %43 : vector<2x8x8xf32> to vector<2x8x8xbf16>
    %45 = vector.extract_strided_slice %12 {offsets = [0, 0, 72], sizes = [2, 8, 8], strides = [1, 1, 1]} : vector<2x8x96xf32> to vector<2x8x8xf32>
    %46 = arith.truncf %45 : vector<2x8x8xf32> to vector<2x8x8xbf16>
    "tpu.trace_start"() <{level = 10 : i32, message = "bqd,bkd->bqk"}> : () -> ()
    %cst_20 = arith.constant dense<0.000000e+00> : vector<2x8x8xf32>
    %47 = tpu.matmul %42, %44, %cst_20 {dimension_numbers = #tpu.dot_dimension_numbers<[2], [2], [1], [1], [0, 0, 0, 1, 1, 1], [0], [0]>} : vector<2x8x8xbf16>, vector<2x8x8xbf16>, vector<2x8x8xf32> -> vector<2x8x8xf32>
    "tpu.trace_stop"() : () -> ()
    %cst_21 = arith.constant 0.353553385 : f32
    %48 = vector.broadcast %cst_21 : f32 to vector<2x8x8xf32>
    %49 = arith.mulf %47, %48 : vector<2x8x8xf32>
    %cst_22 = arith.constant dense<0xFF800000> : vector<2x8xf32>
    %50 = vector.multi_reduction <maximumf>, %49, %cst_22 [2] : vector<2x8x8xf32> to vector<2x8xf32>
    %51 = vector.shape_cast %50 : vector<2x8xf32> to vector<2x8x1xf32>
    %52 = vector.broadcast %51 : vector<2x8x1xf32> to vector<2x8x8xf32>
    %53 = arith.subf %49, %52 : vector<2x8x8xf32>
    %54 = math.exp %53 : vector<2x8x8xf32>
    %cst_23 = arith.constant dense<0.000000e+00> : vector<2x8xf32>
    %55 = vector.multi_reduction <add>, %54, %cst_23 [2] : vector<2x8x8xf32> to vector<2x8xf32>
    %56 = vector.shape_cast %55 : vector<2x8xf32> to vector<2x8x1xf32>
    %57 = vector.broadcast %56 : vector<2x8x1xf32> to vector<2x8x8xf32>
    %58 = arith.divf %54, %57 : vector<2x8x8xf32>
    %59 = arith.truncf %58 : vector<2x8x8xf32> to vector<2x8x8xbf16>
    "tpu.trace_start"() <{level = 10 : i32, message = "bqk,bkd->bqd"}> : () -> ()
    %cst_24 = arith.constant dense<0.000000e+00> : vector<2x8x8xf32>
    %60 = tpu.matmul %59, %46, %cst_24 {dimension_numbers = #tpu.dot_dimension_numbers<[2], [1], [1], [2], [0, 0, 0, 1, 1, 2], [0], [0]>} : vector<2x8x8xbf16>, vector<2x8x8xbf16>, vector<2x8x8xf32> -> vector<2x8x8xf32>
    "tpu.trace_stop"() : () -> ()
    %61 = vector.shape_cast %60 : vector<2x8x8xf32> to vector<16x8xf32>
    %62 = arith.truncf %61 : vector<16x8xf32> to vector<16x8xbf16>
    %63 = vector.extract_strided_slice %5 {offsets = [8, 0], sizes = [8, 32], strides = [1, 1]} : vector<32x32xbf16> to vector<8x32xbf16>
    %cst_25 = arith.constant dense<0.000000e+00> : vector<16x32xf32>
    %64 = tpu.matmul %62, %63, %cst_25 {dimension_numbers = #tpu.dot_dimension_numbers<[1], [0], [0], [1], [0, 0, 1, 1], [], []>} : vector<16x8xbf16>, vector<8x32xbf16>, vector<16x32xf32> -> vector<16x32xf32>
    %65 = arith.addf %40, %64 : vector<16x32xf32>
    %66 = vector.extract_strided_slice %12 {offsets = [0, 0, 16], sizes = [2, 8, 8], strides = [1, 1, 1]} : vector<2x8x96xf32> to vector<2x8x8xf32>
    %67 = arith.truncf %66 : vector<2x8x8xf32> to vector<2x8x8xbf16>
    %68 = vector.extract_strided_slice %12 {offsets = [0, 0, 48], sizes = [2, 8, 8], strides = [1, 1, 1]} : vector<2x8x96xf32> to vector<2x8x8xf32>
    %69 = arith.truncf %68 : vector<2x8x8xf32> to vector<2x8x8xbf16>
    %70 = vector.extract_strided_slice %12 {offsets = [0, 0, 80], sizes = [2, 8, 8], strides = [1, 1, 1]} : vector<2x8x96xf32> to vector<2x8x8xf32>
    %71 = arith.truncf %70 : vector<2x8x8xf32> to vector<2x8x8xbf16>
    "tpu.trace_start"() <{level = 10 : i32, message = "bqd,bkd->bqk"}> : () -> ()
    %cst_26 = arith.constant dense<0.000000e+00> : vector<2x8x8xf32>
    %72 = tpu.matmul %67, %69, %cst_26 {dimension_numbers = #tpu.dot_dimension_numbers<[2], [2], [1], [1], [0, 0, 0, 1, 1, 1], [0], [0]>} : vector<2x8x8xbf16>, vector<2x8x8xbf16>, vector<2x8x8xf32> -> vector<2x8x8xf32>
    "tpu.trace_stop"() : () -> ()
    %cst_27 = arith.constant 0.353553385 : f32
    %73 = vector.broadcast %cst_27 : f32 to vector<2x8x8xf32>
    %74 = arith.mulf %72, %73 : vector<2x8x8xf32>
    %cst_28 = arith.constant dense<0xFF800000> : vector<2x8xf32>
    %75 = vector.multi_reduction <maximumf>, %74, %cst_28 [2] : vector<2x8x8xf32> to vector<2x8xf32>
    %76 = vector.shape_cast %75 : vector<2x8xf32> to vector<2x8x1xf32>
    %77 = vector.broadcast %76 : vector<2x8x1xf32> to vector<2x8x8xf32>
    %78 = arith.subf %74, %77 : vector<2x8x8xf32>
    %79 = math.exp %78 : vector<2x8x8xf32>
    %cst_29 = arith.constant dense<0.000000e+00> : vector<2x8xf32>
    %80 = vector.multi_reduction <add>, %79, %cst_29 [2] : vector<2x8x8xf32> to vector<2x8xf32>
    %81 = vector.shape_cast %80 : vector<2x8xf32> to vector<2x8x1xf32>
    %82 = vector.broadcast %81 : vector<2x8x1xf32> to vector<2x8x8xf32>
    %83 = arith.divf %79, %82 : vector<2x8x8xf32>
    %84 = arith.truncf %83 : vector<2x8x8xf32> to vector<2x8x8xbf16>
    "tpu.trace_start"() <{level = 10 : i32, message = "bqk,bkd->bqd"}> : () -> ()
    %cst_30 = arith.constant dense<0.000000e+00> : vector<2x8x8xf32>
    %85 = tpu.matmul %84, %71, %cst_30 {dimension_numbers = #tpu.dot_dimension_numbers<[2], [1], [1], [2], [0, 0, 0, 1, 1, 2], [0], [0]>} : vector<2x8x8xbf16>, vector<2x8x8xbf16>, vector<2x8x8xf32> -> vector<2x8x8xf32>
    "tpu.trace_stop"() : () -> ()
    %86 = vector.shape_cast %85 : vector<2x8x8xf32> to vector<16x8xf32>
    %87 = arith.truncf %86 : vector<16x8xf32> to vector<16x8xbf16>
    %88 = vector.extract_strided_slice %5 {offsets = [16, 0], sizes = [8, 32], strides = [1, 1]} : vector<32x32xbf16> to vector<8x32xbf16>
    %cst_31 = arith.constant dense<0.000000e+00> : vector<16x32xf32>
    %89 = tpu.matmul %87, %88, %cst_31 {dimension_numbers = #tpu.dot_dimension_numbers<[1], [0], [0], [1], [0, 0, 1, 1], [], []>} : vector<16x8xbf16>, vector<8x32xbf16>, vector<16x32xf32> -> vector<16x32xf32>
    %90 = arith.addf %65, %89 : vector<16x32xf32>
    %91 = vector.extract_strided_slice %12 {offsets = [0, 0, 24], sizes = [2, 8, 8], strides = [1, 1, 1]} : vector<2x8x96xf32> to vector<2x8x8xf32>
    %92 = arith.truncf %91 : vector<2x8x8xf32> to vector<2x8x8xbf16>
    %93 = vector.extract_strided_slice %12 {offsets = [0, 0, 56], sizes = [2, 8, 8], strides = [1, 1, 1]} : vector<2x8x96xf32> to vector<2x8x8xf32>
    %94 = arith.truncf %93 : vector<2x8x8xf32> to vector<2x8x8xbf16>
    %95 = vector.extract_strided_slice %12 {offsets = [0, 0, 88], sizes = [2, 8, 8], strides = [1, 1, 1]} : vector<2x8x96xf32> to vector<2x8x8xf32>
    %96 = arith.truncf %95 : vector<2x8x8xf32> to vector<2x8x8xbf16>
    "tpu.trace_start"() <{level = 10 : i32, message = "bqd,bkd->bqk"}> : () -> ()
    %cst_32 = arith.constant dense<0.000000e+00> : vector<2x8x8xf32>
    %97 = tpu.matmul %92, %94, %cst_32 {dimension_numbers = #tpu.dot_dimension_numbers<[2], [2], [1], [1], [0, 0, 0, 1, 1, 1], [0], [0]>} : vector<2x8x8xbf16>, vector<2x8x8xbf16>, vector<2x8x8xf32> -> vector<2x8x8xf32>
    "tpu.trace_stop"() : () -> ()
    %cst_33 = arith.constant 0.353553385 : f32
    %98 = vector.broadcast %cst_33 : f32 to vector<2x8x8xf32>
    %99 = arith.mulf %97, %98 : vector<2x8x8xf32>
    %cst_34 = arith.constant dense<0xFF800000> : vector<2x8xf32>
    %100 = vector.multi_reduction <maximumf>, %99, %cst_34 [2] : vector<2x8x8xf32> to vector<2x8xf32>
    %101 = vector.shape_cast %100 : vector<2x8xf32> to vector<2x8x1xf32>
    %102 = vector.broadcast %101 : vector<2x8x1xf32> to vector<2x8x8xf32>
    %103 = arith.subf %99, %102 : vector<2x8x8xf32>
    %104 = math.exp %103 : vector<2x8x8xf32>
    %cst_35 = arith.constant dense<0.000000e+00> : vector<2x8xf32>
    %105 = vector.multi_reduction <add>, %104, %cst_35 [2] : vector<2x8x8xf32> to vector<2x8xf32>
    %106 = vector.shape_cast %105 : vector<2x8xf32> to vector<2x8x1xf32>
    %107 = vector.broadcast %106 : vector<2x8x1xf32> to vector<2x8x8xf32>
    %108 = arith.divf %104, %107 : vector<2x8x8xf32>
    %109 = arith.truncf %108 : vector<2x8x8xf32> to vector<2x8x8xbf16>
    "tpu.trace_start"() <{level = 10 : i32, message = "bqk,bkd->bqd"}> : () -> ()
    %cst_36 = arith.constant dense<0.000000e+00> : vector<2x8x8xf32>
    %110 = tpu.matmul %109, %96, %cst_36 {dimension_numbers = #tpu.dot_dimension_numbers<[2], [1], [1], [2], [0, 0, 0, 1, 1, 2], [0], [0]>} : vector<2x8x8xbf16>, vector<2x8x8xbf16>, vector<2x8x8xf32> -> vector<2x8x8xf32>
    "tpu.trace_stop"() : () -> ()
    %111 = vector.shape_cast %110 : vector<2x8x8xf32> to vector<16x8xf32>
    %112 = arith.truncf %111 : vector<16x8xf32> to vector<16x8xbf16>
    %113 = vector.extract_strided_slice %5 {offsets = [24, 0], sizes = [8, 32], strides = [1, 1]} : vector<32x32xbf16> to vector<8x32xbf16>
    %cst_37 = arith.constant dense<0.000000e+00> : vector<16x32xf32>
    %114 = tpu.matmul %112, %113, %cst_37 {dimension_numbers = #tpu.dot_dimension_numbers<[1], [0], [0], [1], [0, 0, 1, 1], [], []>} : vector<16x8xbf16>, vector<8x32xbf16>, vector<16x32xf32> -> vector<16x32xf32>
    %115 = arith.addf %90, %114 : vector<16x32xf32>
    %116 = arith.addf %1, %115 : vector<16x32xf32>
    %cst_38 = arith.constant dense<0.000000e+00> : vector<16xf32>
    %117 = vector.multi_reduction <add>, %116, %cst_38 [1] : vector<16x32xf32> to vector<16xf32>
    %118 = vector.shape_cast %117 : vector<16xf32> to vector<16x1xf32>
    %cst_39 = arith.constant 3.200000e+01 : f32
    %119 = vector.broadcast %cst_39 : f32 to vector<16x1xf32>
    %120 = arith.divf %118, %119 : vector<16x1xf32>
    %121 = vector.broadcast %120 : vector<16x1xf32> to vector<16x32xf32>
    %122 = arith.subf %116, %121 : vector<16x32xf32>
    %123 = vector.broadcast %120 : vector<16x1xf32> to vector<16x32xf32>
    %124 = arith.subf %116, %123 : vector<16x32xf32>
    %125 = arith.mulf %122, %124 : vector<16x32xf32>
    %cst_40 = arith.constant dense<0.000000e+00> : vector<16xf32>
    %126 = vector.multi_reduction <add>, %125, %cst_40 [1] : vector<16x32xf32> to vector<16xf32>
    %127 = vector.shape_cast %126 : vector<16xf32> to vector<16x1xf32>
    %cst_41 = arith.constant 3.200000e+01 : f32
    %128 = vector.broadcast %cst_41 : f32 to vector<16x1xf32>
    %129 = arith.divf %127, %128 : vector<16x1xf32>
    %130 = vector.broadcast %120 : vector<16x1xf32> to vector<16x32xf32>
    %131 = arith.subf %116, %130 : vector<16x32xf32>
    %cst_42 = arith.constant 9.99999974E-6 : f32
    %132 = vector.broadcast %cst_42 : f32 to vector<16x1xf32>
    %133 = arith.addf %129, %132 : vector<16x1xf32>
    %134 = math.rsqrt %133 : vector<16x1xf32>
    %135 = vector.broadcast %134 : vector<16x1xf32> to vector<16x32xf32>
    %136 = arith.mulf %131, %135 : vector<16x32xf32>
    %c0_43 = arith.constant 0 : index
    %c0_44 = arith.constant 0 : index
    %c0_45 = arith.constant 0 : index
    %137 = vector.load %arg8[%c0_43, %c0_44, %c0_45] : memref<2x1x32xf32, #tpu.memory_space<vmem>>, vector<1x1x32xf32>
    %138 = vector.shape_cast %137 : vector<1x1x32xf32> to vector<1x32xf32>
    %139 = vector.broadcast %138 : vector<1x32xf32> to vector<16x32xf32>
    %140 = arith.mulf %136, %139 : vector<16x32xf32>
    %c0_46 = arith.constant 0 : index
    %c0_47 = arith.constant 0 : index
    %c0_48 = arith.constant 0 : index
    %141 = vector.load %arg9[%c0_46, %c0_47, %c0_48] : memref<2x1x32xf32, #tpu.memory_space<vmem>>, vector<1x1x32xf32>
    %142 = vector.shape_cast %141 : vector<1x1x32xf32> to vector<1x32xf32>
    %143 = vector.broadcast %142 : vector<1x32xf32> to vector<16x32xf32>
    %144 = arith.addf %140, %143 : vector<16x32xf32>
    %145 = arith.truncf %144 : vector<16x32xf32> to vector<16x32xbf16>
    %c0_49 = arith.constant 0 : index
    %c0_50 = arith.constant 0 : index
    %c0_51 = arith.constant 0 : index
    %146 = vector.load %arg10[%c0_49, %c0_50, %c0_51] : memref<2x32x64xbf16, #tpu.memory_space<vmem>>, vector<1x32x64xbf16>
    %147 = vector.shape_cast %146 : vector<1x32x64xbf16> to vector<32x64xbf16>
    %cst_52 = arith.constant dense<0.000000e+00> : vector<16x64xf32>
    %148 = tpu.matmul %145, %147, %cst_52 {dimension_numbers = #tpu.dot_dimension_numbers<[1], [0], [0], [1], [0, 0, 1, 1], [], []>} : vector<16x32xbf16>, vector<32x64xbf16>, vector<16x64xf32> -> vector<16x64xf32>
    %c0_53 = arith.constant 0 : index
    %c0_54 = arith.constant 0 : index
    %c0_55 = arith.constant 0 : index
    %149 = vector.load %arg11[%c0_53, %c0_54, %c0_55] : memref<2x1x64xf32, #tpu.memory_space<vmem>>, vector<1x1x64xf32>
    %150 = vector.shape_cast %149 : vector<1x1x64xf32> to vector<1x64xf32>
    %151 = vector.broadcast %150 : vector<1x64xf32> to vector<16x64xf32>
    %152 = arith.addf %148, %151 : vector<16x64xf32>
    %cst_56 = arith.constant 0.000000e+00 : f32
    %153 = vector.broadcast %cst_56 : f32 to vector<16x64xf32>
    %154 = arith.maximumf %152, %153 : vector<16x64xf32>
    %155 = arith.truncf %154 : vector<16x64xf32> to vector<16x64xbf16>
    %c0_57 = arith.constant 0 : index
    %c0_58 = arith.constant 0 : index
    %c0_59 = arith.constant 0 : index
    %156 = vector.load %arg12[%c0_57, %c0_58, %c0_59] : memref<2x64x32xbf16, #tpu.memory_space<vmem>>, vector<1x64x32xbf16>
    %157 = vector.shape_cast %156 : vector<1x64x32xbf16> to vector<64x32xbf16>
    %cst_60 = arith.constant dense<0.000000e+00> : vector<16x32xf32>
    %158 = tpu.matmul %155, %157, %cst_60 {dimension_numbers = #tpu.dot_dimension_numbers<[1], [0], [0], [1], [0, 0, 1, 1], [], []>} : vector<16x64xbf16>, vector<64x32xbf16>, vector<16x32xf32> -> vector<16x32xf32>
    %c0_61 = arith.constant 0 : index
    %c0_62 = arith.constant 0 : index
    %c0_63 = arith.constant 0 : index
    %159 = vector.load %arg13[%c0_61, %c0_62, %c0_63] : memref<2x1x32xf32, #tpu.memory_space<vmem>>, vector<1x1x32xf32>
    %160 = vector.shape_cast %159 : vector<1x1x32xf32> to vector<1x32xf32>
    %161 = vector.broadcast %160 : vector<1x32xf32> to vector<16x32xf32>
    %162 = arith.addf %158, %161 : vector<16x32xf32>
    %163 = arith.addf %144, %162 : vector<16x32xf32>
    %cst_64 = arith.constant dense<0.000000e+00> : vector<16xf32>
    %164 = vector.multi_reduction <add>, %163, %cst_64 [1] : vector<16x32xf32> to vector<16xf32>
    %165 = vector.shape_cast %164 : vector<16xf32> to vector<16x1xf32>
    %cst_65 = arith.constant 3.200000e+01 : f32
    %166 = vector.broadcast %cst_65 : f32 to vector<16x1xf32>
    %167 = arith.divf %165, %166 : vector<16x1xf32>
    %168 = vector.broadcast %167 : vector<16x1xf32> to vector<16x32xf32>
    %169 = arith.subf %163, %168 : vector<16x32xf32>
    %170 = vector.broadcast %167 : vector<16x1xf32> to vector<16x32xf32>
    %171 = arith.subf %163, %170 : vector<16x32xf32>
    %172 = arith.mulf %169, %171 : vector<16x32xf32>
    %cst_66 = arith.constant dense<0.000000e+00> : vector<16xf32>
    %173 = vector.multi_reduction <add>, %172, %cst_66 [1] : vector<16x32xf32> to vector<16xf32>
    %174 = vector.shape_cast %173 : vector<16xf32> to vector<16x1xf32>
    %cst_67 = arith.constant 3.200000e+01 : f32
    %175 = vector.broadcast %cst_67 : f32 to vector<16x1xf32>
    %176 = arith.divf %174, %175 : vector<16x1xf32>
    %177 = vector.broadcast %167 : vector<16x1xf32> to vector<16x32xf32>
    %178 = arith.subf %163, %177 : vector<16x32xf32>
    %cst_68 = arith.constant 9.99999974E-6 : f32
    %179 = vector.broadcast %cst_68 : f32 to vector<16x1xf32>
    %180 = arith.addf %176, %179 : vector<16x1xf32>
    %181 = math.rsqrt %180 : vector<16x1xf32>
    %182 = vector.broadcast %181 : vector<16x1xf32> to vector<16x32xf32>
    %183 = arith.mulf %178, %182 : vector<16x32xf32>
    %c0_69 = arith.constant 0 : index
    %c0_70 = arith.constant 0 : index
    %c0_71 = arith.constant 0 : index
    %184 = vector.load %arg14[%c0_69, %c0_70, %c0_71] : memref<2x1x32xf32, #tpu.memory_space<vmem>>, vector<1x1x32xf32>
    %185 = vector.shape_cast %184 : vector<1x1x32xf32> to vector<1x32xf32>
    %186 = vector.broadcast %185 : vector<1x32xf32> to vector<16x32xf32>
    %187 = arith.mulf %183, %186 : vector<16x32xf32>
    %c0_72 = arith.constant 0 : index
    %c0_73 = arith.constant 0 : index
    %c0_74 = arith.constant 0 : index
    %188 = vector.load %arg15[%c0_72, %c0_73, %c0_74] : memref<2x1x32xf32, #tpu.memory_space<vmem>>, vector<1x1x32xf32>
    %189 = vector.shape_cast %188 : vector<1x1x32xf32> to vector<1x32xf32>
    %190 = vector.broadcast %189 : vector<1x32xf32> to vector<16x32xf32>
    %191 = arith.addf %187, %190 : vector<16x32xf32>
    %c1 = arith.constant 1 : index
    %c0_75 = arith.constant 0 : index
    %c0_76 = arith.constant 0 : index
    %192 = vector.load %arg4[%c1, %c0_75, %c0_76] : memref<2x32x96xbf16, #tpu.memory_space<vmem>>, vector<1x32x96xbf16>
    %193 = vector.shape_cast %192 : vector<1x32x96xbf16> to vector<32x96xbf16>
    %c1_77 = arith.constant 1 : index
    %c0_78 = arith.constant 0 : index
    %c0_79 = arith.constant 0 : index
    %194 = vector.load %arg6[%c1_77, %c0_78, %c0_79] : memref<2x32x32xbf16, #tpu.memory_space<vmem>>, vector<1x32x32xbf16>
    %195 = vector.shape_cast %194 : vector<1x32x32xbf16> to vector<32x32xbf16>
    %196 = arith.truncf %191 : vector<16x32xf32> to vector<16x32xbf16>
    %cst_80 = arith.constant dense<0.000000e+00> : vector<16x96xf32>
    %197 = tpu.matmul %196, %193, %cst_80 {dimension_numbers = #tpu.dot_dimension_numbers<[1], [0], [0], [1], [0, 0, 1, 1], [], []>} : vector<16x32xbf16>, vector<32x96xbf16>, vector<16x96xf32> -> vector<16x96xf32>
    %c1_81 = arith.constant 1 : index
    %c0_82 = arith.constant 0 : index
    %c0_83 = arith.constant 0 : index
    %198 = vector.load %arg5[%c1_81, %c0_82, %c0_83] : memref<2x1x96xf32, #tpu.memory_space<vmem>>, vector<1x1x96xf32>
    %199 = vector.shape_cast %198 : vector<1x1x96xf32> to vector<1x96xf32>
    %200 = vector.broadcast %199 : vector<1x96xf32> to vector<16x96xf32>
    %201 = arith.addf %197, %200 : vector<16x96xf32>
    %202 = vector.shape_cast %201 : vector<16x96xf32> to vector<2x8x96xf32>
    %c1_84 = arith.constant 1 : index
    %c0_85 = arith.constant 0 : index
    %c0_86 = arith.constant 0 : index
    %203 = vector.load %arg7[%c1_84, %c0_85, %c0_86] : memref<2x1x32xf32, #tpu.memory_space<vmem>>, vector<1x1x32xf32>
    %204 = vector.shape_cast %203 : vector<1x1x32xf32> to vector<1x32xf32>
    %205 = vector.extract_strided_slice %202 {offsets = [0, 0, 0], sizes = [2, 8, 8], strides = [1, 1, 1]} : vector<2x8x96xf32> to vector<2x8x8xf32>
    %206 = arith.truncf %205 : vector<2x8x8xf32> to vector<2x8x8xbf16>
    %207 = vector.extract_strided_slice %202 {offsets = [0, 0, 32], sizes = [2, 8, 8], strides = [1, 1, 1]} : vector<2x8x96xf32> to vector<2x8x8xf32>
    %208 = arith.truncf %207 : vector<2x8x8xf32> to vector<2x8x8xbf16>
    %209 = vector.extract_strided_slice %202 {offsets = [0, 0, 64], sizes = [2, 8, 8], strides = [1, 1, 1]} : vector<2x8x96xf32> to vector<2x8x8xf32>
    %210 = arith.truncf %209 : vector<2x8x8xf32> to vector<2x8x8xbf16>
    "tpu.trace_start"() <{level = 10 : i32, message = "bqd,bkd->bqk"}> : () -> ()
    %cst_87 = arith.constant dense<0.000000e+00> : vector<2x8x8xf32>
    %211 = tpu.matmul %206, %208, %cst_87 {dimension_numbers = #tpu.dot_dimension_numbers<[2], [2], [1], [1], [0, 0, 0, 1, 1, 1], [0], [0]>} : vector<2x8x8xbf16>, vector<2x8x8xbf16>, vector<2x8x8xf32> -> vector<2x8x8xf32>
    "tpu.trace_stop"() : () -> ()
    %cst_88 = arith.constant 0.353553385 : f32
    %212 = vector.broadcast %cst_88 : f32 to vector<2x8x8xf32>
    %213 = arith.mulf %211, %212 : vector<2x8x8xf32>
    %cst_89 = arith.constant dense<0xFF800000> : vector<2x8xf32>
    %214 = vector.multi_reduction <maximumf>, %213, %cst_89 [2] : vector<2x8x8xf32> to vector<2x8xf32>
    %215 = vector.shape_cast %214 : vector<2x8xf32> to vector<2x8x1xf32>
    %216 = vector.broadcast %215 : vector<2x8x1xf32> to vector<2x8x8xf32>
    %217 = arith.subf %213, %216 : vector<2x8x8xf32>
    %218 = math.exp %217 : vector<2x8x8xf32>
    %cst_90 = arith.constant dense<0.000000e+00> : vector<2x8xf32>
    %219 = vector.multi_reduction <add>, %218, %cst_90 [2] : vector<2x8x8xf32> to vector<2x8xf32>
    %220 = vector.shape_cast %219 : vector<2x8xf32> to vector<2x8x1xf32>
    %221 = vector.broadcast %220 : vector<2x8x1xf32> to vector<2x8x8xf32>
    %222 = arith.divf %218, %221 : vector<2x8x8xf32>
    %223 = arith.truncf %222 : vector<2x8x8xf32> to vector<2x8x8xbf16>
    "tpu.trace_start"() <{level = 10 : i32, message = "bqk,bkd->bqd"}> : () -> ()
    %cst_91 = arith.constant dense<0.000000e+00> : vector<2x8x8xf32>
    %224 = tpu.matmul %223, %210, %cst_91 {dimension_numbers = #tpu.dot_dimension_numbers<[2], [1], [1], [2], [0, 0, 0, 1, 1, 2], [0], [0]>} : vector<2x8x8xbf16>, vector<2x8x8xbf16>, vector<2x8x8xf32> -> vector<2x8x8xf32>
    "tpu.trace_stop"() : () -> ()
    %225 = vector.shape_cast %224 : vector<2x8x8xf32> to vector<16x8xf32>
    %226 = arith.truncf %225 : vector<16x8xf32> to vector<16x8xbf16>
    %227 = vector.extract_strided_slice %195 {offsets = [0, 0], sizes = [8, 32], strides = [1, 1]} : vector<32x32xbf16> to vector<8x32xbf16>
    %cst_92 = arith.constant dense<0.000000e+00> : vector<16x32xf32>
    %228 = tpu.matmul %226, %227, %cst_92 {dimension_numbers = #tpu.dot_dimension_numbers<[1], [0], [0], [1], [0, 0, 1, 1], [], []>} : vector<16x8xbf16>, vector<8x32xbf16>, vector<16x32xf32> -> vector<16x32xf32>
    %229 = vector.broadcast %204 : vector<1x32xf32> to vector<16x32xf32>
    %230 = arith.addf %229, %228 : vector<16x32xf32>
    %231 = vector.extract_strided_slice %202 {offsets = [0, 0, 8], sizes = [2, 8, 8], strides = [1, 1, 1]} : vector<2x8x96xf32> to vector<2x8x8xf32>
    %232 = arith.truncf %231 : vector<2x8x8xf32> to vector<2x8x8xbf16>
    %233 = vector.extract_strided_slice %202 {offsets = [0, 0, 40], sizes = [2, 8, 8], strides = [1, 1, 1]} : vector<2x8x96xf32> to vector<2x8x8xf32>
    %234 = arith.truncf %233 : vector<2x8x8xf32> to vector<2x8x8xbf16>
    %235 = vector.extract_strided_slice %202 {offsets = [0, 0, 72], sizes = [2, 8, 8], strides = [1, 1, 1]} : vector<2x8x96xf32> to vector<2x8x8xf32>
    %236 = arith.truncf %235 : vector<2x8x8xf32> to vector<2x8x8xbf16>
    "tpu.trace_start"() <{level = 10 : i32, message = "bqd,bkd->bqk"}> : () -> ()
    %cst_93 = arith.constant dense<0.000000e+00> : vector<2x8x8xf32>
    %237 = tpu.matmul %232, %234, %cst_93 {dimension_numbers = #tpu.dot_dimension_numbers<[2], [2], [1], [1], [0, 0, 0, 1, 1, 1], [0], [0]>} : vector<2x8x8xbf16>, vector<2x8x8xbf16>, vector<2x8x8xf32> -> vector<2x8x8xf32>
    "tpu.trace_stop"() : () -> ()
    %cst_94 = arith.constant 0.353553385 : f32
    %238 = vector.broadcast %cst_94 : f32 to vector<2x8x8xf32>
    %239 = arith.mulf %237, %238 : vector<2x8x8xf32>
    %cst_95 = arith.constant dense<0xFF800000> : vector<2x8xf32>
    %240 = vector.multi_reduction <maximumf>, %239, %cst_95 [2] : vector<2x8x8xf32> to vector<2x8xf32>
    %241 = vector.shape_cast %240 : vector<2x8xf32> to vector<2x8x1xf32>
    %242 = vector.broadcast %241 : vector<2x8x1xf32> to vector<2x8x8xf32>
    %243 = arith.subf %239, %242 : vector<2x8x8xf32>
    %244 = math.exp %243 : vector<2x8x8xf32>
    %cst_96 = arith.constant dense<0.000000e+00> : vector<2x8xf32>
    %245 = vector.multi_reduction <add>, %244, %cst_96 [2] : vector<2x8x8xf32> to vector<2x8xf32>
    %246 = vector.shape_cast %245 : vector<2x8xf32> to vector<2x8x1xf32>
    %247 = vector.broadcast %246 : vector<2x8x1xf32> to vector<2x8x8xf32>
    %248 = arith.divf %244, %247 : vector<2x8x8xf32>
    %249 = arith.truncf %248 : vector<2x8x8xf32> to vector<2x8x8xbf16>
    "tpu.trace_start"() <{level = 10 : i32, message = "bqk,bkd->bqd"}> : () -> ()
    %cst_97 = arith.constant dense<0.000000e+00> : vector<2x8x8xf32>
    %250 = tpu.matmul %249, %236, %cst_97 {dimension_numbers = #tpu.dot_dimension_numbers<[2], [1], [1], [2], [0, 0, 0, 1, 1, 2], [0], [0]>} : vector<2x8x8xbf16>, vector<2x8x8xbf16>, vector<2x8x8xf32> -> vector<2x8x8xf32>
    "tpu.trace_stop"() : () -> ()
    %251 = vector.shape_cast %250 : vector<2x8x8xf32> to vector<16x8xf32>
    %252 = arith.truncf %251 : vector<16x8xf32> to vector<16x8xbf16>
    %253 = vector.extract_strided_slice %195 {offsets = [8, 0], sizes = [8, 32], strides = [1, 1]} : vector<32x32xbf16> to vector<8x32xbf16>
    %cst_98 = arith.constant dense<0.000000e+00> : vector<16x32xf32>
    %254 = tpu.matmul %252, %253, %cst_98 {dimension_numbers = #tpu.dot_dimension_numbers<[1], [0], [0], [1], [0, 0, 1, 1], [], []>} : vector<16x8xbf16>, vector<8x32xbf16>, vector<16x32xf32> -> vector<16x32xf32>
    %255 = arith.addf %230, %254 : vector<16x32xf32>
    %256 = vector.extract_strided_slice %202 {offsets = [0, 0, 16], sizes = [2, 8, 8], strides = [1, 1, 1]} : vector<2x8x96xf32> to vector<2x8x8xf32>
    %257 = arith.truncf %256 : vector<2x8x8xf32> to vector<2x8x8xbf16>
    %258 = vector.extract_strided_slice %202 {offsets = [0, 0, 48], sizes = [2, 8, 8], strides = [1, 1, 1]} : vector<2x8x96xf32> to vector<2x8x8xf32>
    %259 = arith.truncf %258 : vector<2x8x8xf32> to vector<2x8x8xbf16>
    %260 = vector.extract_strided_slice %202 {offsets = [0, 0, 80], sizes = [2, 8, 8], strides = [1, 1, 1]} : vector<2x8x96xf32> to vector<2x8x8xf32>
    %261 = arith.truncf %260 : vector<2x8x8xf32> to vector<2x8x8xbf16>
    "tpu.trace_start"() <{level = 10 : i32, message = "bqd,bkd->bqk"}> : () -> ()
    %cst_99 = arith.constant dense<0.000000e+00> : vector<2x8x8xf32>
    %262 = tpu.matmul %257, %259, %cst_99 {dimension_numbers = #tpu.dot_dimension_numbers<[2], [2], [1], [1], [0, 0, 0, 1, 1, 1], [0], [0]>} : vector<2x8x8xbf16>, vector<2x8x8xbf16>, vector<2x8x8xf32> -> vector<2x8x8xf32>
    "tpu.trace_stop"() : () -> ()
    %cst_100 = arith.constant 0.353553385 : f32
    %263 = vector.broadcast %cst_100 : f32 to vector<2x8x8xf32>
    %264 = arith.mulf %262, %263 : vector<2x8x8xf32>
    %cst_101 = arith.constant dense<0xFF800000> : vector<2x8xf32>
    %265 = vector.multi_reduction <maximumf>, %264, %cst_101 [2] : vector<2x8x8xf32> to vector<2x8xf32>
    %266 = vector.shape_cast %265 : vector<2x8xf32> to vector<2x8x1xf32>
    %267 = vector.broadcast %266 : vector<2x8x1xf32> to vector<2x8x8xf32>
    %268 = arith.subf %264, %267 : vector<2x8x8xf32>
    %269 = math.exp %268 : vector<2x8x8xf32>
    %cst_102 = arith.constant dense<0.000000e+00> : vector<2x8xf32>
    %270 = vector.multi_reduction <add>, %269, %cst_102 [2] : vector<2x8x8xf32> to vector<2x8xf32>
    %271 = vector.shape_cast %270 : vector<2x8xf32> to vector<2x8x1xf32>
    %272 = vector.broadcast %271 : vector<2x8x1xf32> to vector<2x8x8xf32>
    %273 = arith.divf %269, %272 : vector<2x8x8xf32>
    %274 = arith.truncf %273 : vector<2x8x8xf32> to vector<2x8x8xbf16>
    "tpu.trace_start"() <{level = 10 : i32, message = "bqk,bkd->bqd"}> : () -> ()
    %cst_103 = arith.constant dense<0.000000e+00> : vector<2x8x8xf32>
    %275 = tpu.matmul %274, %261, %cst_103 {dimension_numbers = #tpu.dot_dimension_numbers<[2], [1], [1], [2], [0, 0, 0, 1, 1, 2], [0], [0]>} : vector<2x8x8xbf16>, vector<2x8x8xbf16>, vector<2x8x8xf32> -> vector<2x8x8xf32>
    "tpu.trace_stop"() : () -> ()
    %276 = vector.shape_cast %275 : vector<2x8x8xf32> to vector<16x8xf32>
    %277 = arith.truncf %276 : vector<16x8xf32> to vector<16x8xbf16>
    %278 = vector.extract_strided_slice %195 {offsets = [16, 0], sizes = [8, 32], strides = [1, 1]} : vector<32x32xbf16> to vector<8x32xbf16>
    %cst_104 = arith.constant dense<0.000000e+00> : vector<16x32xf32>
    %279 = tpu.matmul %277, %278, %cst_104 {dimension_numbers = #tpu.dot_dimension_numbers<[1], [0], [0], [1], [0, 0, 1, 1], [], []>} : vector<16x8xbf16>, vector<8x32xbf16>, vector<16x32xf32> -> vector<16x32xf32>
    %280 = arith.addf %255, %279 : vector<16x32xf32>
    %281 = vector.extract_strided_slice %202 {offsets = [0, 0, 24], sizes = [2, 8, 8], strides = [1, 1, 1]} : vector<2x8x96xf32> to vector<2x8x8xf32>
    %282 = arith.truncf %281 : vector<2x8x8xf32> to vector<2x8x8xbf16>
    %283 = vector.extract_strided_slice %202 {offsets = [0, 0, 56], sizes = [2, 8, 8], strides = [1, 1, 1]} : vector<2x8x96xf32> to vector<2x8x8xf32>
    %284 = arith.truncf %283 : vector<2x8x8xf32> to vector<2x8x8xbf16>
    %285 = vector.extract_strided_slice %202 {offsets = [0, 0, 88], sizes = [2, 8, 8], strides = [1, 1, 1]} : vector<2x8x96xf32> to vector<2x8x8xf32>
    %286 = arith.truncf %285 : vector<2x8x8xf32> to vector<2x8x8xbf16>
    "tpu.trace_start"() <{level = 10 : i32, message = "bqd,bkd->bqk"}> : () -> ()
    %cst_105 = arith.constant dense<0.000000e+00> : vector<2x8x8xf32>
    %287 = tpu.matmul %282, %284, %cst_105 {dimension_numbers = #tpu.dot_dimension_numbers<[2], [2], [1], [1], [0, 0, 0, 1, 1, 1], [0], [0]>} : vector<2x8x8xbf16>, vector<2x8x8xbf16>, vector<2x8x8xf32> -> vector<2x8x8xf32>
    "tpu.trace_stop"() : () -> ()
    %cst_106 = arith.constant 0.353553385 : f32
    %288 = vector.broadcast %cst_106 : f32 to vector<2x8x8xf32>
    %289 = arith.mulf %287, %288 : vector<2x8x8xf32>
    %cst_107 = arith.constant dense<0xFF800000> : vector<2x8xf32>
    %290 = vector.multi_reduction <maximumf>, %289, %cst_107 [2] : vector<2x8x8xf32> to vector<2x8xf32>
    %291 = vector.shape_cast %290 : vector<2x8xf32> to vector<2x8x1xf32>
    %292 = vector.broadcast %291 : vector<2x8x1xf32> to vector<2x8x8xf32>
    %293 = arith.subf %289, %292 : vector<2x8x8xf32>
    %294 = math.exp %293 : vector<2x8x8xf32>
    %cst_108 = arith.constant dense<0.000000e+00> : vector<2x8xf32>
    %295 = vector.multi_reduction <add>, %294, %cst_108 [2] : vector<2x8x8xf32> to vector<2x8xf32>
    %296 = vector.shape_cast %295 : vector<2x8xf32> to vector<2x8x1xf32>
    %297 = vector.broadcast %296 : vector<2x8x1xf32> to vector<2x8x8xf32>
    %298 = arith.divf %294, %297 : vector<2x8x8xf32>
    %299 = arith.truncf %298 : vector<2x8x8xf32> to vector<2x8x8xbf16>
    "tpu.trace_start"() <{level = 10 : i32, message = "bqk,bkd->bqd"}> : () -> ()
    %cst_109 = arith.constant dense<0.000000e+00> : vector<2x8x8xf32>
    %300 = tpu.matmul %299, %286, %cst_109 {dimension_numbers = #tpu.dot_dimension_numbers<[2], [1], [1], [2], [0, 0, 0, 1, 1, 2], [0], [0]>} : vector<2x8x8xbf16>, vector<2x8x8xbf16>, vector<2x8x8xf32> -> vector<2x8x8xf32>
    "tpu.trace_stop"() : () -> ()
    %301 = vector.shape_cast %300 : vector<2x8x8xf32> to vector<16x8xf32>
    %302 = arith.truncf %301 : vector<16x8xf32> to vector<16x8xbf16>
    %303 = vector.extract_strided_slice %195 {offsets = [24, 0], sizes = [8, 32], strides = [1, 1]} : vector<32x32xbf16> to vector<8x32xbf16>
    %cst_110 = arith.constant dense<0.000000e+00> : vector<16x32xf32>
    %304 = tpu.matmul %302, %303, %cst_110 {dimension_numbers = #tpu.dot_dimension_numbers<[1], [0], [0], [1], [0, 0, 1, 1], [], []>} : vector<16x8xbf16>, vector<8x32xbf16>, vector<16x32xf32> -> vector<16x32xf32>
    %305 = arith.addf %280, %304 : vector<16x32xf32>
    %306 = arith.addf %191, %305 : vector<16x32xf32>
    %cst_111 = arith.constant dense<0.000000e+00> : vector<16xf32>
    %307 = vector.multi_reduction <add>, %306, %cst_111 [1] : vector<16x32xf32> to vector<16xf32>
    %308 = vector.shape_cast %307 : vector<16xf32> to vector<16x1xf32>
    %cst_112 = arith.constant 3.200000e+01 : f32
    %309 = vector.broadcast %cst_112 : f32 to vector<16x1xf32>
    %310 = arith.divf %308, %309 : vector<16x1xf32>
    %311 = vector.broadcast %310 : vector<16x1xf32> to vector<16x32xf32>
    %312 = arith.subf %306, %311 : vector<16x32xf32>
    %313 = vector.broadcast %310 : vector<16x1xf32> to vector<16x32xf32>
    %314 = arith.subf %306, %313 : vector<16x32xf32>
    %315 = arith.mulf %312, %314 : vector<16x32xf32>
    %cst_113 = arith.constant dense<0.000000e+00> : vector<16xf32>
    %316 = vector.multi_reduction <add>, %315, %cst_113 [1] : vector<16x32xf32> to vector<16xf32>
    %317 = vector.shape_cast %316 : vector<16xf32> to vector<16x1xf32>
    %cst_114 = arith.constant 3.200000e+01 : f32
    %318 = vector.broadcast %cst_114 : f32 to vector<16x1xf32>
    %319 = arith.divf %317, %318 : vector<16x1xf32>
    %320 = vector.broadcast %310 : vector<16x1xf32> to vector<16x32xf32>
    %321 = arith.subf %306, %320 : vector<16x32xf32>
    %cst_115 = arith.constant 9.99999974E-6 : f32
    %322 = vector.broadcast %cst_115 : f32 to vector<16x1xf32>
    %323 = arith.addf %319, %322 : vector<16x1xf32>
    %324 = math.rsqrt %323 : vector<16x1xf32>
    %325 = vector.broadcast %324 : vector<16x1xf32> to vector<16x32xf32>
    %326 = arith.mulf %321, %325 : vector<16x32xf32>
    %c1_116 = arith.constant 1 : index
    %c0_117 = arith.constant 0 : index
    %c0_118 = arith.constant 0 : index
    %327 = vector.load %arg8[%c1_116, %c0_117, %c0_118] : memref<2x1x32xf32, #tpu.memory_space<vmem>>, vector<1x1x32xf32>
    %328 = vector.shape_cast %327 : vector<1x1x32xf32> to vector<1x32xf32>
    %329 = vector.broadcast %328 : vector<1x32xf32> to vector<16x32xf32>
    %330 = arith.mulf %326, %329 : vector<16x32xf32>
    %c1_119 = arith.constant 1 : index
    %c0_120 = arith.constant 0 : index
    %c0_121 = arith.constant 0 : index
    %331 = vector.load %arg9[%c1_119, %c0_120, %c0_121] : memref<2x1x32xf32, #tpu.memory_space<vmem>>, vector<1x1x32xf32>
    %332 = vector.shape_cast %331 : vector<1x1x32xf32> to vector<1x32xf32>
    %333 = vector.broadcast %332 : vector<1x32xf32> to vector<16x32xf32>
    %334 = arith.addf %330, %333 : vector<16x32xf32>
    %335 = arith.truncf %334 : vector<16x32xf32> to vector<16x32xbf16>
    %c1_122 = arith.constant 1 : index
    %c0_123 = arith.constant 0 : index
    %c0_124 = arith.constant 0 : index
    %336 = vector.load %arg10[%c1_122, %c0_123, %c0_124] : memref<2x32x64xbf16, #tpu.memory_space<vmem>>, vector<1x32x64xbf16>
    %337 = vector.shape_cast %336 : vector<1x32x64xbf16> to vector<32x64xbf16>
    %cst_125 = arith.constant dense<0.000000e+00> : vector<16x64xf32>
    %338 = tpu.matmul %335, %337, %cst_125 {dimension_numbers = #tpu.dot_dimension_numbers<[1], [0], [0], [1], [0, 0, 1, 1], [], []>} : vector<16x32xbf16>, vector<32x64xbf16>, vector<16x64xf32> -> vector<16x64xf32>
    %c1_126 = arith.constant 1 : index
    %c0_127 = arith.constant 0 : index
    %c0_128 = arith.constant 0 : index
    %339 = vector.load %arg11[%c1_126, %c0_127, %c0_128] : memref<2x1x64xf32, #tpu.memory_space<vmem>>, vector<1x1x64xf32>
    %340 = vector.shape_cast %339 : vector<1x1x64xf32> to vector<1x64xf32>
    %341 = vector.broadcast %340 : vector<1x64xf32> to vector<16x64xf32>
    %342 = arith.addf %338, %341 : vector<16x64xf32>
    %cst_129 = arith.constant 0.000000e+00 : f32
    %343 = vector.broadcast %cst_129 : f32 to vector<16x64xf32>
    %344 = arith.maximumf %342, %343 : vector<16x64xf32>
    %345 = arith.truncf %344 : vector<16x64xf32> to vector<16x64xbf16>
    %c1_130 = arith.constant 1 : index
    %c0_131 = arith.constant 0 : index
    %c0_132 = arith.constant 0 : index
    %346 = vector.load %arg12[%c1_130, %c0_131, %c0_132] : memref<2x64x32xbf16, #tpu.memory_space<vmem>>, vector<1x64x32xbf16>
    %347 = vector.shape_cast %346 : vector<1x64x32xbf16> to vector<64x32xbf16>
    %cst_133 = arith.constant dense<0.000000e+00> : vector<16x32xf32>
    %348 = tpu.matmul %345, %347, %cst_133 {dimension_numbers = #tpu.dot_dimension_numbers<[1], [0], [0], [1], [0, 0, 1, 1], [], []>} : vector<16x64xbf16>, vector<64x32xbf16>, vector<16x32xf32> -> vector<16x32xf32>
    %c1_134 = arith.constant 1 : index
    %c0_135 = arith.constant 0 : index
    %c0_136 = arith.constant 0 : index
    %349 = vector.load %arg13[%c1_134, %c0_135, %c0_136] : memref<2x1x32xf32, #tpu.memory_space<vmem>>, vector<1x1x32xf32>
    %350 = vector.shape_cast %349 : vector<1x1x32xf32> to vector<1x32xf32>
    %351 = vector.broadcast %350 : vector<1x32xf32> to vector<16x32xf32>
    %352 = arith.addf %348, %351 : vector<16x32xf32>
    %353 = arith.addf %334, %352 : vector<16x32xf32>
    %cst_137 = arith.constant dense<0.000000e+00> : vector<16xf32>
    %354 = vector.multi_reduction <add>, %353, %cst_137 [1] : vector<16x32xf32> to vector<16xf32>
    %355 = vector.shape_cast %354 : vector<16xf32> to vector<16x1xf32>
    %cst_138 = arith.constant 3.200000e+01 : f32
    %356 = vector.broadcast %cst_138 : f32 to vector<16x1xf32>
    %357 = arith.divf %355, %356 : vector<16x1xf32>
    %358 = vector.broadcast %357 : vector<16x1xf32> to vector<16x32xf32>
    %359 = arith.subf %353, %358 : vector<16x32xf32>
    %360 = vector.broadcast %357 : vector<16x1xf32> to vector<16x32xf32>
    %361 = arith.subf %353, %360 : vector<16x32xf32>
    %362 = arith.mulf %359, %361 : vector<16x32xf32>
    %cst_139 = arith.constant dense<0.000000e+00> : vector<16xf32>
    %363 = vector.multi_reduction <add>, %362, %cst_139 [1] : vector<16x32xf32> to vector<16xf32>
    %364 = vector.shape_cast %363 : vector<16xf32> to vector<16x1xf32>
    %cst_140 = arith.constant 3.200000e+01 : f32
    %365 = vector.broadcast %cst_140 : f32 to vector<16x1xf32>
    %366 = arith.divf %364, %365 : vector<16x1xf32>
    %367 = vector.broadcast %357 : vector<16x1xf32> to vector<16x32xf32>
    %368 = arith.subf %353, %367 : vector<16x32xf32>
    %cst_141 = arith.constant 9.99999974E-6 : f32
    %369 = vector.broadcast %cst_141 : f32 to vector<16x1xf32>
    %370 = arith.addf %366, %369 : vector<16x1xf32>
    %371 = math.rsqrt %370 : vector<16x1xf32>
    %372 = vector.broadcast %371 : vector<16x1xf32> to vector<16x32xf32>
    %373 = arith.mulf %368, %372 : vector<16x32xf32>
    %c1_142 = arith.constant 1 : index
    %c0_143 = arith.constant 0 : index
    %c0_144 = arith.constant 0 : index
    %374 = vector.load %arg14[%c1_142, %c0_143, %c0_144] : memref<2x1x32xf32, #tpu.memory_space<vmem>>, vector<1x1x32xf32>
    %375 = vector.shape_cast %374 : vector<1x1x32xf32> to vector<1x32xf32>
    %376 = vector.broadcast %375 : vector<1x32xf32> to vector<16x32xf32>
    %377 = arith.mulf %373, %376 : vector<16x32xf32>
    %c1_145 = arith.constant 1 : index
    %c0_146 = arith.constant 0 : index
    %c0_147 = arith.constant 0 : index
    %378 = vector.load %arg15[%c1_145, %c0_146, %c0_147] : memref<2x1x32xf32, #tpu.memory_space<vmem>>, vector<1x1x32xf32>
    %379 = vector.shape_cast %378 : vector<1x1x32xf32> to vector<1x32xf32>
    %380 = vector.broadcast %379 : vector<1x32xf32> to vector<16x32xf32>
    %381 = arith.addf %377, %380 : vector<16x32xf32>
    %382 = vector.shape_cast %381 : vector<16x32xf32> to vector<2x8x32xf32>
    %c0_148 = arith.constant 0 : index
    %c0_149 = arith.constant 0 : index
    %383 = vector.load %arg16[%c0_148, %c0_149] : memref<8x32xf32, #tpu.memory_space<vmem>>, vector<8x32xf32>
    %384 = vector.shape_cast %383 : vector<8x32xf32> to vector<1x8x32xf32>
    %385 = vector.broadcast %384 : vector<1x8x32xf32> to vector<2x8x32xf32>
    %386 = arith.mulf %385, %382 : vector<2x8x32xf32>
    %cst_150 = arith.constant dense<0.000000e+00> : vector<2x32xf32>
    %387 = vector.multi_reduction <add>, %386, %cst_150 [1] : vector<2x8x32xf32> to vector<2x32xf32>
    %388 = vector.shape_cast %387 : vector<2x32xf32> to vector<2x1x32xf32>
    %c0_151 = arith.constant 0 : index
    %c0_152 = arith.constant 0 : index
    %389 = vector.load %arg17[%c0_151, %c0_152] : memref<1x32xf32, #tpu.memory_space<vmem>>, vector<1x32xf32>
    %390 = vector.shape_cast %389 : vector<1x32xf32> to vector<1x1x32xf32>
    %391 = vector.broadcast %390 : vector<1x1x32xf32> to vector<2x1x32xf32>
    %392 = arith.addf %388, %391 : vector<2x1x32xf32>
    %c0_153 = arith.constant 0 : index
    %c0_154 = arith.constant 0 : index
    %c0_155 = arith.constant 0 : index
    %393 = vector.load %arg22[%c0_153, %c0_154, %c0_155] : memref<2x1x32xf32, #tpu.memory_space<vmem>>, vector<2x1x32xf32>
    tpu.vector_store %arg22[%c0_153, %c0_154, %c0_155], %392 {strides = array<i32>} : memref<2x1x32xf32, #tpu.memory_space<vmem>>, vector<2x1x32xf32>,
    %c0_156 = arith.constant 0 : index
    %c0_157 = arith.constant 0 : index
    %394 = vector.load %arg18[%c0_156, %c0_157] : memref<8x4xf32, #tpu.memory_space<vmem>>, vector<8x4xf32>
    %c0_158 = arith.constant 0 : index
    %c0_159 = arith.constant 0 : index
    %c0_160 = arith.constant 0 : index
    %395 = vector.load %arg2[%c0_158, %c0_159, %c0_160] : memref<2x4x32xf32, #tpu.memory_space<vmem>>, vector<1x4x32xf32>
    %396 = vector.shape_cast %395 : vector<1x4x32xf32> to vector<4x32xf32>
    %cst_161 = arith.constant dense<0.000000e+00> : vector<8x32xf32>
    %397 = tpu.matmul %394, %396, %cst_161 {dimension_numbers = #tpu.dot_dimension_numbers<[1], [0], [0], [1], [0, 0, 1, 1], [], []>} : vector<8x4xf32>, vector<4x32xf32>, vector<8x32xf32> -> vector<8x32xf32>
    %c0_162 = arith.constant 0 : index
    %c0_163 = arith.constant 0 : index
    %398 = vector.load %arg19[%c0_162, %c0_163] : memref<8x32xf32, #tpu.memory_space<vmem>>, vector<8x32xf32>
    %399 = arith.addf %397, %398 : vector<8x32xf32>
    %400 = arith.negf %399 : vector<8x32xf32>
    %401 = math.exp %400 : vector<8x32xf32>
    %cst_164 = arith.constant 1.000000e+00 : f32
    %402 = vector.broadcast %cst_164 : f32 to vector<8x32xf32>
    %403 = arith.addf %402, %401 : vector<8x32xf32>
    %404 = arith.divf %402, %403 : vector<8x32xf32>
    %c0_165 = arith.constant 0 : index
    %c0_166 = arith.constant 0 : index
    %c0_167 = arith.constant 0 : index
    %405 = vector.load %arg3[%c0_165, %c0_166, %c0_167] : memref<2x8x32xf32, #tpu.memory_space<vmem>>, vector<1x8x32xf32>
    %406 = vector.shape_cast %405 : vector<1x8x32xf32> to vector<8x32xf32>
    %407 = arith.mulf %406, %404 : vector<8x32xf32>
    %408 = math.tanh %399 : vector<8x32xf32>
    %409 = arith.mulf %404, %408 : vector<8x32xf32>
    %410 = arith.addf %407, %409 : vector<8x32xf32>
    %c0_168 = arith.constant 0 : index
    %c0_169 = arith.constant 0 : index
    %c0_170 = arith.constant 0 : index
    %411 = vector.load %arg23[%c0_168, %c0_169, %c0_170] : memref<2x8x32xf32, #tpu.memory_space<vmem>>, vector<1x8x32xf32>
    %412 = vector.shape_cast %411 : vector<1x8x32xf32> to vector<8x32xf32>
    %413 = vector.shape_cast %410 : vector<8x32xf32> to vector<1x8x32xf32>
    tpu.vector_store %arg23[%c0_168, %c0_169, %c0_170], %413 {strides = array<i32>} : memref<2x8x32xf32, #tpu.memory_space<vmem>>, vector<1x8x32xf32>,
    %c0_171 = arith.constant 0 : index
    %c0_172 = arith.constant 0 : index
    %414 = vector.load %arg18[%c0_171, %c0_172] : memref<8x4xf32, #tpu.memory_space<vmem>>, vector<8x4xf32>
    %c1_173 = arith.constant 1 : index
    %c0_174 = arith.constant 0 : index
    %c0_175 = arith.constant 0 : index
    %415 = vector.load %arg2[%c1_173, %c0_174, %c0_175] : memref<2x4x32xf32, #tpu.memory_space<vmem>>, vector<1x4x32xf32>
    %416 = vector.shape_cast %415 : vector<1x4x32xf32> to vector<4x32xf32>
    %cst_176 = arith.constant dense<0.000000e+00> : vector<8x32xf32>
    %417 = tpu.matmul %414, %416, %cst_176 {dimension_numbers = #tpu.dot_dimension_numbers<[1], [0], [0], [1], [0, 0, 1, 1], [], []>} : vector<8x4xf32>, vector<4x32xf32>, vector<8x32xf32> -> vector<8x32xf32>
    %c0_177 = arith.constant 0 : index
    %c0_178 = arith.constant 0 : index
    %418 = vector.load %arg19[%c0_177, %c0_178] : memref<8x32xf32, #tpu.memory_space<vmem>>, vector<8x32xf32>
    %419 = arith.addf %417, %418 : vector<8x32xf32>
    %420 = arith.negf %419 : vector<8x32xf32>
    %421 = math.exp %420 : vector<8x32xf32>
    %cst_179 = arith.constant 1.000000e+00 : f32
    %422 = vector.broadcast %cst_179 : f32 to vector<8x32xf32>
    %423 = arith.addf %422, %421 : vector<8x32xf32>
    %424 = arith.divf %422, %423 : vector<8x32xf32>
    %c1_180 = arith.constant 1 : index
    %c0_181 = arith.constant 0 : index
    %c0_182 = arith.constant 0 : index
    %425 = vector.load %arg3[%c1_180, %c0_181, %c0_182] : memref<2x8x32xf32, #tpu.memory_space<vmem>>, vector<1x8x32xf32>
    %426 = vector.shape_cast %425 : vector<1x8x32xf32> to vector<8x32xf32>
    %427 = arith.mulf %426, %424 : vector<8x32xf32>
    %428 = math.tanh %419 : vector<8x32xf32>
    %429 = arith.mulf %424, %428 : vector<8x32xf32>
    %430 = arith.addf %427, %429 : vector<8x32xf32>
    %c1_183 = arith.constant 1 : index
    %c0_184 = arith.constant 0 : index
    %c0_185 = arith.constant 0 : index
    %431 = vector.load %arg23[%c1_183, %c0_184, %c0_185] : memref<2x8x32xf32, #tpu.memory_space<vmem>>, vector<1x8x32xf32>
    %432 = vector.shape_cast %431 : vector<1x8x32xf32> to vector<8x32xf32>
    %433 = vector.shape_cast %430 : vector<8x32xf32> to vector<1x8x32xf32>
    tpu.vector_store %arg23[%c1_183, %c0_184, %c0_185], %433 {strides = array<i32>} : memref<2x8x32xf32, #tpu.memory_space<vmem>>, vector<1x8x32xf32>,
    %cst_186 = arith.constant dense<0.000000e+00> : vector<2x32xf32>
    %434 = vector.multi_reduction <add>, %382, %cst_186 [1] : vector<2x8x32xf32> to vector<2x32xf32>
    %cst_187 = arith.constant 8.000000e+00 : f32
    %435 = vector.broadcast %cst_187 : f32 to vector<2x32xf32>
    %436 = arith.divf %434, %435 : vector<2x32xf32>
    %437 = arith.truncf %436 : vector<2x32xf32> to vector<2x32xbf16>
    %c0_188 = arith.constant 0 : index
    %c0_189 = arith.constant 0 : index
    %438 = vector.load %arg20[%c0_188, %c0_189] : memref<32x128xbf16, #tpu.memory_space<vmem>>, vector<32x128xbf16>
    %cst_190 = arith.constant dense<0.000000e+00> : vector<2x128xf32>
    %439 = tpu.matmul %437, %438, %cst_190 {dimension_numbers = #tpu.dot_dimension_numbers<[1], [0], [0], [1], [0, 0, 1, 1], [], []>} : vector<2x32xbf16>, vector<32x128xbf16>, vector<2x128xf32> -> vector<2x128xf32>
    %c0_191 = arith.constant 0 : index
    %c0_192 = arith.constant 0 : index
    %440 = vector.load %arg21[%c0_191, %c0_192] : memref<1x128xf32, #tpu.memory_space<vmem>>, vector<1x128xf32>
    %441 = vector.broadcast %440 : vector<1x128xf32> to vector<2x128xf32>
    %442 = arith.addf %439, %441 : vector<2x128xf32>
    %cst_193 = arith.constant dense<0xFF800000> : vector<2xf32>
    %443 = vector.multi_reduction <maximumf>, %442, %cst_193 [1] : vector<2x128xf32> to vector<2xf32>
    %444 = vector.shape_cast %443 : vector<2xf32> to vector<2x1xf32>
    %445 = vector.broadcast %444 : vector<2x1xf32> to vector<2x128xf32>
    %446 = arith.subf %442, %445 : vector<2x128xf32>
    %447 = math.exp %446 : vector<2x128xf32>
    %cst_194 = arith.constant dense<0.000000e+00> : vector<2xf32>
    %448 = vector.multi_reduction <add>, %447, %cst_194 [1] : vector<2x128xf32> to vector<2xf32>
    %449 = vector.shape_cast %448 : vector<2xf32> to vector<2x1xf32>
    %450 = vector.broadcast %449 : vector<2x1xf32> to vector<2x128xf32>
    %451 = arith.divf %447, %450 : vector<2x128xf32>
    %452 = vector.shape_cast %451 : vector<2x128xf32> to vector<2x1x128xf32>
    %c0_195 = arith.constant 0 : index
    %c0_196 = arith.constant 0 : index
    %c0_197 = arith.constant 0 : index
    %453 = vector.load %arg24[%c0_195, %c0_196, %c0_197] : memref<2x1x128xf32, #tpu.memory_space<vmem>>, vector<2x1x128xf32>
    tpu.vector_store %arg24[%c0_195, %c0_196, %c0_197], %452 {strides = array<i32>} : memref<2x1x128xf32, #tpu.memory_space<vmem>>, vector<2x1x128xf32>,
    return
  }
  func.func @transform_0(%arg0: i32) -> (i32, i32, i32) {
    %c0_i32 = arith.constant 0 : i32
    %c0_i32_0 = arith.constant 0 : i32
    %c0_i32_1 = arith.constant 0 : i32
    return %arg0, %c0_i32, %c0_i32_0 : i32, i32, i32
  }
  func.func @transform_1(%arg0: i32) -> (i32, i32, i32) {
    %c0_i32 = arith.constant 0 : i32
    %c0_i32_0 = arith.constant 0 : i32
    %c0_i32_1 = arith.constant 0 : i32
    return %arg0, %c0_i32, %c0_i32_0 : i32, i32, i32
  }
  func.func @transform_2(%arg0: i32) -> (i32, i32, i32) {
    %c0_i32 = arith.constant 0 : i32
    %c0_i32_0 = arith.constant 0 : i32
    %c0_i32_1 = arith.constant 0 : i32
    return %arg0, %c0_i32, %c0_i32_0 : i32, i32, i32
  }
  func.func @transform_3(%arg0: i32) -> (i32, i32, i32) {
    %c0_i32 = arith.constant 0 : i32
    %c0_i32_0 = arith.constant 0 : i32
    %c0_i32_1 = arith.constant 0 : i32
    %c0_i32_2 = arith.constant 0 : i32
    return %c0_i32, %c0_i32_0, %c0_i32_1 : i32, i32, i32
  }
  func.func @transform_4(%arg0: i32) -> (i32, i32, i32) {
    %c0_i32 = arith.constant 0 : i32
    %c0_i32_0 = arith.constant 0 : i32
    %c0_i32_1 = arith.constant 0 : i32
    %c0_i32_2 = arith.constant 0 : i32
    return %c0_i32, %c0_i32_0, %c0_i32_1 : i32, i32, i32
  }
  func.func @transform_5(%arg0: i32) -> (i32, i32, i32) {
    %c0_i32 = arith.constant 0 : i32
    %c0_i32_0 = arith.constant 0 : i32
    %c0_i32_1 = arith.constant 0 : i32
    %c0_i32_2 = arith.constant 0 : i32
    return %c0_i32, %c0_i32_0, %c0_i32_1 : i32, i32, i32
  }
  func.func @transform_6(%arg0: i32) -> (i32, i32, i32) {
    %c0_i32 = arith.constant 0 : i32
    %c0_i32_0 = arith.constant 0 : i32
    %c0_i32_1 = arith.constant 0 : i32
    %c0_i32_2 = arith.constant 0 : i32
    return %c0_i32, %c0_i32_0, %c0_i32_1 : i32, i32, i32
  }
  func.func @transform_7(%arg0: i32) -> (i32, i32, i32) {
    %c0_i32 = arith.constant 0 : i32
    %c0_i32_0 = arith.constant 0 : i32
    %c0_i32_1 = arith.constant 0 : i32
    %c0_i32_2 = arith.constant 0 : i32
    return %c0_i32, %c0_i32_0, %c0_i32_1 : i32, i32, i32
  }
  func.func @transform_8(%arg0: i32) -> (i32, i32, i32) {
    %c0_i32 = arith.constant 0 : i32
    %c0_i32_0 = arith.constant 0 : i32
    %c0_i32_1 = arith.constant 0 : i32
    %c0_i32_2 = arith.constant 0 : i32
    return %c0_i32, %c0_i32_0, %c0_i32_1 : i32, i32, i32
  }
  func.func @transform_9(%arg0: i32) -> (i32, i32, i32) {
    %c0_i32 = arith.constant 0 : i32
    %c0_i32_0 = arith.constant 0 : i32
    %c0_i32_1 = arith.constant 0 : i32
    %c0_i32_2 = arith.constant 0 : i32
    return %c0_i32, %c0_i32_0, %c0_i32_1 : i32, i32, i32
  }
  func.func @transform_10(%arg0: i32) -> (i32, i32, i32) {
    %c0_i32 = arith.constant 0 : i32
    %c0_i32_0 = arith.constant 0 : i32
    %c0_i32_1 = arith.constant 0 : i32
    %c0_i32_2 = arith.constant 0 : i32
    return %c0_i32, %c0_i32_0, %c0_i32_1 : i32, i32, i32
  }
  func.func @transform_11(%arg0: i32) -> (i32, i32, i32) {
    %c0_i32 = arith.constant 0 : i32
    %c0_i32_0 = arith.constant 0 : i32
    %c0_i32_1 = arith.constant 0 : i32
    %c0_i32_2 = arith.constant 0 : i32
    return %c0_i32, %c0_i32_0, %c0_i32_1 : i32, i32, i32
  }
  func.func @transform_12(%arg0: i32) -> (i32, i32, i32) {
    %c0_i32 = arith.constant 0 : i32
    %c0_i32_0 = arith.constant 0 : i32
    %c0_i32_1 = arith.constant 0 : i32
    %c0_i32_2 = arith.constant 0 : i32
    return %c0_i32, %c0_i32_0, %c0_i32_1 : i32, i32, i32
  }
  func.func @transform_13(%arg0: i32) -> (i32, i32, i32) {
    %c0_i32 = arith.constant 0 : i32
    %c0_i32_0 = arith.constant 0 : i32
    %c0_i32_1 = arith.constant 0 : i32
    %c0_i32_2 = arith.constant 0 : i32
    return %c0_i32, %c0_i32_0, %c0_i32_1 : i32, i32, i32
  }
  func.func @transform_14(%arg0: i32) -> (i32, i32, i32) {
    %c0_i32 = arith.constant 0 : i32
    %c0_i32_0 = arith.constant 0 : i32
    %c0_i32_1 = arith.constant 0 : i32
    %c0_i32_2 = arith.constant 0 : i32
    return %c0_i32, %c0_i32_0, %c0_i32_1 : i32, i32, i32
  }
  func.func @transform_15(%arg0: i32) -> (i32, i32) {
    %c0_i32 = arith.constant 0 : i32
    %c0_i32_0 = arith.constant 0 : i32
    %c0_i32_1 = arith.constant 0 : i32
    return %c0_i32, %c0_i32_0 : i32, i32
  }
  func.func @transform_16(%arg0: i32) -> (i32, i32) {
    %c0_i32 = arith.constant 0 : i32
    %c0_i32_0 = arith.constant 0 : i32
    %c0_i32_1 = arith.constant 0 : i32
    return %c0_i32, %c0_i32_0 : i32, i32
  }
  func.func @transform_17(%arg0: i32) -> (i32, i32) {
    %c0_i32 = arith.constant 0 : i32
    %c0_i32_0 = arith.constant 0 : i32
    %c0_i32_1 = arith.constant 0 : i32
    return %c0_i32, %c0_i32_0 : i32, i32
  }
  func.func @transform_18(%arg0: i32) -> (i32, i32) {
    %c0_i32 = arith.constant 0 : i32
    %c0_i32_0 = arith.constant 0 : i32
    %c0_i32_1 = arith.constant 0 : i32
    return %c0_i32, %c0_i32_0 : i32, i32
  }
  func.func @transform_19(%arg0: i32) -> (i32, i32) {
    %c0_i32 = arith.constant 0 : i32
    %c0_i32_0 = arith.constant 0 : i32
    %c0_i32_1 = arith.constant 0 : i32
    return %c0_i32, %c0_i32_0 : i32, i32
  }
  func.func @transform_20(%arg0: i32) -> (i32, i32) {
    %c0_i32 = arith.constant 0 : i32
    %c0_i32_0 = arith.constant 0 : i32
    %c0_i32_1 = arith.constant 0 : i32
    return %c0_i32, %c0_i32_0 : i32, i32
  }
  func.func @transform_21(%arg0: i32) -> (i32, i32, i32) {
    %c0_i32 = arith.constant 0 : i32
    %c0_i32_0 = arith.constant 0 : i32
    %c0_i32_1 = arith.constant 0 : i32
    return %arg0, %c0_i32, %c0_i32_0 : i32, i32, i32
  }
  func.func @transform_22(%arg0: i32) -> (i32, i32, i32) {
    %c0_i32 = arith.constant 0 : i32
    %c0_i32_0 = arith.constant 0 : i32
    %c0_i32_1 = arith.constant 0 : i32
    return %arg0, %c0_i32, %c0_i32_0 : i32, i32, i32
  }
  func.func @transform_23(%arg0: i32) -> (i32, i32, i32) {
    %c0_i32 = arith.constant 0 : i32
    %c0_i32_0 = arith.constant 0 : i32
    %c0_i32_1 = arith.constant 0 : i32
    return %arg0, %c0_i32, %c0_i32_0 : i32, i32, i32
  }
}

</mosaic_0001>

<llo_original>
// kernel: _forward_core.1
$region0: #{_forward_core.1}
  #allocation0 [shape = 'u32[]', space=smem, size = 0x4, offset = 0x4, fixed_abs, tag = 'smem constant byte address 0x4 - core index']
  #allocation1 [shape = 'u32[72,128]{1,0:T(1,128)}', space=vmem, size = 0x9000, scoped, tag = 'internal scratch']
  %s0 = inlined_call_operand.vmem [shape: f32[4,8,32], index: 0, kind: input, shape index: {}]
  %s1 = inlined_call_operand.vmem [shape: f32[4,4,32], index: 1, kind: input, shape index: {}]
  %s2 = inlined_call_operand.vmem [shape: f32[4,8,32], index: 2, kind: input, shape index: {}]
  %s3 = inlined_call_operand.vmem [shape: bf16[2,32,96], index: 3, kind: input, shape index: {}]
  %s4 = inlined_call_operand.vmem [shape: f32[2,1,96], index: 4, kind: input, shape index: {}]
  %s5 = inlined_call_operand.vmem [shape: bf16[2,32,32], index: 5, kind: input, shape index: {}]
  %s6 = inlined_call_operand.vmem [shape: f32[2,1,32], index: 6, kind: input, shape index: {}]
  %s7 = inlined_call_operand.vmem [shape: f32[2,1,32], index: 7, kind: input, shape index: {}]
  %s8 = inlined_call_operand.vmem [shape: f32[2,1,32], index: 8, kind: input, shape index: {}]
  %s9 = inlined_call_operand.vmem [shape: bf16[2,32,64], index: 9, kind: input, shape index: {}]
  %s10 = inlined_call_operand.vmem [shape: f32[2,1,64], index: 10, kind: input, shape index: {}]
  %s11 = inlined_call_operand.vmem [shape: bf16[2,64,32], index: 11, kind: input, shape index: {}]
  %s12 = inlined_call_operand.vmem [shape: f32[2,1,32], index: 12, kind: input, shape index: {}]
  %s13 = inlined_call_operand.vmem [shape: f32[2,1,32], index: 13, kind: input, shape index: {}]
  %s14 = inlined_call_operand.vmem [shape: f32[2,1,32], index: 14, kind: input, shape index: {}]
  %s15 = inlined_call_operand.vmem [shape: f32[8,32], index: 15, kind: input, shape index: {}]
  %s16 = inlined_call_operand.vmem [shape: f32[1,32], index: 16, kind: input, shape index: {}]
  %s17 = inlined_call_operand.vmem [shape: f32[8,4], index: 17, kind: input, shape index: {}]
  %s18 = inlined_call_operand.vmem [shape: f32[8,32], index: 18, kind: input, shape index: {}]
  %s19 = inlined_call_operand.vmem [shape: bf16[32,128], index: 19, kind: input, shape index: {}]
  %s20 = inlined_call_operand.vmem [shape: f32[1,128], index: 20, kind: input, shape index: {}]
  %s21 = inlined_call_operand.vmem [shape: f32[4,1,32], index: 21, kind: output, shape index: {0}]
  %s22 = inlined_call_operand.vmem [shape: f32[4,8,32], index: 22, kind: output, shape index: {1}]
  %s23 = inlined_call_operand.hbm [shape: f32[4,1,128], index: 23, kind: output, shape index: {2}]
  %24 = xla_tuple %s21, %s22, %s23
  %s25 = sld [smem:[#allocation0]]
  $region133: #{_forward_core.1} parent=0
    _
  %s27 = ssub.s32 1, %s25
  %s28 = scalar_select 0, %s27, %s25
  $region1: #{_forward_core.1} parent=0
    #allocation2 [shape = 'u8[2048]{0}', space=vmem, size = 0x800, scoped, tag = 'output window, operand 2']
    #allocation3 [shape = 's32[2]{0}', space=sflag, size = 0x8, scoped, tag = 'scoped memory for _forward_core.1']
    %29 = vsyncpa [#allocation3], 0
    %s30 = scalar_lea.sflag [#allocation3], 1
    %31 = vsyncpa %s30, 0
    loop: start=0, step=1, limit=4
    $region2: #{_forward_core.1} parent=1 // loop_pre_header
      _
    $region3: #{_forward_core.1} parent=1 // loop_header
      %s33 = sphi 0, %s37
      %p34 = scmp.ge.s32.totalorder %s33, 4
      %s43 = sphi 0, %s45
      %s46 = sphi 0, %s43
      %s47 = sphi 0, %s46
      %s63 = sphi 0, %s47
      %s69 = sphi 0, %s71
      %s72 = sphi 0, %s69
      %s73 = sphi 0, %s72
      %s89 = sphi 0, %s73
      %s95 = sphi 0, %s97
      %s98 = sphi 0, %s95
      %s99 = sphi 0, %s98
      %s115 = sphi 0, %s99
      %s119 = sphi 0, %s119
      %s121 = sphi 0, %s119
      %s122 = sphi 0, %s121
      %s136 = sphi 0, %s122
      %s140 = sphi 0, %s140
      %s142 = sphi 0, %s140
      %s143 = sphi 0, %s142
      %s157 = sphi 0, %s143
      %s161 = sphi 0, %s161
      %s163 = sphi 0, %s161
      %s164 = sphi 0, %s163
      %s178 = sphi 0, %s164
      %s182 = sphi 0, %s182
      %s184 = sphi 0, %s182
      %s185 = sphi 0, %s184
      %s199 = sphi 0, %s185
      %s203 = sphi 0, %s203
      %s205 = sphi 0, %s203
      %s206 = sphi 0, %s205
      %s220 = sphi 0, %s206
      %s224 = sphi 0, %s224
      %s226 = sphi 0, %s224
      %s227 = sphi 0, %s226
      %s241 = sphi 0, %s227
      %s245 = sphi 0, %s245
      %s247 = sphi 0, %s245
      %s248 = sphi 0, %s247
      %s262 = sphi 0, %s248
      %s266 = sphi 0, %s266
      %s268 = sphi 0, %s266
      %s269 = sphi 0, %s268
      %s283 = sphi 0, %s269
      %s287 = sphi 0, %s287
      %s289 = sphi 0, %s287
      %s290 = sphi 0, %s289
      %s304 = sphi 0, %s290
      %s308 = sphi 0, %s308
      %s310 = sphi 0, %s308
      %s311 = sphi 0, %s310
      %s325 = sphi 0, %s311
      %s329 = sphi 0, %s329
      %s331 = sphi 0, %s329
      %s332 = sphi 0, %s331
      %s346 = sphi 0, %s332
      %s350 = sphi 0, %s350
      %s352 = sphi 0, %s350
      %s353 = sphi 0, %s352
      %s367 = sphi 0, %s353
      %s371 = sphi 0, %s371
      %s373 = sphi 0, %s371
      %s374 = sphi 0, %s373
      %s388 = sphi 0, %s374
      %s392 = sphi 0, %s392
      %s394 = sphi 0, %s392
      %s395 = sphi 0, %s394
      %s409 = sphi 0, %s395
      %s413 = sphi 0, %s413
      %s415 = sphi 0, %s413
      %s416 = sphi 0, %s415
      %s430 = sphi 0, %s416
      %s434 = sphi 0, %s434
      %s436 = sphi 0, %s434
      %s437 = sphi 0, %s436
      %s451 = sphi 0, %s437
      %s455 = sphi 0, %s455
      %s457 = sphi 0, %s455
      %s458 = sphi 0, %s457
      %s472 = sphi 0, %s458
      %s476 = sphi 0, %s476
      %s478 = sphi 0, %s476
      %s479 = sphi 0, %s478
      %s493 = sphi 0, %s479
      %s499 = sphi 0, %s501
      %s502 = sphi 0, %s499
      %s503 = sphi 0, %s502
      %s519 = sphi 0, %s503
      %s525 = sphi 0, %s527
      %s528 = sphi 0, %s525
      %s529 = sphi 0, %s528
      %s545 = sphi 0, %s529
      %s551 = sphi 0, %s553
      %s554 = sphi 0, %s551
      %s555 = sphi 0, %s554
      %s571 = sphi 0, %s555
    $region4: #{_forward_core.1} parent=1 // loop_header_branch
      %36 = sbr.rel (%p34) target = $region8
    $region5: #{_forward_core.1} parent=1 // loop_body
      %s38 = ssub.s32 %s33, 1
      %s39 = ssub.s32 %s33, 2
      %s40 = sadd.s32 %s33, 1
      %s41 = ssub.s32 %s33, %s40
      %p42 = scmp.eq.s32.totalorder %s41, 0
      %s44 = sadd.s32 %s43, 1
      %s45 = scalar_select %p42, %s43, %s44
      %p48 = pneg %p42
      %p49 = scmp.eq.s32.totalorder %s33, 1
      %p50 = por %p48, %p49
      %p51 = scmp.ne.s32.totalorder %s43, %s46
      %p52 = scmp.eq.s32.totalorder %s33, 0
      %p53 = por %p51, %p52
      %p54 = scmp.ne.s32.totalorder %s43, %s46
      %p55 = scmp.eq.s32.totalorder %s38, 1
      %p56 = por %p54, %p55
      %p57 = scmp.ne.s32.totalorder %s46, %s47
      %p58 = scmp.eq.s32.totalorder %s38, 0
      %p59 = por %p57, %p58
      %p60 = scmp.ne.s32.totalorder %s46, %s47
      %p61 = scmp.eq.s32.totalorder %s39, 1
      %p62 = por %p60, %p61
      %p64 = scmp.ne.s32.totalorder %s47, %s63
      %p65 = scmp.eq.s32.totalorder %s39, 0
      %p66 = por %p64, %p65
      %s67 = ssub.s32 %s33, %s40
      %p68 = scmp.eq.s32.totalorder %s67, 0
      %s70 = sadd.s32 %s69, 1
      %s71 = scalar_select %p68, %s69, %s70
      %p74 = pneg %p68
      %p75 = scmp.eq.s32.totalorder %s33, 1
      %p76 = por %p74, %p75
      %p77 = scmp.ne.s32.totalorder %s69, %s72
      %p78 = scmp.eq.s32.totalorder %s33, 0
      %p79 = por %p77, %p78
      %p80 = scmp.ne.s32.totalorder %s69, %s72
      %p81 = scmp.eq.s32.totalorder %s38, 1
      %p82 = por %p80, %p81
      %p83 = scmp.ne.s32.totalorder %s72, %s73
      %p84 = scmp.eq.s32.totalorder %s38, 0
      %p85 = por %p83, %p84
      %p86 = scmp.ne.s32.totalorder %s72, %s73
      %p87 = scmp.eq.s32.totalorder %s39, 1
      %p88 = por %p86, %p87
      %p90 = scmp.ne.s32.totalorder %s73, %s89
      %p91 = scmp.eq.s32.totalorder %s39, 0
      %p92 = por %p90, %p91
      %s93 = ssub.s32 %s33, %s40
      %p94 = scmp.eq.s32.totalorder %s93, 0
      %s96 = sadd.s32 %s95, 1
      %s97 = scalar_select %p94, %s95, %s96
      %p100 = pneg %p94
      %p101 = scmp.eq.s32.totalorder %s33, 1
      %p102 = por %p100, %p101
      %p103 = scmp.ne.s32.totalorder %s95, %s98
      %p104 = scmp.eq.s32.totalorder %s33, 0
      %p105 = por %p103, %p104
      %p106 = scmp.ne.s32.totalorder %s95, %s98
      %p107 = scmp.eq.s32.totalorder %s38, 1
      %p108 = por %p106, %p107
      %p109 = scmp.ne.s32.totalorder %s98, %s99
      %p110 = scmp.eq.s32.totalorder %s38, 0
      %p111 = por %p109, %p110
      %p112 = scmp.ne.s32.totalorder %s98, %s99
      %p113 = scmp.eq.s32.totalorder %s39, 1
      %p114 = por %p112, %p113
      %p116 = scmp.ne.s32.totalorder %s99, %s115
      %p117 = scmp.eq.s32.totalorder %s39, 0
      %p118 = por %p116, %p117
      %s120 = sadd.s32 %s119, 1
      %p123 = scmp.eq.s32.totalorder %s33, 1
      %p124 = scmp.ne.s32.totalorder %s119, %s121
      %p125 = scmp.eq.s32.totalorder %s33, 0
      %p126 = por %p124, %p125
      %p127 = scmp.ne.s32.totalorder %s119, %s121
      %p128 = scmp.eq.s32.totalorder %s38, 1
      %p129 = por %p127, %p128
      %p130 = scmp.ne.s32.totalorder %s121, %s122
      %p131 = scmp.eq.s32.totalorder %s38, 0
      %p132 = por %p130, %p131
      %p133 = scmp.ne.s32.totalorder %s121, %s122
      %p134 = scmp.eq.s32.totalorder %s39, 1
      %p135 = por %p133, %p134
      %p137 = scmp.ne.s32.totalorder %s122, %s136
      %p138 = scmp.eq.s32.totalorder %s39, 0
      %p139 = por %p137, %p138
      %s141 = sadd.s32 %s140, 1
      %p144 = scmp.eq.s32.totalorder %s33, 1
      %p145 = scmp.ne.s32.totalorder %s140, %s142
      %p146 = scmp.eq.s32.totalorder %s33, 0
      %p147 = por %p145, %p146
      %p148 = scmp.ne.s32.totalorder %s140, %s142
      %p149 = scmp.eq.s32.totalorder %s38, 1
      %p150 = por %p148, %p149
      %p151 = scmp.ne.s32.totalorder %s142, %s143
      %p152 = scmp.eq.s32.totalorder %s38, 0
      %p153 = por %p151, %p152
      %p154 = scmp.ne.s32.totalorder %s142, %s143
      %p155 = scmp.eq.s32.totalorder %s39, 1
      %p156 = por %p154, %p155
      %p158 = scmp.ne.s32.totalorder %s143, %s157
      %p159 = scmp.eq.s32.totalorder %s39, 0
      %p160 = por %p158, %p159
      %s162 = sadd.s32 %s161, 1
      %p165 = scmp.eq.s32.totalorder %s33, 1
      %p166 = scmp.ne.s32.totalorder %s161, %s163
      %p167 = scmp.eq.s32.totalorder %s33, 0
      %p168 = por %p166, %p167
      %p169 = scmp.ne.s32.totalorder %s161, %s163
      %p170 = scmp.eq.s32.totalorder %s38, 1
      %p171 = por %p169, %p170
      %p172 = scmp.ne.s32.totalorder %s163, %s164
      %p173 = scmp.eq.s32.totalorder %s38, 0
      %p174 = por %p172, %p173
      %p175 = scmp.ne.s32.totalorder %s163, %s164
      %p176 = scmp.eq.s32.totalorder %s39, 1
      %p177 = por %p175, %p176
      %p179 = scmp.ne.s32.totalorder %s164, %s178
      %p180 = scmp.eq.s32.totalorder %s39, 0
      %p181 = por %p179, %p180
      %s183 = sadd.s32 %s182, 1
      %p186 = scmp.eq.s32.totalorder %s33, 1
      %p187 = scmp.ne.s32.totalorder %s182, %s184
      %p188 = scmp.eq.s32.totalorder %s33, 0
      %p189 = por %p187, %p188
      %p190 = scmp.ne.s32.totalorder %s182, %s184
      %p191 = scmp.eq.s32.totalorder %s38, 1
      %p192 = por %p190, %p191
      %p193 = scmp.ne.s32.totalorder %s184, %s185
      %p194 = scmp.eq.s32.totalorder %s38, 0
      %p195 = por %p193, %p194
      %p196 = scmp.ne.s32.totalorder %s184, %s185
      %p197 = scmp.eq.s32.totalorder %s39, 1
      %p198 = por %p196, %p197
      %p200 = scmp.ne.s32.totalorder %s185, %s199
      %p201 = scmp.eq.s32.totalorder %s39, 0
      %p202 = por %p200, %p201
      %s204 = sadd.s32 %s203, 1
      %p207 = scmp.eq.s32.totalorder %s33, 1
      %p208 = scmp.ne.s32.totalorder %s203, %s205
      %p209 = scmp.eq.s32.totalorder %s33, 0
      %p210 = por %p208, %p209
      %p211 = scmp.ne.s32.totalorder %s203, %s205
      %p212 = scmp.eq.s32.totalorder %s38, 1
      %p213 = por %p211, %p212
      %p214 = scmp.ne.s32.totalorder %s205, %s206
      %p215 = scmp.eq.s32.totalorder %s38, 0
      %p216 = por %p214, %p215
      %p217 = scmp.ne.s32.totalorder %s205, %s206
      %p218 = scmp.eq.s32.totalorder %s39, 1
      %p219 = por %p217, %p218
      %p221 = scmp.ne.s32.totalorder %s206, %s220
      %p222 = scmp.eq.s32.totalorder %s39, 0
      %p223 = por %p221, %p222
      %s225 = sadd.s32 %s224, 1
      %p228 = scmp.eq.s32.totalorder %s33, 1
      %p229 = scmp.ne.s32.totalorder %s224, %s226
      %p230 = scmp.eq.s32.totalorder %s33, 0
      %p231 = por %p229, %p230
      %p232 = scmp.ne.s32.totalorder %s224, %s226
      %p233 = scmp.eq.s32.totalorder %s38, 1
      %p234 = por %p232, %p233
      %p235 = scmp.ne.s32.totalorder %s226, %s227
      %p236 = scmp.eq.s32.totalorder %s38, 0
      %p237 = por %p235, %p236
      %p238 = scmp.ne.s32.totalorder %s226, %s227
      %p239 = scmp.eq.s32.totalorder %s39, 1
      %p240 = por %p238, %p239
      %p242 = scmp.ne.s32.totalorder %s227, %s241
      %p243 = scmp.eq.s32.totalorder %s39, 0
      %p244 = por %p242, %p243
      %s246 = sadd.s32 %s245, 1
      %p249 = scmp.eq.s32.totalorder %s33, 1
      %p250 = scmp.ne.s32.totalorder %s245, %s247
      %p251 = scmp.eq.s32.totalorder %s33, 0
      %p252 = por %p250, %p251
      %p253 = scmp.ne.s32.totalorder %s245, %s247
      %p254 = scmp.eq.s32.totalorder %s38, 1
      %p255 = por %p253, %p254
      %p256 = scmp.ne.s32.totalorder %s247, %s248
      %p257 = scmp.eq.s32.totalorder %s38, 0
      %p258 = por %p256, %p257
      %p259 = scmp.ne.s32.totalorder %s247, %s248
      %p260 = scmp.eq.s32.totalorder %s39, 1
      %p261 = por %p259, %p260
      %p263 = scmp.ne.s32.totalorder %s248, %s262
      %p264 = scmp.eq.s32.totalorder %s39, 0
      %p265 = por %p263, %p264
      %s267 = sadd.s32 %s266, 1
      %p270 = scmp.eq.s32.totalorder %s33, 1
      %p271 = scmp.ne.s32.totalorder %s266, %s268
      %p272 = scmp.eq.s32.totalorder %s33, 0
      %p273 = por %p271, %p272
      %p274 = scmp.ne.s32.totalorder %s266, %s268
      %p275 = scmp.eq.s32.totalorder %s38, 1
      %p276 = por %p274, %p275
      %p277 = scmp.ne.s32.totalorder %s268, %s269
      %p278 = scmp.eq.s32.totalorder %s38, 0
      %p279 = por %p277, %p278
      %p280 = scmp.ne.s32.totalorder %s268, %s269
      %p281 = scmp.eq.s32.totalorder %s39, 1
      %p282 = por %p280, %p281
      %p284 = scmp.ne.s32.totalorder %s269, %s283
      %p285 = scmp.eq.s32.totalorder %s39, 0
      %p286 = por %p284, %p285
      %s288 = sadd.s32 %s287, 1
      %p291 = scmp.eq.s32.totalorder %s33, 1
      %p292 = scmp.ne.s32.totalorder %s287, %s289
      %p293 = scmp.eq.s32.totalorder %s33, 0
      %p294 = por %p292, %p293
      %p295 = scmp.ne.s32.totalorder %s287, %s289
      %p296 = scmp.eq.s32.totalorder %s38, 1
      %p297 = por %p295, %p296
      %p298 = scmp.ne.s32.totalorder %s289, %s290
      %p299 = scmp.eq.s32.totalorder %s38, 0
      %p300 = por %p298, %p299
      %p301 = scmp.ne.s32.totalorder %s289, %s290
      %p302 = scmp.eq.s32.totalorder %s39, 1
      %p303 = por %p301, %p302
      %p305 = scmp.ne.s32.totalorder %s290, %s304
      %p306 = scmp.eq.s32.totalorder %s39, 0
      %p307 = por %p305, %p306
      %s309 = sadd.s32 %s308, 1
      %p312 = scmp.eq.s32.totalorder %s33, 1
      %p313 = scmp.ne.s32.totalorder %s308, %s310
      %p314 = scmp.eq.s32.totalorder %s33, 0
      %p315 = por %p313, %p314
      %p316 = scmp.ne.s32.totalorder %s308, %s310
      %p317 = scmp.eq.s32.totalorder %s38, 1
      %p318 = por %p316, %p317
      %p319 = scmp.ne.s32.totalorder %s310, %s311
      %p320 = scmp.eq.s32.totalorder %s38, 0
      %p321 = por %p319, %p320
      %p322 = scmp.ne.s32.totalorder %s310, %s311
      %p323 = scmp.eq.s32.totalorder %s39, 1
      %p324 = por %p322, %p323
      %p326 = scmp.ne.s32.totalorder %s311, %s325
      %p327 = scmp.eq.s32.totalorder %s39, 0
      %p328 = por %p326, %p327
      %s330 = sadd.s32 %s329, 1
      %p333 = scmp.eq.s32.totalorder %s33, 1
      %p334 = scmp.ne.s32.totalorder %s329, %s331
      %p335 = scmp.eq.s32.totalorder %s33, 0
      %p336 = por %p334, %p335
      %p337 = scmp.ne.s32.totalorder %s329, %s331
      %p338 = scmp.eq.s32.totalorder %s38, 1
      %p339 = por %p337, %p338
      %p340 = scmp.ne.s32.totalorder %s331, %s332
      %p341 = scmp.eq.s32.totalorder %s38, 0
      %p342 = por %p340, %p341
      %p343 = scmp.ne.s32.totalorder %s331, %s332
      %p344 = scmp.eq.s32.totalorder %s39, 1
      %p345 = por %p343, %p344
      %p347 = scmp.ne.s32.totalorder %s332, %s346
      %p348 = scmp.eq.s32.totalorder %s39, 0
      %p349 = por %p347, %p348
      %s351 = sadd.s32 %s350, 1
      %p354 = scmp.eq.s32.totalorder %s33, 1
      %p355 = scmp.ne.s32.totalorder %s350, %s352
      %p356 = scmp.eq.s32.totalorder %s33, 0
      %p357 = por %p355, %p356
      %p358 = scmp.ne.s32.totalorder %s350, %s352
      %p359 = scmp.eq.s32.totalorder %s38, 1
      %p360 = por %p358, %p359
      %p361 = scmp.ne.s32.totalorder %s352, %s353
      %p362 = scmp.eq.s32.totalorder %s38, 0
      %p363 = por %p361, %p362
      %p364 = scmp.ne.s32.totalorder %s352, %s353
      %p365 = scmp.eq.s32.totalorder %s39, 1
      %p366 = por %p364, %p365
      %p368 = scmp.ne.s32.totalorder %s353, %s367
      %p369 = scmp.eq.s32.totalorder %s39, 0
      %p370 = por %p368, %p369
      %s372 = sadd.s32 %s371, 1
      %p375 = scmp.eq.s32.totalorder %s33, 1
      %p376 = scmp.ne.s32.totalorder %s371, %s373
      %p377 = scmp.eq.s32.totalorder %s33, 0
      %p378 = por %p376, %p377
      %p379 = scmp.ne.s32.totalorder %s371, %s373
      %p380 = scmp.eq.s32.totalorder %s38, 1
      %p381 = por %p379, %p380
      %p382 = scmp.ne.s32.totalorder %s373, %s374
      %p383 = scmp.eq.s32.totalorder %s38, 0
      %p384 = por %p382, %p383
      %p385 = scmp.ne.s32.totalorder %s373, %s374
      %p386 = scmp.eq.s32.totalorder %s39, 1
      %p387 = por %p385, %p386
      %p389 = scmp.ne.s32.totalorder %s374, %s388
      %p390 = scmp.eq.s32.totalorder %s39, 0
      %p391 = por %p389, %p390
      %s393 = sadd.s32 %s392, 1
      %p396 = scmp.eq.s32.totalorder %s33, 1
      %p397 = scmp.ne.s32.totalorder %s392, %s394
      %p398 = scmp.eq.s32.totalorder %s33, 0
      %p399 = por %p397, %p398
      %p400 = scmp.ne.s32.totalorder %s392, %s394
      %p401 = scmp.eq.s32.totalorder %s38, 1
      %p402 = por %p400, %p401
      %p403 = scmp.ne.s32.totalorder %s394, %s395
      %p404 = scmp.eq.s32.totalorder %s38, 0
      %p405 = por %p403, %p404
      %p406 = scmp.ne.s32.totalorder %s394, %s395
      %p407 = scmp.eq.s32.totalorder %s39, 1
      %p408 = por %p406, %p407
      %p410 = scmp.ne.s32.totalorder %s395, %s409
      %p411 = scmp.eq.s32.totalorder %s39, 0
      %p412 = por %p410, %p411
      %s414 = sadd.s32 %s413, 1
      %p417 = scmp.eq.s32.totalorder %s33, 1
      %p418 = scmp.ne.s32.totalorder %s413, %s415
      %p419 = scmp.eq.s32.totalorder %s33, 0
      %p420 = por %p418, %p419
      %p421 = scmp.ne.s32.totalorder %s413, %s415
      %p422 = scmp.eq.s32.totalorder %s38, 1
      %p423 = por %p421, %p422
      %p424 = scmp.ne.s32.totalorder %s415, %s416
      %p425 = scmp.eq.s32.totalorder %s38, 0
      %p426 = por %p424, %p425
      %p427 = scmp.ne.s32.totalorder %s415, %s416
      %p428 = scmp.eq.s32.totalorder %s39, 1
      %p429 = por %p427, %p428
      %p431 = scmp.ne.s32.totalorder %s416, %s430
      %p432 = scmp.eq.s32.totalorder %s39, 0
      %p433 = por %p431, %p432
      %s435 = sadd.s32 %s434, 1
      %p438 = scmp.eq.s32.totalorder %s33, 1
      %p439 = scmp.ne.s32.totalorder %s434, %s436
      %p440 = scmp.eq.s32.totalorder %s33, 0
      %p441 = por %p439, %p440
      %p442 = scmp.ne.s32.totalorder %s434, %s436
      %p443 = scmp.eq.s32.totalorder %s38, 1
      %p444 = por %p442, %p443
      %p445 = scmp.ne.s32.totalorder %s436, %s437
      %p446 = scmp.eq.s32.totalorder %s38, 0
      %p447 = por %p445, %p446
      %p448 = scmp.ne.s32.totalorder %s436, %s437
      %p449 = scmp.eq.s32.totalorder %s39, 1
      %p450 = por %p448, %p449
      %p452 = scmp.ne.s32.totalorder %s437, %s451
      %p453 = scmp.eq.s32.totalorder %s39, 0
      %p454 = por %p452, %p453
      %s456 = sadd.s32 %s455, 1
      %p459 = scmp.eq.s32.totalorder %s33, 1
      %p460 = scmp.ne.s32.totalorder %s455, %s457
      %p461 = scmp.eq.s32.totalorder %s33, 0
      %p462 = por %p460, %p461
      %p463 = scmp.ne.s32.totalorder %s455, %s457
      %p464 = scmp.eq.s32.totalorder %s38, 1
      %p465 = por %p463, %p464
      %p466 = scmp.ne.s32.totalorder %s457, %s458
      %p467 = scmp.eq.s32.totalorder %s38, 0
      %p468 = por %p466, %p467
      %p469 = scmp.ne.s32.totalorder %s457, %s458
      %p470 = scmp.eq.s32.totalorder %s39, 1
      %p471 = por %p469, %p470
      %p473 = scmp.ne.s32.totalorder %s458, %s472
      %p474 = scmp.eq.s32.totalorder %s39, 0
      %p475 = por %p473, %p474
      %s477 = sadd.s32 %s476, 1
      %p480 = scmp.eq.s32.totalorder %s33, 1
      %p481 = scmp.ne.s32.totalorder %s476, %s478
      %p482 = scmp.eq.s32.totalorder %s33, 0
      %p483 = por %p481, %p482
      %p484 = scmp.ne.s32.totalorder %s476, %s478
      %p485 = scmp.eq.s32.totalorder %s38, 1
      %p486 = por %p484, %p485
      %p487 = scmp.ne.s32.totalorder %s478, %s479
      %p488 = scmp.eq.s32.totalorder %s38, 0
      %p489 = por %p487, %p488
      %p490 = scmp.ne.s32.totalorder %s478, %s479
      %p491 = scmp.eq.s32.totalorder %s39, 1
      %p492 = por %p490, %p491
      %p494 = scmp.ne.s32.totalorder %s479, %s493
      %p495 = scmp.eq.s32.totalorder %s39, 0
      %p496 = por %p494, %p495
      %s497 = ssub.s32 %s33, %s40
      %p498 = scmp.eq.s32.totalorder %s497, 0
      %s500 = sadd.s32 %s499, 1
      %s501 = scalar_select %p498, %s499, %s500
      %p504 = pneg %p498
      %p505 = scmp.eq.s32.totalorder %s33, 1
      %p506 = por %p504, %p505
      %p507 = scmp.ne.s32.totalorder %s499, %s502
      %p508 = scmp.eq.s32.totalorder %s33, 0
      %p509 = por %p507, %p508
      %p510 = scmp.ne.s32.totalorder %s499, %s502
      %p511 = scmp.eq.s32.totalorder %s38, 1
      %p512 = por %p510, %p511
      %p513 = scmp.ne.s32.totalorder %s502, %s503
      %p514 = scmp.eq.s32.totalorder %s38, 0
      %p515 = por %p513, %p514
      %p516 = scmp.ne.s32.totalorder %s502, %s503
      %p517 = scmp.eq.s32.totalorder %s39, 1
      %p518 = por %p516, %p517
      %p520 = scmp.ne.s32.totalorder %s503, %s519
      %p521 = scmp.eq.s32.totalorder %s39, 0
      %p522 = por %p520, %p521
      %s523 = ssub.s32 %s33, %s40
      %p524 = scmp.eq.s32.totalorder %s523, 0
      %s526 = sadd.s32 %s525, 1
      %s527 = scalar_select %p524, %s525, %s526
      %p530 = pneg %p524
      %p531 = scmp.eq.s32.totalorder %s33, 1
      %p532 = por %p530, %p531
      %p533 = scmp.ne.s32.totalorder %s525, %s528
      %p534 = scmp.eq.s32.totalorder %s33, 0
      %p535 = por %p533, %p534
      %p536 = scmp.ne.s32.totalorder %s525, %s528
      %p537 = scmp.eq.s32.totalorder %s38, 1
      %p538 = por %p536, %p537
      %p539 = scmp.ne.s32.totalorder %s528, %s529
      %p540 = scmp.eq.s32.totalorder %s38, 0
      %p541 = por %p539, %p540
      %p542 = scmp.ne.s32.totalorder %s528, %s529
      %p543 = scmp.eq.s32.totalorder %s39, 1
      %p544 = por %p542, %p543
      %p546 = scmp.ne.s32.totalorder %s529, %s545
      %p547 = scmp.eq.s32.totalorder %s39, 0
      %p548 = por %p546, %p547
      %s549 = ssub.s32 %s33, %s40
      %p550 = scmp.eq.s32.totalorder %s549, 0
      %s552 = sadd.s32 %s551, 1
      %s553 = scalar_select %p550, %s551, %s552
      %p556 = pneg %p550
      %p557 = scmp.eq.s32.totalorder %s33, 1
      %p558 = por %p556, %p557
      %p559 = scmp.ne.s32.totalorder %s551, %s554
      %p560 = scmp.eq.s32.totalorder %s33, 0
      %p561 = por %p559, %p560
      %p562 = scmp.ne.s32.totalorder %s551, %s554
      %p563 = scmp.eq.s32.totalorder %s38, 1
      %p564 = por %p562, %p563
      %p565 = scmp.ne.s32.totalorder %s554, %s555
      %p566 = scmp.eq.s32.totalorder %s38, 0
      %p567 = por %p565, %p566
      %p568 = scmp.ne.s32.totalorder %s554, %s555
      %p569 = scmp.eq.s32.totalorder %s39, 1
      %p570 = por %p568, %p569
      %p572 = scmp.ne.s32.totalorder %s555, %s571
      %p573 = scmp.eq.s32.totalorder %s39, 0
      %p574 = por %p572, %p573
      %p575 = scmp.le.s32.totalorder 1, %s33
      %p576 = scmp.lt.s32.totalorder %s33, 3
      %p577 = pnand %p575, %p576
      %p578 = pneg %p577
      // Predicated region
      $region9: #{_forward_core.1} parent=5 // pred_check
        _
      $region10: #{_forward_core.1} parent=5 // pred_check_branch
        %580 = sbr.rel (%p577) target = $region12
      $region11: #{_forward_core.1} parent=5 // pred_region
        %s581 = ssub.s32 %s33, 1
        // Predicated region
        $region13: #{_forward_core.1} parent=11 // pred_check
          %p582 = pneg %p132
        $region14: #{_forward_core.1} parent=11 // pred_check_branch
          %584 = sbr.rel (%p582) target = $region16
        $region15: #{_forward_core.1} parent=11 // pred_region
          _
        $region16: #{_forward_core.1} parent=11 // pred_fallthru
          _
        // Predicated region
        $region17: #{_forward_core.1} parent=11 // pred_check
          %p585 = pneg %p153
        $region18: #{_forward_core.1} parent=11 // pred_check_branch
          %587 = sbr.rel (%p585) target = $region20
        $region19: #{_forward_core.1} parent=11 // pred_region
          _
        $region20: #{_forward_core.1} parent=11 // pred_fallthru
          _
        // Predicated region
        $region21: #{_forward_core.1} parent=11 // pred_check
          %p588 = pneg %p174
        $region22: #{_forward_core.1} parent=11 // pred_check_branch
          %590 = sbr.rel (%p588) target = $region24
        $region23: #{_forward_core.1} parent=11 // pred_region
          _
        $region24: #{_forward_core.1} parent=11 // pred_fallthru
          _
        // Predicated region
        $region25: #{_forward_core.1} parent=11 // pred_check
          %p591 = pneg %p195
        $region26: #{_forward_core.1} parent=11 // pred_check_branch
          %593 = sbr.rel (%p591) target = $region28
        $region27: #{_forward_core.1} parent=11 // pred_region
          _
        $region28: #{_forward_core.1} parent=11 // pred_fallthru
          _
        // Predicated region
        $region29: #{_forward_core.1} parent=11 // pred_check
          %p594 = pneg %p216
        $region30: #{_forward_core.1} parent=11 // pred_check_branch
          %596 = sbr.rel (%p594) target = $region32
        $region31: #{_forward_core.1} parent=11 // pred_region
          _
        $region32: #{_forward_core.1} parent=11 // pred_fallthru
          _
        // Predicated region
        $region33: #{_forward_core.1} parent=11 // pred_check
          %p597 = pneg %p237
        $region34: #{_forward_core.1} parent=11 // pred_check_branch
          %599 = sbr.rel (%p597) target = $region36
        $region35: #{_forward_core.1} parent=11 // pred_region
          _
        $region36: #{_forward_core.1} parent=11 // pred_fallthru
          _
        // Predicated region
        $region37: #{_forward_core.1} parent=11 // pred_check
          %p600 = pneg %p258
        $region38: #{_forward_core.1} parent=11 // pred_check_branch
          %602 = sbr.rel (%p600) target = $region40
        $region39: #{_forward_core.1} parent=11 // pred_region
          _
        $region40: #{_forward_core.1} parent=11 // pred_fallthru
          _
        // Predicated region
        $region41: #{_forward_core.1} parent=11 // pred_check
          %p603 = pneg %p279
        $region42: #{_forward_core.1} parent=11 // pred_check_branch
          %605 = sbr.rel (%p603) target = $region44
        $region43: #{_forward_core.1} parent=11 // pred_region
          _
        $region44: #{_forward_core.1} parent=11 // pred_fallthru
          _
        // Predicated region
        $region45: #{_forward_core.1} parent=11 // pred_check
          %p606 = pneg %p300
        $region46: #{_forward_core.1} parent=11 // pred_check_branch
          %608 = sbr.rel (%p606) target = $region48
        $region47: #{_forward_core.1} parent=11 // pred_region
          _
        $region48: #{_forward_core.1} parent=11 // pred_fallthru
          _
        // Predicated region
        $region49: #{_forward_core.1} parent=11 // pred_check
          %p609 = pneg %p321
        $region50: #{_forward_core.1} parent=11 // pred_check_branch
          %611 = sbr.rel (%p609) target = $region52
        $region51: #{_forward_core.1} parent=11 // pred_region
          _
        $region52: #{_forward_core.1} parent=11 // pred_fallthru
          _
        // Predicated region
        $region53: #{_forward_core.1} parent=11 // pred_check
          %p612 = pneg %p342
        $region54: #{_forward_core.1} parent=11 // pred_check_branch
          %614 = sbr.rel (%p612) target = $region56
        $region55: #{_forward_core.1} parent=11 // pred_region
          _
        $region56: #{_forward_core.1} parent=11 // pred_fallthru
          _
        // Predicated region
        $region57: #{_forward_core.1} parent=11 // pred_check
          %p615 = pneg %p363
        $region58: #{_forward_core.1} parent=11 // pred_check_branch
          %617 = sbr.rel (%p615) target = $region60
        $region59: #{_forward_core.1} parent=11 // pred_region
          _
        $region60: #{_forward_core.1} parent=11 // pred_fallthru
          _
        // Predicated region
        $region61: #{_forward_core.1} parent=11 // pred_check
          %p618 = pneg %p384
        $region62: #{_forward_core.1} parent=11 // pred_check_branch
          %620 = sbr.rel (%p618) target = $region64
        $region63: #{_forward_core.1} parent=11 // pred_region
          _
        $region64: #{_forward_core.1} parent=11 // pred_fallthru
          _
        // Predicated region
        $region65: #{_forward_core.1} parent=11 // pred_check
          %p621 = pneg %p405
        $region66: #{_forward_core.1} parent=11 // pred_check_branch
          %623 = sbr.rel (%p621) target = $region68
        $region67: #{_forward_core.1} parent=11 // pred_region
          _
        $region68: #{_forward_core.1} parent=11 // pred_fallthru
          _
        // Predicated region
        $region69: #{_forward_core.1} parent=11 // pred_check
          %p624 = pneg %p426
        $region70: #{_forward_core.1} parent=11 // pred_check_branch
          %626 = sbr.rel (%p624) target = $region72
        $region71: #{_forward_core.1} parent=11 // pred_region
          _
        $region72: #{_forward_core.1} parent=11 // pred_fallthru
          _
        // Predicated region
        $region73: #{_forward_core.1} parent=11 // pred_check
          %p627 = pneg %p447
        $region74: #{_forward_core.1} parent=11 // pred_check_branch
          %629 = sbr.rel (%p627) target = $region76
        $region75: #{_forward_core.1} parent=11 // pred_region
          _
        $region76: #{_forward_core.1} parent=11 // pred_fallthru
          _
        // Predicated region
        $region77: #{_forward_core.1} parent=11 // pred_check
          %p630 = pneg %p468
        $region78: #{_forward_core.1} parent=11 // pred_check_branch
          %632 = sbr.rel (%p630) target = $region80
        $region79: #{_forward_core.1} parent=11 // pred_region
          _
        $region80: #{_forward_core.1} parent=11 // pred_fallthru
          _
        // Predicated region
        $region81: #{_forward_core.1} parent=11 // pred_check
          %p633 = pneg %p489
        $region82: #{_forward_core.1} parent=11 // pred_check_branch
          %635 = sbr.rel (%p633) target = $region84
        $region83: #{_forward_core.1} parent=11 // pred_region
          _
        $region84: #{_forward_core.1} parent=11 // pred_fallthru
          _
      $region12: #{_forward_core.1} parent=5 // pred_fallthru
        _
      %p636 = scmp.lt.s32.totalorder %s33, 2
      // Predicated region
      $region85: #{_forward_core.1} parent=5 // pred_check
        %p637 = pneg %p636
      $region86: #{_forward_core.1} parent=5 // pred_check_branch
        %639 = sbr.rel (%p637) target = $region88
      $region87: #{_forward_core.1} parent=5 // pred_region
        // Predicated region
        $region89: #{_forward_core.1} parent=87 // pred_check
          %p640 = pneg %p53
        $region90: #{_forward_core.1} parent=87 // pred_check_branch
          %642 = sbr.rel (%p640) target = $region92
        $region91: #{_forward_core.1} parent=87 // pred_region
          %s643 = smul.u32 2, %s33
          %p644 = scmp.lt.s32.totalorder %s643, 3
          %s645 = scalar_select %p644, %s643, 3
          %s646 = smul.addr %s645, 8
          %s647 = scalar_lea.vmem %s0, %s646
          %s648 = smul.u32 2, %s33
        $region92: #{_forward_core.1} parent=87 // pred_fallthru
          _
        // Predicated region
        $region93: #{_forward_core.1} parent=87 // pred_check
          %p649 = pneg %p79
        $region94: #{_forward_core.1} parent=87 // pred_check_branch
          %651 = sbr.rel (%p649) target = $region96
        $region95: #{_forward_core.1} parent=87 // pred_region
          %s652 = smul.u32 2, %s33
          %p653 = scmp.lt.s32.totalorder %s652, 3
          %s654 = scalar_select %p653, %s652, 3
          %s655 = smul.addr %s654, 4
          %s656 = scalar_lea.vmem %s1, %s655
          %s657 = smul.u32 2, %s33
        $region96: #{_forward_core.1} parent=87 // pred_fallthru
          _
        // Predicated region
        $region97: #{_forward_core.1} parent=87 // pred_check
          %p658 = pneg %p105
        $region98: #{_forward_core.1} parent=87 // pred_check_branch
          %660 = sbr.rel (%p658) target = $region100
        $region99: #{_forward_core.1} parent=87 // pred_region
          %s661 = smul.u32 2, %s33
          %p662 = scmp.lt.s32.totalorder %s661, 3
          %s663 = scalar_select %p662, %s661, 3
          %s664 = smul.addr %s663, 8
          %s665 = scalar_lea.vmem %s2, %s664
          %s666 = smul.u32 2, %s33
        $region100: #{_forward_core.1} parent=87 // pred_fallthru
          _
      $region88: #{_forward_core.1} parent=5 // pred_fallthru
        _
      %p667 = scmp.le.s32.totalorder 1, %s33
      %p668 = scmp.lt.s32.totalorder %s33, 3
      %p669 = pnand %p667, %p668
      %p670 = pneg %p669
      // Predicated region
      $region101: #{_forward_core.1} parent=5 // pred_check
        _
      $region102: #{_forward_core.1} parent=5 // pred_check_branch
        %672 = sbr.rel (%p669) target = $region104
      $region103: #{_forward_core.1} parent=5 // pred_region
        %s673 = ssub.s32 %s33, 1
        %s674 = smul.u32 2, %s38
        %p675 = scmp.lt.s32.totalorder %s674, 3
        %s676 = scalar_select %p675, %s674, 3
        %s677 = smul.addr %s676, 8
        %s678 = scalar_lea.vmem %s0, %s677
        %p679 = pneg %p59
        %p680 = pneg %p56
        %s681 = smul.u32 2, %s38
        %p682 = scmp.lt.s32.totalorder %s681, 3
        %s683 = scalar_select %p682, %s681, 3
        %s684 = smul.addr %s683, 4
        %s685 = scalar_lea.vmem %s1, %s684
        %p686 = pneg %p85
        %p687 = pneg %p82
        %s688 = smul.u32 2, %s38
        %p689 = scmp.lt.s32.totalorder %s688, 3
        %s690 = scalar_select %p689, %s688, 3
        %s691 = smul.addr %s690, 8
        %s692 = scalar_lea.vmem %s2, %s691
        %p693 = pneg %p111
        %p694 = pneg %p108
        %p695 = pneg %p132
        %p696 = pneg %p129
        %p697 = pneg %p153
        %p698 = pneg %p150
        %p699 = pneg %p174
        %p700 = pneg %p171
        %p701 = pneg %p195
        %p702 = pneg %p192
        %p703 = pneg %p216
        %p704 = pneg %p213
        %p705 = pneg %p237
        %p706 = pneg %p234
        %p707 = pneg %p258
        %p708 = pneg %p255
        %p709 = pneg %p279
        %p710 = pneg %p276
        %p711 = pneg %p300
        %p712 = pneg %p297
        %p713 = pneg %p321
        %p714 = pneg %p318
        %p715 = pneg %p342
        %p716 = pneg %p339
        %p717 = pneg %p363
        %p718 = pneg %p360
        %p719 = pneg %p384
        %p720 = pneg %p381
        %p721 = pneg %p405
        %p722 = pneg %p402
        %p723 = pneg %p426
        %p724 = pneg %p423
        %p725 = pneg %p447
        %p726 = pneg %p444
        %p727 = pneg %p468
        %p728 = pneg %p465
        %p729 = pneg %p489
        %p730 = pneg %p486
        %p731 = pneg %p515
        %p732 = pneg %p512
        %s733 = smul.u32 2, %s38
        %p734 = scmp.lt.s32.totalorder %s733, 3
        %s735 = scalar_select %p734, %s733, 3
        %s736 = scalar_lea.vmem %s21, %s735
        %p737 = pneg %p541
        %p738 = pneg %p538
        %s739 = smul.u32 2, %s38
        %p740 = scmp.lt.s32.totalorder %s739, 3
        %s741 = scalar_select %p740, %s739, 3
        %s742 = smul.addr %s741, 8
        %s743 = scalar_lea.vmem %s22, %s742
        %p744 = pneg %p567
        %p745 = pneg %p564
        %s746 = sand.u32 %s554, 1
        %s747 = scalar_lea.sflag [#allocation3], %s746
        %s748 = sand.u32 %s554, 1
        %s749 = smul.addr %s748, 2
        %s750 = scalar_lea.vmem [#allocation2], %s749
        %s751 = smul.u32 2, %s38
        %p752 = scmp.lt.s32.totalorder %s751, 3
        %s753 = scalar_select %p752, %s751, 3
        %s754 = smul.addr %s753, 8
        %s755 = scalar_lea.vmem %s0, %s754
        %s756 = smul.u32 2, %s38
        %s757 = smul.u32 2, %s38
        %p758 = scmp.lt.s32.totalorder %s757, 3
        %s759 = scalar_select %p758, %s757, 3
        %s760 = smul.addr %s759, 4
        %s761 = scalar_lea.vmem %s1, %s760
        %s762 = smul.u32 2, %s38
        %s763 = smul.u32 2, %s38
        %p764 = scmp.lt.s32.totalorder %s763, 3
        %s765 = scalar_select %p764, %s763, 3
        %s766 = smul.addr %s765, 8
        %s767 = scalar_lea.vmem %s2, %s766
        %s768 = smul.u32 2, %s38
        %s769 = smul.u32 2, %s38
        %p770 = scmp.lt.s32.totalorder %s769, 3
        %s771 = scalar_select %p770, %s769, 3
        %s772 = scalar_lea.vmem %s21, %s771
        %s773 = smul.u32 2, %s38
        %s774 = smul.u32 2, %s38
        %p775 = scmp.lt.s32.totalorder %s774, 3
        %s776 = scalar_select %p775, %s774, 3
        %s777 = smul.addr %s776, 8
        %s778 = scalar_lea.vmem %s22, %s777
        %s779 = smul.u32 2, %s38
        %s780 = smul.u32 2, %s38
        %v782 = vld [vmem:[%s755] sm:$0xff]
        %v783 = vld [vmem:[%s755 + $0x8] sm:$0xff]
        %v784 = vld [vmem:[%s3] sm:$0xf]
        %v785 = vld [vmem:[%s3 + $0x4] sm:$0xf]
        %v786 = vld [vmem:[%s3 + $0x8] sm:$0xf]
        %v787 = vld [vmem:[%s3 + $0xc] sm:$0xf]
        %v788 = vld [vmem:[%s5] sm:$0xf]
        %v789 = vld [vmem:[%s5 + $0x4] sm:$0xf]
        %v790 = vld [vmem:[%s5 + $0x8] sm:$0xf]
        %v791 = vld [vmem:[%s5 + $0xc] sm:$0xf]
        %v792 = vpack.c.bf16 %v783, %v782
        %v793 = vld [vmem:[%s4] sm:$0x1]
        %v795 = vperm.slane %v793, 0
        %v801 = vunpack.c.l.b16 %v784
        %v802 = vunpack.c.l.b16 %v785
        %v803 = vunpack.c.l.b16 %v786
        %v804 = vunpack.c.l.b16 %v787
        %v805 = vpack.c.b16 %v802, %v801
        %v806 = vpack.c.b16 %v804, %v803
        %vm809 = vcmask 261120
        %v811 = vsel %vm809, %v792, 0
        %813 = vmatpush.bf16.msra.mxu0 0
        %814 = vmatpush.bf16.msra.mxu0 0
        %815 = vmatpush.bf16.msra.mxu0 0
        %816 = vmatpush.bf16.msra.mxu0 0
        %817 = vmatpush.bf16.msra.mxu0 0
        %818 = vmatpush.bf16.msra.mxu0 0
        %819 = vmatpush.bf16.msra.mxu0 %v806
        %820 = vmatpush.bf16.msra.mxu0 %v805
        %821 = vmatmul.bf16.gmra.mxu0 %v811
        %v822 = vpop.f32.mrf.mxu0
        %v823 = vadd.f32 %v795, %v822
        %v824 = vpop.f32.mrf.mxu0
        %v825 = vadd.f32 %v795, %v824
        %826 = vdwg.mxu0
        %v827 = vld [vmem:[%s6] sm:$0x1]
        %v828 = vpack.c.bf16 %v823, %v823
        %v829 = vpack.c.bf16 %v825, %v825
        %v831 = vunpack.c.l.b16 %v828
        %v832 = vpack.c.b16 %v831, %v831
        %833 = vrot.lane.b32.xlu0 %v832, 96
        %v834 = vpop.permute.xlu0 %833
        %vm835 = vcmask 64512
        %v837 = vsel %vm835, %v828, 0
        %v840 = vsel %vm835, %v834, 0
        %842 = vmatpush.bf16.xpose.msra.mxu0 0
        %843 = vmatpush.bf16.xpose.msra.mxu0 0
        %844 = vmatpush.bf16.xpose.msra.mxu0 0
        %845 = vmatpush.bf16.xpose.msra.mxu0 0
        %846 = vmatpush.bf16.xpose.msra.mxu0 0
        %847 = vmatpush.bf16.xpose.msra.mxu0 0
        %848 = vmatpush.bf16.xpose.msra.mxu0 0
        %849 = vmatpush.bf16.xpose.msra.mxu0 %v840
        %850 = vmatmul.bf16.gmra.mxu0 %v837
        %v851 = vpop.f32.mrf.mxu0
        %v852 = vadd.f32 0.0, %v851
        %v853 = vpop.f32.mrf.mxu0
        %854 = vdwg.mxu0
        %v856 = vunpack.c.l.b16 %v829
        %v857 = vpack.c.b16 %v856, %v856
        %858 = vrot.lane.b32.xlu0 %v857, 96
        %v859 = vpop.permute.xlu0 %858
        %v861 = vsel %vm835, %v829, 0
        %v864 = vsel %vm835, %v859, 0
        %866 = vmatpush.bf16.xpose.msra.mxu0 0
        %867 = vmatpush.bf16.xpose.msra.mxu0 0
        %868 = vmatpush.bf16.xpose.msra.mxu0 0
        %869 = vmatpush.bf16.xpose.msra.mxu0 0
        %870 = vmatpush.bf16.xpose.msra.mxu0 0
        %871 = vmatpush.bf16.xpose.msra.mxu0 0
        %872 = vmatpush.bf16.xpose.msra.mxu0 0
        %873 = vmatpush.bf16.xpose.msra.mxu0 %v864
        %874 = vmatmul.bf16.gmra.mxu0 %v861
        %v875 = vpop.f32.mrf.mxu0
        %v876 = vadd.f32 0.0, %v875
        %v877 = vpop.f32.mrf.mxu0
        %878 = vdwg.mxu0
        %v879 = vmul.f32 %v852, 0.35355338
        %v880 = vmul.f32 %v876, 0.35355338
        %v881 = vsel %vm835, %v879, -inf
        %882 = vmax.xlane.f32.xlu0 %v881
        %v883 = vpop.xlane.xlu0 %882
        %v884 = vsel %vm835, %v880, -inf
        %885 = vmax.xlane.f32.xlu0 %v884
        %v886 = vpop.xlane.xlu0 %885
        %v887 = vsub.f32 %v879, %v883
        %v888 = vsub.f32 %v880, %v886
        %v889 = vmul.f32 %v887, 1.442695
        %v890 = vpow.pop %v889
        %v891 = vmul.f32 %v888, 1.442695
        %v892 = vpow.pop %v891
        %v893 = vsel %vm835, %v890, 0.0
        %894 = vadd.xlane.f32.xlu0 %v893
        %v895 = vpop.xlane.xlu0 %894
        %v896 = vsel %vm835, %v892, 0.0
        %897 = vadd.xlane.f32.xlu0 %v896
        %v898 = vpop.xlane.xlu0 %897
        %v899 = vrcp.pop %v895
        %v900 = vmul.f32 %v895, %v899
        %v901 = vsub.f32 1.0, %v900
        %v902 = vmul.f32 %v899, %v901
        %v903 = vadd.f32 %v899, %v902
        %vm904 = vweird.f32 %v895
        %vm905 = vweird.f32 %v899
        %vm906 = vmor %vm904, %vm905
        %v907 = vsel %vm906, %v899, %v903
        %v908 = vand.u32 2147483647, %v895
        %vm909 = vcmp.eq.f32.partialorder %v908, 8.507059e+37
        %v910 = vand.u32 %v895, 2147483648
        %v911 = vor.u32 1.1754944e-38, %v910
        %v912 = vsel %vm909, %v911, %v907
        %v913 = vmul.f32 %v890, %v912
        %v914 = vrcp.pop %v898
        %v915 = vmul.f32 %v898, %v914
        %v916 = vsub.f32 1.0, %v915
        %v917 = vmul.f32 %v914, %v916
        %v918 = vadd.f32 %v914, %v917
        %vm919 = vweird.f32 %v898
        %vm920 = vweird.f32 %v914
        %vm921 = vmor %vm919, %vm920
        %v922 = vsel %vm921, %v914, %v918
        %v923 = vand.u32 2147483647, %v898
        %vm924 = vcmp.eq.f32.partialorder %v923, 8.507059e+37
        %v925 = vand.u32 %v898, 2147483648
        %v926 = vor.u32 1.1754944e-38, %v925
        %v927 = vsel %vm924, %v926, %v922
        %v928 = vmul.f32 %v892, %v927
        %v929 = vpack.c.bf16 %v913, %v913
        %v930 = vpack.c.bf16 %v928, %v928
        %931 = vrot.lane.b32.xlu0 %v832, 64
        %v932 = vpop.permute.xlu0 %931
        %v934 = vsel %vm835, %v929, 0
        %vm936 = vcmask 1043456
        %v938 = vsel %vm936, %v932, 0
        %940 = vmatpush.bf16.msra.mxu0 0
        %941 = vmatpush.bf16.msra.mxu0 0
        %942 = vmatpush.bf16.msra.mxu0 0
        %943 = vmatpush.bf16.msra.mxu0 0
        %944 = vmatpush.bf16.msra.mxu0 0
        %945 = vmatpush.bf16.msra.mxu0 0
        %946 = vmatpush.bf16.msra.mxu0 0
        %947 = vmatpush.bf16.msra.mxu0 %v938
        %948 = vmatmul.bf16.gmra.mxu0 %v934
        %v949 = vpop.f32.mrf.mxu0
        %v950 = vadd.f32 0.0, %v949
        %v951 = vpop.f32.mrf.mxu0
        %952 = vdwg.mxu0
        %953 = vrot.lane.b32.xlu0 %v857, 64
        %v954 = vpop.permute.xlu0 %953
        %v956 = vsel %vm835, %v930, 0
        %v959 = vsel %vm936, %v954, 0
        %961 = vmatpush.bf16.msra.mxu0 0
        %962 = vmatpush.bf16.msra.mxu0 0
        %963 = vmatpush.bf16.msra.mxu0 0
        %964 = vmatpush.bf16.msra.mxu0 0
        %965 = vmatpush.bf16.msra.mxu0 0
        %966 = vmatpush.bf16.msra.mxu0 0
        %967 = vmatpush.bf16.msra.mxu0 0
        %968 = vmatpush.bf16.msra.mxu0 %v959
        %969 = vmatmul.bf16.gmra.mxu0 %v956
        %v970 = vpop.f32.mrf.mxu0
        %v971 = vadd.f32 0.0, %v970
        %v972 = vpop.f32.mrf.mxu0
        %973 = vdwg.mxu0
        %v974 = vpack.c.bf16 %v971, %v950
        %v976 = vsel %vm835, %v974, 0
        %v979 = vsel %vm936, %v788, 0
        %981 = vmatpush.bf16.msra.mxu0 0
        %982 = vmatpush.bf16.msra.mxu0 0
        %983 = vmatpush.bf16.msra.mxu0 0
        %984 = vmatpush.bf16.msra.mxu0 0
        %985 = vmatpush.bf16.msra.mxu0 0
        %986 = vmatpush.bf16.msra.mxu0 0
        %987 = vmatpush.bf16.msra.mxu0 0
        %988 = vmatpush.bf16.msra.mxu0 %v979
        %989 = vmatmul.bf16.gmra.mxu0 %v976
        %v990 = vpop.f32.mrf.mxu0
        %v991 = vadd.f32 0.0, %v990
        %v992 = vpop.f32.mrf.mxu0
        %v993 = vadd.f32 0.0, %v992
        %994 = vdwg.mxu0
        %v996 = vperm.slane %v827, 0
        %v998 = vadd.f32 %v996, %v991
        %v999 = vadd.f32 %v996, %v993
        %1000 = vrot.lane.b32.xlu0 %v832, 120
        %v1001 = vpop.permute.xlu0 %1000
        %1002 = vrot.lane.b32.xlu0 %v832, 88
        %v1003 = vpop.permute.xlu0 %1002
        %v1005 = vsel %vm835, %v1001, 0
        %v1008 = vsel %vm835, %v1003, 0
        %1010 = vmatpush.bf16.xpose.msra.mxu0 0
        %1011 = vmatpush.bf16.xpose.msra.mxu0 0
        %1012 = vmatpush.bf16.xpose.msra.mxu0 0
        %1013 = vmatpush.bf16.xpose.msra.mxu0 0
        %1014 = vmatpush.bf16.xpose.msra.mxu0 0
        %1015 = vmatpush.bf16.xpose.msra.mxu0 0
        %1016 = vmatpush.bf16.xpose.msra.mxu0 0
        %1017 = vmatpush.bf16.xpose.msra.mxu0 %v1008
        %1018 = vmatmul.bf16.gmra.mxu0 %v1005
        %v1019 = vpop.f32.mrf.mxu0
        %v1020 = vadd.f32 0.0, %v1019
        %v1021 = vpop.f32.mrf.mxu0
        %1022 = vdwg.mxu0
        %1023 = vrot.lane.b32.xlu0 %v857, 120
        %v1024 = vpop.permute.xlu0 %1023
        %1025 = vrot.lane.b32.xlu0 %v857, 88
        %v1026 = vpop.permute.xlu0 %1025
        %v1028 = vsel %vm835, %v1024, 0
        %v1031 = vsel %vm835, %v1026, 0
        %1033 = vmatpush.bf16.xpose.msra.mxu0 0
        %1034 = vmatpush.bf16.xpose.msra.mxu0 0
        %1035 = vmatpush.bf16.xpose.msra.mxu0 0
        %1036 = vmatpush.bf16.xpose.msra.mxu0 0
        %1037 = vmatpush.bf16.xpose.msra.mxu0 0
        %1038 = vmatpush.bf16.xpose.msra.mxu0 0
        %1039 = vmatpush.bf16.xpose.msra.mxu0 0
        %1040 = vmatpush.bf16.xpose.msra.mxu0 %v1031
        %1041 = vmatmul.bf16.gmra.mxu0 %v1028
        %v1042 = vpop.f32.mrf.mxu0
        %v1043 = vadd.f32 0.0, %v1042
        %v1044 = vpop.f32.mrf.mxu0
        %1045 = vdwg.mxu0
        %v1046 = vmul.f32 %v1020, 0.35355338
        %v1047 = vmul.f32 %v1043, 0.35355338
        %v1048 = vsel %vm835, %v1046, -inf
        %1049 = vmax.xlane.f32.xlu0 %v1048
        %v1050 = vpop.xlane.xlu0 %1049
        %v1051 = vsel %vm835, %v1047, -inf
        %1052 = vmax.xlane.f32.xlu0 %v1051
        %v1053 = vpop.xlane.xlu0 %1052
        %v1054 = vsub.f32 %v1046, %v1050
        %v1055 = vsub.f32 %v1047, %v1053
        %v1056 = vmul.f32 %v1054, 1.442695
        %v1057 = vpow.pop %v1056
        %v1058 = vmul.f32 %v1055, 1.442695
        %v1059 = vpow.pop %v1058
        %v1060 = vsel %vm835, %v1057, 0.0
        %1061 = vadd.xlane.f32.xlu0 %v1060
        %v1062 = vpop.xlane.xlu0 %1061
        %v1063 = vsel %vm835, %v1059, 0.0
        %1064 = vadd.xlane.f32.xlu0 %v1063
        %v1065 = vpop.xlane.xlu0 %1064
        %v1066 = vrcp.pop %v1062
        %v1067 = vmul.f32 %v1062, %v1066
        %v1068 = vsub.f32 1.0, %v1067
        %v1069 = vmul.f32 %v1066, %v1068
        %v1070 = vadd.f32 %v1066, %v1069
        %vm1071 = vweird.f32 %v1062
        %vm1072 = vweird.f32 %v1066
        %vm1073 = vmor %vm1071, %vm1072
        %v1074 = vsel %vm1073, %v1066, %v1070
        %v1075 = vand.u32 2147483647, %v1062
        %vm1076 = vcmp.eq.f32.partialorder %v1075, 8.507059e+37
        %v1077 = vand.u32 %v1062, 2147483648
        %v1078 = vor.u32 1.1754944e-38, %v1077
        %v1079 = vsel %vm1076, %v1078, %v1074
        %v1080 = vmul.f32 %v1057, %v1079
        %v1081 = vrcp.pop %v1065
        %v1082 = vmul.f32 %v1065, %v1081
        %v1083 = vsub.f32 1.0, %v1082
        %v1084 = vmul.f32 %v1081, %v1083
        %v1085 = vadd.f32 %v1081, %v1084
        %vm1086 = vweird.f32 %v1065
        %vm1087 = vweird.f32 %v1081
        %vm1088 = vmor %vm1086, %vm1087
        %v1089 = vsel %vm1088, %v1081, %v1085
        %v1090 = vand.u32 2147483647, %v1065
        %vm1091 = vcmp.eq.f32.partialorder %v1090, 8.507059e+37
        %v1092 = vand.u32 %v1065, 2147483648
        %v1093 = vor.u32 1.1754944e-38, %v1092
        %v1094 = vsel %vm1091, %v1093, %v1089
        %v1095 = vmul.f32 %v1059, %v1094
        %v1096 = vpack.c.bf16 %v1080, %v1080
        %v1097 = vpack.c.bf16 %v1095, %v1095
        %1098 = vrot.lane.b32.xlu0 %v832, 56
        %v1099 = vpop.permute.xlu0 %1098
        %v1101 = vsel %vm835, %v1096, 0
        %v1104 = vsel %vm936, %v1099, 0
        %1106 = vmatpush.bf16.msra.mxu0 0
        %1107 = vmatpush.bf16.msra.mxu0 0
        %1108 = vmatpush.bf16.msra.mxu0 0
        %1109 = vmatpush.bf16.msra.mxu0 0
        %1110 = vmatpush.bf16.msra.mxu0 0
        %1111 = vmatpush.bf16.msra.mxu0 0
        %1112 = vmatpush.bf16.msra.mxu0 0
        %1113 = vmatpush.bf16.msra.mxu0 %v1104
        %1114 = vmatmul.bf16.gmra.mxu0 %v1101
        %v1115 = vpop.f32.mrf.mxu0
        %v1116 = vadd.f32 0.0, %v1115
        %v1117 = vpop.f32.mrf.mxu0
        %1118 = vdwg.mxu0
        %1119 = vrot.lane.b32.xlu0 %v857, 56
        %v1120 = vpop.permute.xlu0 %1119
        %v1122 = vsel %vm835, %v1097, 0
        %v1125 = vsel %vm936, %v1120, 0
        %1127 = vmatpush.bf16.msra.mxu0 0
        %1128 = vmatpush.bf16.msra.mxu0 0
        %1129 = vmatpush.bf16.msra.mxu0 0
        %1130 = vmatpush.bf16.msra.mxu0 0
        %1131 = vmatpush.bf16.msra.mxu0 0
        %1132 = vmatpush.bf16.msra.mxu0 0
        %1133 = vmatpush.bf16.msra.mxu0 0
        %1134 = vmatpush.bf16.msra.mxu0 %v1125
        %1135 = vmatmul.bf16.gmra.mxu0 %v1122
        %v1136 = vpop.f32.mrf.mxu0
        %v1137 = vadd.f32 0.0, %v1136
        %v1138 = vpop.f32.mrf.mxu0
        %1139 = vdwg.mxu0
        %v1140 = vpack.c.bf16 %v1137, %v1116
        %v1142 = vsel %vm835, %v1140, 0
        %v1145 = vsel %vm936, %v789, 0
        %1147 = vmatpush.bf16.msra.mxu0 0
        %1148 = vmatpush.bf16.msra.mxu0 0
        %1149 = vmatpush.bf16.msra.mxu0 0
        %1150 = vmatpush.bf16.msra.mxu0 0
        %1151 = vmatpush.bf16.msra.mxu0 0
        %1152 = vmatpush.bf16.msra.mxu0 0
        %1153 = vmatpush.bf16.msra.mxu0 0
        %1154 = vmatpush.bf16.msra.mxu0 %v1145
        %1155 = vmatmul.bf16.gmra.mxu0 %v1142
        %v1156 = vpop.f32.mrf.mxu0
        %v1157 = vadd.f32 0.0, %v1156
        %v1158 = vpop.f32.mrf.mxu0
        %v1159 = vadd.f32 0.0, %v1158
        %1160 = vdwg.mxu0
        %v1161 = vadd.f32 %v998, %v1157
        %v1162 = vadd.f32 %v999, %v1159
        %1163 = vrot.lane.b32.xlu0 %v832, 112
        %v1164 = vpop.permute.xlu0 %1163
        %1165 = vrot.lane.b32.xlu0 %v832, 80
        %v1166 = vpop.permute.xlu0 %1165
        %v1168 = vsel %vm835, %v1164, 0
        %v1171 = vsel %vm835, %v1166, 0
        %1173 = vmatpush.bf16.xpose.msra.mxu0 0
        %1174 = vmatpush.bf16.xpose.msra.mxu0 0
        %1175 = vmatpush.bf16.xpose.msra.mxu0 0
        %1176 = vmatpush.bf16.xpose.msra.mxu0 0
        %1177 = vmatpush.bf16.xpose.msra.mxu0 0
        %1178 = vmatpush.bf16.xpose.msra.mxu0 0
        %1179 = vmatpush.bf16.xpose.msra.mxu0 0
        %1180 = vmatpush.bf16.xpose.msra.mxu0 %v1171
        %1181 = vmatmul.bf16.gmra.mxu0 %v1168
        %v1182 = vpop.f32.mrf.mxu0
        %v1183 = vadd.f32 0.0, %v1182
        %v1184 = vpop.f32.mrf.mxu0
        %1185 = vdwg.mxu0
        %1186 = vrot.lane.b32.xlu0 %v857, 112
        %v1187 = vpop.permute.xlu0 %1186
        %1188 = vrot.lane.b32.xlu0 %v857, 80
        %v1189 = vpop.permute.xlu0 %1188
        %v1191 = vsel %vm835, %v1187, 0
        %v1194 = vsel %vm835, %v1189, 0
        %1196 = vmatpush.bf16.xpose.msra.mxu0 0
        %1197 = vmatpush.bf16.xpose.msra.mxu0 0
        %1198 = vmatpush.bf16.xpose.msra.mxu0 0
        %1199 = vmatpush.bf16.xpose.msra.mxu0 0
        %1200 = vmatpush.bf16.xpose.msra.mxu0 0
        %1201 = vmatpush.bf16.xpose.msra.mxu0 0
        %1202 = vmatpush.bf16.xpose.msra.mxu0 0
        %1203 = vmatpush.bf16.xpose.msra.mxu0 %v1194
        %1204 = vmatmul.bf16.gmra.mxu0 %v1191
        %v1205 = vpop.f32.mrf.mxu0
        %v1206 = vadd.f32 0.0, %v1205
        %v1207 = vpop.f32.mrf.mxu0
        %1208 = vdwg.mxu0
        %v1209 = vmul.f32 %v1183, 0.35355338
        %v1210 = vmul.f32 %v1206, 0.35355338
        %v1211 = vsel %vm835, %v1209, -inf
        %1212 = vmax.xlane.f32.xlu0 %v1211
        %v1213 = vpop.xlane.xlu0 %1212
        %v1214 = vsel %vm835, %v1210, -inf
        %1215 = vmax.xlane.f32.xlu0 %v1214
        %v1216 = vpop.xlane.xlu0 %1215
        %v1217 = vsub.f32 %v1209, %v1213
        %v1218 = vsub.f32 %v1210, %v1216
        %v1219 = vmul.f32 %v1217, 1.442695
        %v1220 = vpow.pop %v1219
        %v1221 = vmul.f32 %v1218, 1.442695
        %v1222 = vpow.pop %v1221
        %v1223 = vsel %vm835, %v1220, 0.0
        %1224 = vadd.xlane.f32.xlu0 %v1223
        %v1225 = vpop.xlane.xlu0 %1224
        %v1226 = vsel %vm835, %v1222, 0.0
        %1227 = vadd.xlane.f32.xlu0 %v1226
        %v1228 = vpop.xlane.xlu0 %1227
        %v1229 = vrcp.pop %v1225
        %v1230 = vmul.f32 %v1225, %v1229
        %v1231 = vsub.f32 1.0, %v1230
        %v1232 = vmul.f32 %v1229, %v1231
        %v1233 = vadd.f32 %v1229, %v1232
        %vm1234 = vweird.f32 %v1225
        %vm1235 = vweird.f32 %v1229
        %vm1236 = vmor %vm1234, %vm1235
        %v1237 = vsel %vm1236, %v1229, %v1233
        %v1238 = vand.u32 2147483647, %v1225
        %vm1239 = vcmp.eq.f32.partialorder %v1238, 8.507059e+37
        %v1240 = vand.u32 %v1225, 2147483648
        %v1241 = vor.u32 1.1754944e-38, %v1240
        %v1242 = vsel %vm1239, %v1241, %v1237
        %v1243 = vmul.f32 %v1220, %v1242
        %v1244 = vrcp.pop %v1228
        %v1245 = vmul.f32 %v1228, %v1244
        %v1246 = vsub.f32 1.0, %v1245
        %v1247 = vmul.f32 %v1244, %v1246
        %v1248 = vadd.f32 %v1244, %v1247
        %vm1249 = vweird.f32 %v1228
        %vm1250 = vweird.f32 %v1244
        %vm1251 = vmor %vm1249, %vm1250
        %v1252 = vsel %vm1251, %v1244, %v1248
        %v1253 = vand.u32 2147483647, %v1228
        %vm1254 = vcmp.eq.f32.partialorder %v1253, 8.507059e+37
        %v1255 = vand.u32 %v1228, 2147483648
        %v1256 = vor.u32 1.1754944e-38, %v1255
        %v1257 = vsel %vm1254, %v1256, %v1252
        %v1258 = vmul.f32 %v1222, %v1257
        %v1259 = vpack.c.bf16 %v1243, %v1243
        %v1260 = vpack.c.bf16 %v1258, %v1258
        %1261 = vrot.lane.b32.xlu0 %v832, 48
        %v1262 = vpop.permute.xlu0 %1261
        %v1264 = vsel %vm835, %v1259, 0
        %v1267 = vsel %vm936, %v1262, 0
        %1269 = vmatpush.bf16.msra.mxu0 0
        %1270 = vmatpush.bf16.msra.mxu0 0
        %1271 = vmatpush.bf16.msra.mxu0 0
        %1272 = vmatpush.bf16.msra.mxu0 0
        %1273 = vmatpush.bf16.msra.mxu0 0
        %1274 = vmatpush.bf16.msra.mxu0 0
        %1275 = vmatpush.bf16.msra.mxu0 0
        %1276 = vmatpush.bf16.msra.mxu0 %v1267
        %1277 = vmatmul.bf16.gmra.mxu0 %v1264
        %v1278 = vpop.f32.mrf.mxu0
        %v1279 = vadd.f32 0.0, %v1278
        %v1280 = vpop.f32.mrf.mxu0
        %1281 = vdwg.mxu0
        %1282 = vrot.lane.b32.xlu0 %v857, 48
        %v1283 = vpop.permute.xlu0 %1282
        %v1285 = vsel %vm835, %v1260, 0
        %v1288 = vsel %vm936, %v1283, 0
        %1290 = vmatpush.bf16.msra.mxu0 0
        %1291 = vmatpush.bf16.msra.mxu0 0
        %1292 = vmatpush.bf16.msra.mxu0 0
        %1293 = vmatpush.bf16.msra.mxu0 0
        %1294 = vmatpush.bf16.msra.mxu0 0
        %1295 = vmatpush.bf16.msra.mxu0 0
        %1296 = vmatpush.bf16.msra.mxu0 0
        %1297 = vmatpush.bf16.msra.mxu0 %v1288
        %1298 = vmatmul.bf16.gmra.mxu0 %v1285
        %v1299 = vpop.f32.mrf.mxu0
        %v1300 = vadd.f32 0.0, %v1299
        %v1301 = vpop.f32.mrf.mxu0
        %1302 = vdwg.mxu0
        %v1303 = vpack.c.bf16 %v1300, %v1279
        %v1305 = vsel %vm835, %v1303, 0
        %v1308 = vsel %vm936, %v790, 0
        %1310 = vmatpush.bf16.msra.mxu0 0
        %1311 = vmatpush.bf16.msra.mxu0 0
        %1312 = vmatpush.bf16.msra.mxu0 0
        %1313 = vmatpush.bf16.msra.mxu0 0
        %1314 = vmatpush.bf16.msra.mxu0 0
        %1315 = vmatpush.bf16.msra.mxu0 0
        %1316 = vmatpush.bf16.msra.mxu0 0
        %1317 = vmatpush.bf16.msra.mxu0 %v1308
        %1318 = vmatmul.bf16.gmra.mxu0 %v1305
        %v1319 = vpop.f32.mrf.mxu0
        %v1320 = vadd.f32 0.0, %v1319
        %v1321 = vpop.f32.mrf.mxu0
        %v1322 = vadd.f32 0.0, %v1321
        %1323 = vdwg.mxu0
        %v1324 = vadd.f32 %v1161, %v1320
        %v1325 = vadd.f32 %v1162, %v1322
        %1326 = vrot.lane.b32.xlu0 %v832, 104
        %v1327 = vpop.permute.xlu0 %1326
        %1328 = vrot.lane.b32.xlu0 %v832, 72
        %v1329 = vpop.permute.xlu0 %1328
        %v1331 = vsel %vm835, %v1327, 0
        %v1334 = vsel %vm835, %v1329, 0
        %1336 = vmatpush.bf16.xpose.msra.mxu0 0
        %1337 = vmatpush.bf16.xpose.msra.mxu0 0
        %1338 = vmatpush.bf16.xpose.msra.mxu0 0
        %1339 = vmatpush.bf16.xpose.msra.mxu0 0
        %1340 = vmatpush.bf16.xpose.msra.mxu0 0
        %1341 = vmatpush.bf16.xpose.msra.mxu0 0
        %1342 = vmatpush.bf16.xpose.msra.mxu0 0
        %1343 = vmatpush.bf16.xpose.msra.mxu0 %v1334
        %1344 = vmatmul.bf16.gmra.mxu0 %v1331
        %v1345 = vpop.f32.mrf.mxu0
        %v1346 = vadd.f32 0.0, %v1345
        %v1347 = vpop.f32.mrf.mxu0
        %1348 = vdwg.mxu0
        %1349 = vrot.lane.b32.xlu0 %v857, 104
        %v1350 = vpop.permute.xlu0 %1349
        %1351 = vrot.lane.b32.xlu0 %v857, 72
        %v1352 = vpop.permute.xlu0 %1351
        %v1354 = vsel %vm835, %v1350, 0
        %v1357 = vsel %vm835, %v1352, 0
        %1359 = vmatpush.bf16.xpose.msra.mxu0 0
        %1360 = vmatpush.bf16.xpose.msra.mxu0 0
        %1361 = vmatpush.bf16.xpose.msra.mxu0 0
        %1362 = vmatpush.bf16.xpose.msra.mxu0 0
        %1363 = vmatpush.bf16.xpose.msra.mxu0 0
        %1364 = vmatpush.bf16.xpose.msra.mxu0 0
        %1365 = vmatpush.bf16.xpose.msra.mxu0 0
        %1366 = vmatpush.bf16.xpose.msra.mxu0 %v1357
        %1367 = vmatmul.bf16.gmra.mxu0 %v1354
        %v1368 = vpop.f32.mrf.mxu0
        %v1369 = vadd.f32 0.0, %v1368
        %v1370 = vpop.f32.mrf.mxu0
        %1371 = vdwg.mxu0
        %v1372 = vmul.f32 %v1346, 0.35355338
        %v1373 = vmul.f32 %v1369, 0.35355338
        %v1374 = vsel %vm835, %v1372, -inf
        %1375 = vmax.xlane.f32.xlu0 %v1374
        %v1376 = vpop.xlane.xlu0 %1375
        %v1377 = vsel %vm835, %v1373, -inf
        %1378 = vmax.xlane.f32.xlu0 %v1377
        %v1379 = vpop.xlane.xlu0 %1378
        %v1380 = vsub.f32 %v1372, %v1376
        %v1381 = vsub.f32 %v1373, %v1379
        %v1382 = vmul.f32 %v1380, 1.442695
        %v1383 = vpow.pop %v1382
        %v1384 = vmul.f32 %v1381, 1.442695
        %v1385 = vpow.pop %v1384
        %v1386 = vsel %vm835, %v1383, 0.0
        %1387 = vadd.xlane.f32.xlu0 %v1386
        %v1388 = vpop.xlane.xlu0 %1387
        %v1389 = vsel %vm835, %v1385, 0.0
        %1390 = vadd.xlane.f32.xlu0 %v1389
        %v1391 = vpop.xlane.xlu0 %1390
        %v1392 = vrcp.pop %v1388
        %v1393 = vmul.f32 %v1388, %v1392
        %v1394 = vsub.f32 1.0, %v1393
        %v1395 = vmul.f32 %v1392, %v1394
        %v1396 = vadd.f32 %v1392, %v1395
        %vm1397 = vweird.f32 %v1388
        %vm1398 = vweird.f32 %v1392
        %vm1399 = vmor %vm1397, %vm1398
        %v1400 = vsel %vm1399, %v1392, %v1396
        %v1401 = vand.u32 2147483647, %v1388
        %vm1402 = vcmp.eq.f32.partialorder %v1401, 8.507059e+37
        %v1403 = vand.u32 %v1388, 2147483648
        %v1404 = vor.u32 1.1754944e-38, %v1403
        %v1405 = vsel %vm1402, %v1404, %v1400
        %v1406 = vmul.f32 %v1383, %v1405
        %v1407 = vrcp.pop %v1391
        %v1408 = vmul.f32 %v1391, %v1407
        %v1409 = vsub.f32 1.0, %v1408
        %v1410 = vmul.f32 %v1407, %v1409
        %v1411 = vadd.f32 %v1407, %v1410
        %vm1412 = vweird.f32 %v1391
        %vm1413 = vweird.f32 %v1407
        %vm1414 = vmor %vm1412, %vm1413
        %v1415 = vsel %vm1414, %v1407, %v1411
        %v1416 = vand.u32 2147483647, %v1391
        %vm1417 = vcmp.eq.f32.partialorder %v1416, 8.507059e+37
        %v1418 = vand.u32 %v1391, 2147483648
        %v1419 = vor.u32 1.1754944e-38, %v1418
        %v1420 = vsel %vm1417, %v1419, %v1415
        %v1421 = vmul.f32 %v1385, %v1420
        %v1422 = vpack.c.bf16 %v1406, %v1406
        %v1423 = vpack.c.bf16 %v1421, %v1421
        %1424 = vrot.lane.b32.xlu0 %v832, 40
        %v1425 = vpop.permute.xlu0 %1424
        %v1427 = vsel %vm835, %v1422, 0
        %v1430 = vsel %vm936, %v1425, 0
        %1432 = vmatpush.bf16.msra.mxu0 0
        %1433 = vmatpush.bf16.msra.mxu0 0
        %1434 = vmatpush.bf16.msra.mxu0 0
        %1435 = vmatpush.bf16.msra.mxu0 0
        %1436 = vmatpush.bf16.msra.mxu0 0
        %1437 = vmatpush.bf16.msra.mxu0 0
        %1438 = vmatpush.bf16.msra.mxu0 0
        %1439 = vmatpush.bf16.msra.mxu0 %v1430
        %1440 = vmatmul.bf16.gmra.mxu0 %v1427
        %v1441 = vpop.f32.mrf.mxu0
        %v1442 = vadd.f32 0.0, %v1441
        %v1443 = vpop.f32.mrf.mxu0
        %1444 = vdwg.mxu0
        %1445 = vrot.lane.b32.xlu0 %v857, 40
        %v1446 = vpop.permute.xlu0 %1445
        %v1448 = vsel %vm835, %v1423, 0
        %v1451 = vsel %vm936, %v1446, 0
        %1453 = vmatpush.bf16.msra.mxu0 0
        %1454 = vmatpush.bf16.msra.mxu0 0
        %1455 = vmatpush.bf16.msra.mxu0 0
        %1456 = vmatpush.bf16.msra.mxu0 0
        %1457 = vmatpush.bf16.msra.mxu0 0
        %1458 = vmatpush.bf16.msra.mxu0 0
        %1459 = vmatpush.bf16.msra.mxu0 0
        %1460 = vmatpush.bf16.msra.mxu0 %v1451
        %1461 = vmatmul.bf16.gmra.mxu0 %v1448
        %v1462 = vpop.f32.mrf.mxu0
        %v1463 = vadd.f32 0.0, %v1462
        %v1464 = vpop.f32.mrf.mxu0
        %1465 = vdwg.mxu0
        %v1466 = vpack.c.bf16 %v1463, %v1442
        %v1468 = vsel %vm835, %v1466, 0
        %v1471 = vsel %vm936, %v791, 0
        %1473 = vmatpush.bf16.msra.mxu0 0
        %1474 = vmatpush.bf16.msra.mxu0 0
        %1475 = vmatpush.bf16.msra.mxu0 0
        %1476 = vmatpush.bf16.msra.mxu0 0
        %1477 = vmatpush.bf16.msra.mxu0 0
        %1478 = vmatpush.bf16.msra.mxu0 0
        %1479 = vmatpush.bf16.msra.mxu0 0
        %1480 = vmatpush.bf16.msra.mxu0 %v1471
        %1481 = vmatmul.bf16.gmra.mxu0 %v1468
        %v1482 = vpop.f32.mrf.mxu0
        %v1483 = vadd.f32 0.0, %v1482
        %v1484 = vpop.f32.mrf.mxu0
        %v1485 = vadd.f32 0.0, %v1484
        %1486 = vdwg.mxu0
        %v1487 = vadd.f32 %v1324, %v1483
        %v1488 = vadd.f32 %v1325, %v1485
        %v1489 = vadd.f32 %v782, %v1487
        %v1490 = vadd.f32 %v783, %v1488
        %v1491 = vsel %vm809, %v1489, 0.0
        %1492 = vadd.xlane.f32.xlu0 %v1491
        %v1493 = vpop.xlane.xlu0 %1492
        %v1494 = vsel %vm809, %v1490, 0.0
        %1495 = vadd.xlane.f32.xlu0 %v1494
        %v1496 = vpop.xlane.xlu0 %1495
        %v1497 = vrcp.pop 32.0
        %v1498 = vmul.f32 32.0, %v1497
        %v1499 = vsub.f32 1.0, %v1498
        %v1500 = vmul.f32 %v1497, %v1499
        %v1501 = vadd.f32 %v1497, %v1500
        %vm1502 = vweird.f32 %v1497
        %v1503 = vsel %vm1502, %v1497, %v1501
        %v1504 = vmul.f32 %v1493, %v1503
        %v1505 = vmul.f32 %v1496, %v1503
        %v1506 = vsub.f32 %v1489, %v1504
        %v1507 = vsub.f32 %v1490, %v1505
        %v1508 = vmul.f32 %v1506, %v1506
        %v1509 = vmul.f32 %v1507, %v1507
        %v1510 = vsel %vm809, %v1508, 0.0
        %1511 = vadd.xlane.f32.xlu0 %v1510
        %v1512 = vpop.xlane.xlu0 %1511
        %v1513 = vsel %vm809, %v1509, 0.0
        %1514 = vadd.xlane.f32.xlu0 %v1513
        %v1515 = vpop.xlane.xlu0 %1514
        %v1516 = vmul.f32 %v1512, %v1503
        %v1517 = vmul.f32 %v1515, %v1503
        %v1518 = vadd.f32 %v1516, 1e-05
        %v1519 = vadd.f32 %v1517, 1e-05
        %v1520 = vrsqrt.pop %v1518
        %v1521 = vmul.f32 %v1520, %v1518
        %v1522 = vmul.f32 %v1521, %v1520
        %v1523 = vmul.f32 0.5, %v1522
        %v1524 = vsub.f32 1.5, %v1523
        %v1525 = vmul.f32 %v1520, %v1524
        %vm1526 = vweird.f32 %v1518
        %vm1527 = vweird.f32 %v1520
        %vm1528 = vmor %vm1526, %vm1527
        %v1529 = vsel %vm1528, %v1520, %v1525
        %v1530 = vrsqrt.pop %v1519
        %v1531 = vmul.f32 %v1530, %v1519
        %v1532 = vmul.f32 %v1531, %v1530
        %v1533 = vmul.f32 0.5, %v1532
        %v1534 = vsub.f32 1.5, %v1533
        %v1535 = vmul.f32 %v1530, %v1534
        %vm1536 = vweird.f32 %v1519
        %vm1537 = vweird.f32 %v1530
        %vm1538 = vmor %vm1536, %vm1537
        %v1539 = vsel %vm1538, %v1530, %v1535
        %v1540 = vmul.f32 %v1506, %v1529
        %v1541 = vmul.f32 %v1507, %v1539
        %v1542 = vld [vmem:[%s7] sm:$0x1]
        %v1544 = vperm.slane %v1542, 0
        %v1546 = vmul.f32 %v1540, %v1544
        %v1547 = vmul.f32 %v1541, %v1544
        %v1548 = vld [vmem:[%s8] sm:$0x1]
        %v1550 = vperm.slane %v1548, 0
        %v1552 = vadd.f32 %v1546, %v1550
        %v1553 = vadd.f32 %v1547, %v1550
        %v1554 = vpack.c.bf16 %v1553, %v1552
        %v1555 = vld [vmem:[%s9] sm:$0xf]
        %v1556 = vld [vmem:[%s9 + $0x4] sm:$0xf]
        %v1557 = vld [vmem:[%s9 + $0x8] sm:$0xf]
        %v1558 = vld [vmem:[%s9 + $0xc] sm:$0xf]
        %v1559 = vld [vmem:[%s10] sm:$0x1]
        %v1561 = vperm.slane %v1559, 0
        %v1567 = vunpack.c.l.b16 %v1555
        %v1568 = vunpack.c.l.b16 %v1556
        %v1569 = vunpack.c.l.b16 %v1557
        %v1570 = vunpack.c.l.b16 %v1558
        %v1571 = vpack.c.b16 %v1568, %v1567
        %v1572 = vpack.c.b16 %v1570, %v1569
        %v1576 = vsel %vm809, %v1554, 0
        %1578 = vmatpush.bf16.msra.mxu0 0
        %1579 = vmatpush.bf16.msra.mxu0 0
        %1580 = vmatpush.bf16.msra.mxu0 0
        %1581 = vmatpush.bf16.msra.mxu0 0
        %1582 = vmatpush.bf16.msra.mxu0 0
        %1583 = vmatpush.bf16.msra.mxu0 0
        %1584 = vmatpush.bf16.msra.mxu0 %v1572
        %1585 = vmatpush.bf16.msra.mxu0 %v1571
        %1586 = vmatmul.bf16.gmra.mxu0 %v1576
        %v1587 = vpop.f32.mrf.mxu0
        %v1588 = vadd.f32 %v1561, %v1587
        %v1589 = vpop.f32.mrf.mxu0
        %v1590 = vadd.f32 %v1561, %v1589
        %1591 = vdwg.mxu0
        %v1592 = vmax.f32 %v1588, 0.0
        %v1593 = vmax.f32 %v1590, 0.0
        %v1594 = vpack.c.bf16 %v1593, %v1592
        %v1595 = vld [vmem:[%s11] sm:$0xf]
        %v1596 = vld [vmem:[%s11 + $0x4] sm:$0xf]
        %v1597 = vld [vmem:[%s11 + $0x8] sm:$0xf]
        %v1598 = vld [vmem:[%s11 + $0xc] sm:$0xf]
        %v1599 = vld [vmem:[%s11 + $0x10] sm:$0xf]
        %v1600 = vld [vmem:[%s11 + $0x14] sm:$0xf]
        %v1601 = vld [vmem:[%s11 + $0x18] sm:$0xf]
        %v1602 = vld [vmem:[%s11 + $0x1c] sm:$0xf]
        %v1603 = vld [vmem:[%s12] sm:$0x1]
        %v1605 = vperm.slane %v1603, 0
        %v1615 = vunpack.c.l.b16 %v1595
        %v1616 = vunpack.c.l.b16 %v1596
        %v1617 = vunpack.c.l.b16 %v1597
        %v1618 = vunpack.c.l.b16 %v1598
        %v1619 = vunpack.c.l.b16 %v1599
        %v1620 = vunpack.c.l.b16 %v1600
        %v1621 = vunpack.c.l.b16 %v1601
        %v1622 = vunpack.c.l.b16 %v1602
        %v1623 = vpack.c.b16 %v1616, %v1615
        %v1624 = vpack.c.b16 %v1618, %v1617
        %v1625 = vpack.c.b16 %v1620, %v1619
        %v1626 = vpack.c.b16 %v1622, %v1621
        %vm1631 = vcmask 523264
        %v1633 = vsel %vm1631, %v1594, 0
        %1635 = vmatpush.bf16.msra.mxu0 0
        %1636 = vmatpush.bf16.msra.mxu0 0
        %1637 = vmatpush.bf16.msra.mxu0 0
        %1638 = vmatpush.bf16.msra.mxu0 0
        %1639 = vmatpush.bf16.msra.mxu0 %v1626
        %1640 = vmatpush.bf16.msra.mxu0 %v1625
        %1641 = vmatpush.bf16.msra.mxu0 %v1624
        %1642 = vmatpush.bf16.msra.mxu0 %v1623
        %1643 = vmatmul.bf16.gmra.mxu0 %v1633
        %v1644 = vpop.f32.mrf.mxu0
        %v1645 = vadd.f32 %v1605, %v1644
        %v1646 = vpop.f32.mrf.mxu0
        %v1647 = vadd.f32 %v1605, %v1646
        %1648 = vdwg.mxu0
        %v1649 = vadd.f32 %v1552, %v1645
        %v1650 = vadd.f32 %v1553, %v1647
        %v1651 = vsel %vm809, %v1649, 0.0
        %1652 = vadd.xlane.f32.xlu0 %v1651
        %v1653 = vpop.xlane.xlu0 %1652
        %v1654 = vsel %vm809, %v1650, 0.0
        %1655 = vadd.xlane.f32.xlu0 %v1654
        %v1656 = vpop.xlane.xlu0 %1655
        %v1657 = vmul.f32 %v1653, %v1503
        %v1658 = vmul.f32 %v1656, %v1503
        %v1659 = vsub.f32 %v1649, %v1657
        %v1660 = vsub.f32 %v1650, %v1658
        %v1661 = vmul.f32 %v1659, %v1659
        %v1662 = vmul.f32 %v1660, %v1660
        %v1663 = vsel %vm809, %v1661, 0.0
        %1664 = vadd.xlane.f32.xlu0 %v1663
        %v1665 = vpop.xlane.xlu0 %1664
        %v1666 = vsel %vm809, %v1662, 0.0
        %1667 = vadd.xlane.f32.xlu0 %v1666
        %v1668 = vpop.xlane.xlu0 %1667
        %v1669 = vmul.f32 %v1665, %v1503
        %v1670 = vmul.f32 %v1668, %v1503
        %v1671 = vadd.f32 %v1669, 1e-05
        %v1672 = vadd.f32 %v1670, 1e-05
        %v1673 = vrsqrt.pop %v1671
        %v1674 = vmul.f32 %v1673, %v1671
        %v1675 = vmul.f32 %v1674, %v1673
        %v1676 = vmul.f32 0.5, %v1675
        %v1677 = vsub.f32 1.5, %v1676
        %v1678 = vmul.f32 %v1673, %v1677
        %vm1679 = vweird.f32 %v1671
        %vm1680 = vweird.f32 %v1673
        %vm1681 = vmor %vm1679, %vm1680
        %v1682 = vsel %vm1681, %v1673, %v1678
        %v1683 = vrsqrt.pop %v1672
        %v1684 = vmul.f32 %v1683, %v1672
        %v1685 = vmul.f32 %v1684, %v1683
        %v1686 = vmul.f32 0.5, %v1685
        %v1687 = vsub.f32 1.5, %v1686
        %v1688 = vmul.f32 %v1683, %v1687
        %vm1689 = vweird.f32 %v1672
        %vm1690 = vweird.f32 %v1683
        %vm1691 = vmor %vm1689, %vm1690
        %v1692 = vsel %vm1691, %v1683, %v1688
        %v1693 = vmul.f32 %v1659, %v1682
        %v1694 = vmul.f32 %v1660, %v1692
        %v1695 = vld [vmem:[%s13] sm:$0x1]
        %v1697 = vperm.slane %v1695, 0
        %v1699 = vmul.f32 %v1693, %v1697
        %v1700 = vmul.f32 %v1694, %v1697
        %v1701 = vld [vmem:[%s14] sm:$0x1]
        %v1703 = vperm.slane %v1701, 0
        %v1705 = vadd.f32 %v1699, %v1703
        %v1706 = vadd.f32 %v1700, %v1703
        %s1707 = scalar_lea.vmem %s3, 16
        %v1708 = vld [vmem:[%s1707] sm:$0xf]
        %v1709 = vld [vmem:[%s1707 + $0x4] sm:$0xf]
        %v1710 = vld [vmem:[%s1707 + $0x8] sm:$0xf]
        %v1711 = vld [vmem:[%s1707 + $0xc] sm:$0xf]
        %s1712 = scalar_lea.vmem %s5, 16
        %v1713 = vld [vmem:[%s1712] sm:$0xf]
        %v1714 = vld [vmem:[%s1712 + $0x4] sm:$0xf]
        %v1715 = vld [vmem:[%s1712 + $0x8] sm:$0xf]
        %v1716 = vld [vmem:[%s1712 + $0xc] sm:$0xf]
        %v1717 = vpack.c.bf16 %v1706, %v1705
        %s1718 = scalar_lea.vmem %s4, 1
        %v1719 = vld [vmem:[%s1718] sm:$0x1]
        %v1721 = vperm.slane %v1719, 0
        %v1727 = vunpack.c.l.b16 %v1708
        %v1728 = vunpack.c.l.b16 %v1709
        %v1729 = vunpack.c.l.b16 %v1710
        %v1730 = vunpack.c.l.b16 %v1711
        %v1731 = vpack.c.b16 %v1728, %v1727
        %v1732 = vpack.c.b16 %v1730, %v1729
        %v1736 = vsel %vm809, %v1717, 0
        %1738 = vmatpush.bf16.msra.mxu0 0
        %1739 = vmatpush.bf16.msra.mxu0 0
        %1740 = vmatpush.bf16.msra.mxu0 0
        %1741 = vmatpush.bf16.msra.mxu0 0
        %1742 = vmatpush.bf16.msra.mxu0 0
        %1743 = vmatpush.bf16.msra.mxu0 0
        %1744 = vmatpush.bf16.msra.mxu0 %v1732
        %1745 = vmatpush.bf16.msra.mxu0 %v1731
        %1746 = vmatmul.bf16.gmra.mxu0 %v1736
        %v1747 = vpop.f32.mrf.mxu0
        %v1748 = vadd.f32 %v1721, %v1747
        %v1749 = vpop.f32.mrf.mxu0
        %v1750 = vadd.f32 %v1721, %v1749
        %1751 = vdwg.mxu0
        %s1752 = scalar_lea.vmem %s6, 1
        %v1753 = vld [vmem:[%s1752] sm:$0x1]
        %v1754 = vpack.c.bf16 %v1748, %v1748
        %v1755 = vpack.c.bf16 %v1750, %v1750
        %v1757 = vunpack.c.l.b16 %v1754
        %v1758 = vpack.c.b16 %v1757, %v1757
        %1759 = vrot.lane.b32.xlu0 %v1758, 96
        %v1760 = vpop.permute.xlu0 %1759
        %v1762 = vsel %vm835, %v1754, 0
        %v1765 = vsel %vm835, %v1760, 0
        %1767 = vmatpush.bf16.xpose.msra.mxu0 0
        %1768 = vmatpush.bf16.xpose.msra.mxu0 0
        %1769 = vmatpush.bf16.xpose.msra.mxu0 0
        %1770 = vmatpush.bf16.xpose.msra.mxu0 0
        %1771 = vmatpush.bf16.xpose.msra.mxu0 0
        %1772 = vmatpush.bf16.xpose.msra.mxu0 0
        %1773 = vmatpush.bf16.xpose.msra.mxu0 0
        %1774 = vmatpush.bf16.xpose.msra.mxu0 %v1765
        %1775 = vmatmul.bf16.gmra.mxu0 %v1762
        %v1776 = vpop.f32.mrf.mxu0
        %v1777 = vadd.f32 0.0, %v1776
        %v1778 = vpop.f32.mrf.mxu0
        %1779 = vdwg.mxu0
        %v1781 = vunpack.c.l.b16 %v1755
        %v1782 = vpack.c.b16 %v1781, %v1781
        %1783 = vrot.lane.b32.xlu0 %v1782, 96
        %v1784 = vpop.permute.xlu0 %1783
        %v1786 = vsel %vm835, %v1755, 0
        %v1789 = vsel %vm835, %v1784, 0
        %1791 = vmatpush.bf16.xpose.msra.mxu0 0
        %1792 = vmatpush.bf16.xpose.msra.mxu0 0
        %1793 = vmatpush.bf16.xpose.msra.mxu0 0
        %1794 = vmatpush.bf16.xpose.msra.mxu0 0
        %1795 = vmatpush.bf16.xpose.msra.mxu0 0
        %1796 = vmatpush.bf16.xpose.msra.mxu0 0
        %1797 = vmatpush.bf16.xpose.msra.mxu0 0
        %1798 = vmatpush.bf16.xpose.msra.mxu0 %v1789
        %1799 = vmatmul.bf16.gmra.mxu0 %v1786
        %v1800 = vpop.f32.mrf.mxu0
        %v1801 = vadd.f32 0.0, %v1800
        %v1802 = vpop.f32.mrf.mxu0
        %1803 = vdwg.mxu0
        %v1804 = vmul.f32 %v1777, 0.35355338
        %v1805 = vmul.f32 %v1801, 0.35355338
        %v1806 = vsel %vm835, %v1804, -inf
        %1807 = vmax.xlane.f32.xlu0 %v1806
        %v1808 = vpop.xlane.xlu0 %1807
        %v1809 = vsel %vm835, %v1805, -inf
        %1810 = vmax.xlane.f32.xlu0 %v1809
        %v1811 = vpop.xlane.xlu0 %1810
        %v1812 = vsub.f32 %v1804, %v1808
        %v1813 = vsub.f32 %v1805, %v1811
        %v1814 = vmul.f32 %v1812, 1.442695
        %v1815 = vpow.pop %v1814
        %v1816 = vmul.f32 %v1813, 1.442695
        %v1817 = vpow.pop %v1816
        %v1818 = vsel %vm835, %v1815, 0.0
        %1819 = vadd.xlane.f32.xlu0 %v1818
        %v1820 = vpop.xlane.xlu0 %1819
        %v1821 = vsel %vm835, %v1817, 0.0
        %1822 = vadd.xlane.f32.xlu0 %v1821
        %v1823 = vpop.xlane.xlu0 %1822
        %v1824 = vrcp.pop %v1820
        %v1825 = vmul.f32 %v1820, %v1824
        %v1826 = vsub.f32 1.0, %v1825
        %v1827 = vmul.f32 %v1824, %v1826
        %v1828 = vadd.f32 %v1824, %v1827
        %vm1829 = vweird.f32 %v1820
        %vm1830 = vweird.f32 %v1824
        %vm1831 = vmor %vm1829, %vm1830
        %v1832 = vsel %vm1831, %v1824, %v1828
        %v1833 = vand.u32 2147483647, %v1820
        %vm1834 = vcmp.eq.f32.partialorder %v1833, 8.507059e+37
        %v1835 = vand.u32 %v1820, 2147483648
        %v1836 = vor.u32 1.1754944e-38, %v1835
        %v1837 = vsel %vm1834, %v1836, %v1832
        %v1838 = vmul.f32 %v1815, %v1837
        %v1839 = vrcp.pop %v1823
        %v1840 = vmul.f32 %v1823, %v1839
        %v1841 = vsub.f32 1.0, %v1840
        %v1842 = vmul.f32 %v1839, %v1841
        %v1843 = vadd.f32 %v1839, %v1842
        %vm1844 = vweird.f32 %v1823
        %vm1845 = vweird.f32 %v1839
        %vm1846 = vmor %vm1844, %vm1845
        %v1847 = vsel %vm1846, %v1839, %v1843
        %v1848 = vand.u32 2147483647, %v1823
        %vm1849 = vcmp.eq.f32.partialorder %v1848, 8.507059e+37
        %v1850 = vand.u32 %v1823, 2147483648
        %v1851 = vor.u32 1.1754944e-38, %v1850
        %v1852 = vsel %vm1849, %v1851, %v1847
        %v1853 = vmul.f32 %v1817, %v1852
        %v1854 = vpack.c.bf16 %v1838, %v1838
        %v1855 = vpack.c.bf16 %v1853, %v1853
        %1856 = vrot.lane.b32.xlu0 %v1758, 64
        %v1857 = vpop.permute.xlu0 %1856
        %v1859 = vsel %vm835, %v1854, 0
        %v1862 = vsel %vm936, %v1857, 0
        %1864 = vmatpush.bf16.msra.mxu0 0
        %1865 = vmatpush.bf16.msra.mxu0 0
        %1866 = vmatpush.bf16.msra.mxu0 0
        %1867 = vmatpush.bf16.msra.mxu0 0
        %1868 = vmatpush.bf16.msra.mxu0 0
        %1869 = vmatpush.bf16.msra.mxu0 0
        %1870 = vmatpush.bf16.msra.mxu0 0
        %1871 = vmatpush.bf16.msra.mxu0 %v1862
        %1872 = vmatmul.bf16.gmra.mxu0 %v1859
        %v1873 = vpop.f32.mrf.mxu0
        %v1874 = vadd.f32 0.0, %v1873
        %v1875 = vpop.f32.mrf.mxu0
        %1876 = vdwg.mxu0
        %1877 = vrot.lane.b32.xlu0 %v1782, 64
        %v1878 = vpop.permute.xlu0 %1877
        %v1880 = vsel %vm835, %v1855, 0
        %v1883 = vsel %vm936, %v1878, 0
        %1885 = vmatpush.bf16.msra.mxu0 0
        %1886 = vmatpush.bf16.msra.mxu0 0
        %1887 = vmatpush.bf16.msra.mxu0 0
        %1888 = vmatpush.bf16.msra.mxu0 0
        %1889 = vmatpush.bf16.msra.mxu0 0
        %1890 = vmatpush.bf16.msra.mxu0 0
        %1891 = vmatpush.bf16.msra.mxu0 0
        %1892 = vmatpush.bf16.msra.mxu0 %v1883
        %1893 = vmatmul.bf16.gmra.mxu0 %v1880
        %v1894 = vpop.f32.mrf.mxu0
        %v1895 = vadd.f32 0.0, %v1894
        %v1896 = vpop.f32.mrf.mxu0
        %1897 = vdwg.mxu0
        %v1898 = vpack.c.bf16 %v1895, %v1874
        %v1900 = vsel %vm835, %v1898, 0
        %v1903 = vsel %vm936, %v1713, 0
        %1905 = vmatpush.bf16.msra.mxu0 0
        %1906 = vmatpush.bf16.msra.mxu0 0
        %1907 = vmatpush.bf16.msra.mxu0 0
        %1908 = vmatpush.bf16.msra.mxu0 0
        %1909 = vmatpush.bf16.msra.mxu0 0
        %1910 = vmatpush.bf16.msra.mxu0 0
        %1911 = vmatpush.bf16.msra.mxu0 0
        %1912 = vmatpush.bf16.msra.mxu0 %v1903
        %1913 = vmatmul.bf16.gmra.mxu0 %v1900
        %v1914 = vpop.f32.mrf.mxu0
        %v1915 = vadd.f32 0.0, %v1914
        %v1916 = vpop.f32.mrf.mxu0
        %v1917 = vadd.f32 0.0, %v1916
        %1918 = vdwg.mxu0
        %v1920 = vperm.slane %v1753, 0
        %v1922 = vadd.f32 %v1920, %v1915
        %v1923 = vadd.f32 %v1920, %v1917
        %1924 = vrot.lane.b32.xlu0 %v1758, 120
        %v1925 = vpop.permute.xlu0 %1924
        %1926 = vrot.lane.b32.xlu0 %v1758, 88
        %v1927 = vpop.permute.xlu0 %1926
        %v1929 = vsel %vm835, %v1925, 0
        %v1932 = vsel %vm835, %v1927, 0
        %1934 = vmatpush.bf16.xpose.msra.mxu0 0
        %1935 = vmatpush.bf16.xpose.msra.mxu0 0
        %1936 = vmatpush.bf16.xpose.msra.mxu0 0
        %1937 = vmatpush.bf16.xpose.msra.mxu0 0
        %1938 = vmatpush.bf16.xpose.msra.mxu0 0
        %1939 = vmatpush.bf16.xpose.msra.mxu0 0
        %1940 = vmatpush.bf16.xpose.msra.mxu0 0
        %1941 = vmatpush.bf16.xpose.msra.mxu0 %v1932
        %1942 = vmatmul.bf16.gmra.mxu0 %v1929
        %v1943 = vpop.f32.mrf.mxu0
        %v1944 = vadd.f32 0.0, %v1943
        %v1945 = vpop.f32.mrf.mxu0
        %1946 = vdwg.mxu0
        %1947 = vrot.lane.b32.xlu0 %v1782, 120
        %v1948 = vpop.permute.xlu0 %1947
        %1949 = vrot.lane.b32.xlu0 %v1782, 88
        %v1950 = vpop.permute.xlu0 %1949
        %v1952 = vsel %vm835, %v1948, 0
        %v1955 = vsel %vm835, %v1950, 0
        %1957 = vmatpush.bf16.xpose.msra.mxu0 0
        %1958 = vmatpush.bf16.xpose.msra.mxu0 0
        %1959 = vmatpush.bf16.xpose.msra.mxu0 0
        %1960 = vmatpush.bf16.xpose.msra.mxu0 0
        %1961 = vmatpush.bf16.xpose.msra.mxu0 0
        %1962 = vmatpush.bf16.xpose.msra.mxu0 0
        %1963 = vmatpush.bf16.xpose.msra.mxu0 0
        %1964 = vmatpush.bf16.xpose.msra.mxu0 %v1955
        %1965 = vmatmul.bf16.gmra.mxu0 %v1952
        %v1966 = vpop.f32.mrf.mxu0
        %v1967 = vadd.f32 0.0, %v1966
        %v1968 = vpop.f32.mrf.mxu0
        %1969 = vdwg.mxu0
        %v1970 = vmul.f32 %v1944, 0.35355338
        %v1971 = vmul.f32 %v1967, 0.35355338
        %v1972 = vsel %vm835, %v1970, -inf
        %1973 = vmax.xlane.f32.xlu0 %v1972
        %v1974 = vpop.xlane.xlu0 %1973
        %v1975 = vsel %vm835, %v1971, -inf
        %1976 = vmax.xlane.f32.xlu0 %v1975
        %v1977 = vpop.xlane.xlu0 %1976
        %v1978 = vsub.f32 %v1970, %v1974
        %v1979 = vsub.f32 %v1971, %v1977
        %v1980 = vmul.f32 %v1978, 1.442695
        %v1981 = vpow.pop %v1980
        %v1982 = vmul.f32 %v1979, 1.442695
        %v1983 = vpow.pop %v1982
        %v1984 = vsel %vm835, %v1981, 0.0
        %1985 = vadd.xlane.f32.xlu0 %v1984
        %v1986 = vpop.xlane.xlu0 %1985
        %v1987 = vsel %vm835, %v1983, 0.0
        %1988 = vadd.xlane.f32.xlu0 %v1987
        %v1989 = vpop.xlane.xlu0 %1988
        %v1990 = vrcp.pop %v1986
        %v1991 = vmul.f32 %v1986, %v1990
        %v1992 = vsub.f32 1.0, %v1991
        %v1993 = vmul.f32 %v1990, %v1992
        %v1994 = vadd.f32 %v1990, %v1993
        %vm1995 = vweird.f32 %v1986
        %vm1996 = vweird.f32 %v1990
        %vm1997 = vmor %vm1995, %vm1996
        %v1998 = vsel %vm1997, %v1990, %v1994
        %v1999 = vand.u32 2147483647, %v1986
        %vm2000 = vcmp.eq.f32.partialorder %v1999, 8.507059e+37
        %v2001 = vand.u32 %v1986, 2147483648
        %v2002 = vor.u32 1.1754944e-38, %v2001
        %v2003 = vsel %vm2000, %v2002, %v1998
        %v2004 = vmul.f32 %v1981, %v2003
        %v2005 = vrcp.pop %v1989
        %v2006 = vmul.f32 %v1989, %v2005
        %v2007 = vsub.f32 1.0, %v2006
        %v2008 = vmul.f32 %v2005, %v2007
        %v2009 = vadd.f32 %v2005, %v2008
        %vm2010 = vweird.f32 %v1989
        %vm2011 = vweird.f32 %v2005
        %vm2012 = vmor %vm2010, %vm2011
        %v2013 = vsel %vm2012, %v2005, %v2009
        %v2014 = vand.u32 2147483647, %v1989
        %vm2015 = vcmp.eq.f32.partialorder %v2014, 8.507059e+37
        %v2016 = vand.u32 %v1989, 2147483648
        %v2017 = vor.u32 1.1754944e-38, %v2016
        %v2018 = vsel %vm2015, %v2017, %v2013
        %v2019 = vmul.f32 %v1983, %v2018
        %v2020 = vpack.c.bf16 %v2004, %v2004
        %v2021 = vpack.c.bf16 %v2019, %v2019
        %2022 = vrot.lane.b32.xlu0 %v1758, 56
        %v2023 = vpop.permute.xlu0 %2022
        %v2025 = vsel %vm835, %v2020, 0
        %v2028 = vsel %vm936, %v2023, 0
        %2030 = vmatpush.bf16.msra.mxu0 0
        %2031 = vmatpush.bf16.msra.mxu0 0
        %2032 = vmatpush.bf16.msra.mxu0 0
        %2033 = vmatpush.bf16.msra.mxu0 0
        %2034 = vmatpush.bf16.msra.mxu0 0
        %2035 = vmatpush.bf16.msra.mxu0 0
        %2036 = vmatpush.bf16.msra.mxu0 0
        %2037 = vmatpush.bf16.msra.mxu0 %v2028
        %2038 = vmatmul.bf16.gmra.mxu0 %v2025
        %v2039 = vpop.f32.mrf.mxu0
        %v2040 = vadd.f32 0.0, %v2039
        %v2041 = vpop.f32.mrf.mxu0
        %2042 = vdwg.mxu0
        %2043 = vrot.lane.b32.xlu0 %v1782, 56
        %v2044 = vpop.permute.xlu0 %2043
        %v2046 = vsel %vm835, %v2021, 0
        %v2049 = vsel %vm936, %v2044, 0
        %2051 = vmatpush.bf16.msra.mxu0 0
        %2052 = vmatpush.bf16.msra.mxu0 0
        %2053 = vmatpush.bf16.msra.mxu0 0
        %2054 = vmatpush.bf16.msra.mxu0 0
        %2055 = vmatpush.bf16.msra.mxu0 0
        %2056 = vmatpush.bf16.msra.mxu0 0
        %2057 = vmatpush.bf16.msra.mxu0 0
        %2058 = vmatpush.bf16.msra.mxu0 %v2049
        %2059 = vmatmul.bf16.gmra.mxu0 %v2046
        %v2060 = vpop.f32.mrf.mxu0
        %v2061 = vadd.f32 0.0, %v2060
        %v2062 = vpop.f32.mrf.mxu0
        %2063 = vdwg.mxu0
        %v2064 = vpack.c.bf16 %v2061, %v2040
        %v2066 = vsel %vm835, %v2064, 0
        %v2069 = vsel %vm936, %v1714, 0
        %2071 = vmatpush.bf16.msra.mxu0 0
        %2072 = vmatpush.bf16.msra.mxu0 0
        %2073 = vmatpush.bf16.msra.mxu0 0
        %2074 = vmatpush.bf16.msra.mxu0 0
        %2075 = vmatpush.bf16.msra.mxu0 0
        %2076 = vmatpush.bf16.msra.mxu0 0
        %2077 = vmatpush.bf16.msra.mxu0 0
        %2078 = vmatpush.bf16.msra.mxu0 %v2069
        %2079 = vmatmul.bf16.gmra.mxu0 %v2066
        %v2080 = vpop.f32.mrf.mxu0
        %v2081 = vadd.f32 0.0, %v2080
        %v2082 = vpop.f32.mrf.mxu0
        %v2083 = vadd.f32 0.0, %v2082
        %2084 = vdwg.mxu0
        %v2085 = vadd.f32 %v1922, %v2081
        %v2086 = vadd.f32 %v1923, %v2083
        %2087 = vrot.lane.b32.xlu0 %v1758, 112
        %v2088 = vpop.permute.xlu0 %2087
        %2089 = vrot.lane.b32.xlu0 %v1758, 80
        %v2090 = vpop.permute.xlu0 %2089
        %v2092 = vsel %vm835, %v2088, 0
        %v2095 = vsel %vm835, %v2090, 0
        %2097 = vmatpush.bf16.xpose.msra.mxu0 0
        %2098 = vmatpush.bf16.xpose.msra.mxu0 0
        %2099 = vmatpush.bf16.xpose.msra.mxu0 0
        %2100 = vmatpush.bf16.xpose.msra.mxu0 0
        %2101 = vmatpush.bf16.xpose.msra.mxu0 0
        %2102 = vmatpush.bf16.xpose.msra.mxu0 0
        %2103 = vmatpush.bf16.xpose.msra.mxu0 0
        %2104 = vmatpush.bf16.xpose.msra.mxu0 %v2095
        %2105 = vmatmul.bf16.gmra.mxu0 %v2092
        %v2106 = vpop.f32.mrf.mxu0
        %v2107 = vadd.f32 0.0, %v2106
        %v2108 = vpop.f32.mrf.mxu0
        %2109 = vdwg.mxu0
        %2110 = vrot.lane.b32.xlu0 %v1782, 112
        %v2111 = vpop.permute.xlu0 %2110
        %2112 = vrot.lane.b32.xlu0 %v1782, 80
        %v2113 = vpop.permute.xlu0 %2112
        %v2115 = vsel %vm835, %v2111, 0
        %v2118 = vsel %vm835, %v2113, 0
        %2120 = vmatpush.bf16.xpose.msra.mxu0 0
        %2121 = vmatpush.bf16.xpose.msra.mxu0 0
        %2122 = vmatpush.bf16.xpose.msra.mxu0 0
        %2123 = vmatpush.bf16.xpose.msra.mxu0 0
        %2124 = vmatpush.bf16.xpose.msra.mxu0 0
        %2125 = vmatpush.bf16.xpose.msra.mxu0 0
        %2126 = vmatpush.bf16.xpose.msra.mxu0 0
        %2127 = vmatpush.bf16.xpose.msra.mxu0 %v2118
        %2128 = vmatmul.bf16.gmra.mxu0 %v2115
        %v2129 = vpop.f32.mrf.mxu0
        %v2130 = vadd.f32 0.0, %v2129
        %v2131 = vpop.f32.mrf.mxu0
        %2132 = vdwg.mxu0
        %v2133 = vmul.f32 %v2107, 0.35355338
        %v2134 = vmul.f32 %v2130, 0.35355338
        %v2135 = vsel %vm835, %v2133, -inf
        %2136 = vmax.xlane.f32.xlu0 %v2135
        %v2137 = vpop.xlane.xlu0 %2136
        %v2138 = vsel %vm835, %v2134, -inf
        %2139 = vmax.xlane.f32.xlu0 %v2138
        %v2140 = vpop.xlane.xlu0 %2139
        %v2141 = vsub.f32 %v2133, %v2137
        %v2142 = vsub.f32 %v2134, %v2140
        %v2143 = vmul.f32 %v2141, 1.442695
        %v2144 = vpow.pop %v2143
        %v2145 = vmul.f32 %v2142, 1.442695
        %v2146 = vpow.pop %v2145
        %v2147 = vsel %vm835, %v2144, 0.0
        %2148 = vadd.xlane.f32.xlu0 %v2147
        %v2149 = vpop.xlane.xlu0 %2148
        %v2150 = vsel %vm835, %v2146, 0.0
        %2151 = vadd.xlane.f32.xlu0 %v2150
        %v2152 = vpop.xlane.xlu0 %2151
        %v2153 = vrcp.pop %v2149
        %v2154 = vmul.f32 %v2149, %v2153
        %v2155 = vsub.f32 1.0, %v2154
        %v2156 = vmul.f32 %v2153, %v2155
        %v2157 = vadd.f32 %v2153, %v2156
        %vm2158 = vweird.f32 %v2149
        %vm2159 = vweird.f32 %v2153
        %vm2160 = vmor %vm2158, %vm2159
        %v2161 = vsel %vm2160, %v2153, %v2157
        %v2162 = vand.u32 2147483647, %v2149
        %vm2163 = vcmp.eq.f32.partialorder %v2162, 8.507059e+37
        %v2164 = vand.u32 %v2149, 2147483648
        %v2165 = vor.u32 1.1754944e-38, %v2164
        %v2166 = vsel %vm2163, %v2165, %v2161
        %v2167 = vmul.f32 %v2144, %v2166
        %v2168 = vrcp.pop %v2152
        %v2169 = vmul.f32 %v2152, %v2168
        %v2170 = vsub.f32 1.0, %v2169
        %v2171 = vmul.f32 %v2168, %v2170
        %v2172 = vadd.f32 %v2168, %v2171
        %vm2173 = vweird.f32 %v2152
        %vm2174 = vweird.f32 %v2168
        %vm2175 = vmor %vm2173, %vm2174
        %v2176 = vsel %vm2175, %v2168, %v2172
        %v2177 = vand.u32 2147483647, %v2152
        %vm2178 = vcmp.eq.f32.partialorder %v2177, 8.507059e+37
        %v2179 = vand.u32 %v2152, 2147483648
        %v2180 = vor.u32 1.1754944e-38, %v2179
        %v2181 = vsel %vm2178, %v2180, %v2176
        %v2182 = vmul.f32 %v2146, %v2181
        %v2183 = vpack.c.bf16 %v2167, %v2167
        %v2184 = vpack.c.bf16 %v2182, %v2182
        %2185 = vrot.lane.b32.xlu0 %v1758, 48
        %v2186 = vpop.permute.xlu0 %2185
        %v2188 = vsel %vm835, %v2183, 0
        %v2191 = vsel %vm936, %v2186, 0
        %2193 = vmatpush.bf16.msra.mxu0 0
        %2194 = vmatpush.bf16.msra.mxu0 0
        %2195 = vmatpush.bf16.msra.mxu0 0
        %2196 = vmatpush.bf16.msra.mxu0 0
        %2197 = vmatpush.bf16.msra.mxu0 0
        %2198 = vmatpush.bf16.msra.mxu0 0
        %2199 = vmatpush.bf16.msra.mxu0 0
        %2200 = vmatpush.bf16.msra.mxu0 %v2191
        %2201 = vmatmul.bf16.gmra.mxu0 %v2188
        %v2202 = vpop.f32.mrf.mxu0
        %v2203 = vadd.f32 0.0, %v2202
        %v2204 = vpop.f32.mrf.mxu0
        %2205 = vdwg.mxu0
        %2206 = vrot.lane.b32.xlu0 %v1782, 48
        %v2207 = vpop.permute.xlu0 %2206
        %v2209 = vsel %vm835, %v2184, 0
        %v2212 = vsel %vm936, %v2207, 0
        %2214 = vmatpush.bf16.msra.mxu0 0
        %2215 = vmatpush.bf16.msra.mxu0 0
        %2216 = vmatpush.bf16.msra.mxu0 0
        %2217 = vmatpush.bf16.msra.mxu0 0
        %2218 = vmatpush.bf16.msra.mxu0 0
        %2219 = vmatpush.bf16.msra.mxu0 0
        %2220 = vmatpush.bf16.msra.mxu0 0
        %2221 = vmatpush.bf16.msra.mxu0 %v2212
        %2222 = vmatmul.bf16.gmra.mxu0 %v2209
        %v2223 = vpop.f32.mrf.mxu0
        %v2224 = vadd.f32 0.0, %v2223
        %v2225 = vpop.f32.mrf.mxu0
        %2226 = vdwg.mxu0
        %v2227 = vpack.c.bf16 %v2224, %v2203
        %v2229 = vsel %vm835, %v2227, 0
        %v2232 = vsel %vm936, %v1715, 0
        %2234 = vmatpush.bf16.msra.mxu0 0
        %2235 = vmatpush.bf16.msra.mxu0 0
        %2236 = vmatpush.bf16.msra.mxu0 0
        %2237 = vmatpush.bf16.msra.mxu0 0
        %2238 = vmatpush.bf16.msra.mxu0 0
        %2239 = vmatpush.bf16.msra.mxu0 0
        %2240 = vmatpush.bf16.msra.mxu0 0
        %2241 = vmatpush.bf16.msra.mxu0 %v2232
        %2242 = vmatmul.bf16.gmra.mxu0 %v2229
        %v2243 = vpop.f32.mrf.mxu0
        %v2244 = vadd.f32 0.0, %v2243
        %v2245 = vpop.f32.mrf.mxu0
        %v2246 = vadd.f32 0.0, %v2245
        %2247 = vdwg.mxu0
        %v2248 = vadd.f32 %v2085, %v2244
        %v2249 = vadd.f32 %v2086, %v2246
        %2250 = vrot.lane.b32.xlu0 %v1758, 104
        %v2251 = vpop.permute.xlu0 %2250
        %2252 = vrot.lane.b32.xlu0 %v1758, 72
        %v2253 = vpop.permute.xlu0 %2252
        %v2255 = vsel %vm835, %v2251, 0
        %v2258 = vsel %vm835, %v2253, 0
        %2260 = vmatpush.bf16.xpose.msra.mxu0 0
        %2261 = vmatpush.bf16.xpose.msra.mxu0 0
        %2262 = vmatpush.bf16.xpose.msra.mxu0 0
        %2263 = vmatpush.bf16.xpose.msra.mxu0 0
        %2264 = vmatpush.bf16.xpose.msra.mxu0 0
        %2265 = vmatpush.bf16.xpose.msra.mxu0 0
        %2266 = vmatpush.bf16.xpose.msra.mxu0 0
        %2267 = vmatpush.bf16.xpose.msra.mxu0 %v2258
        %2268 = vmatmul.bf16.gmra.mxu0 %v2255
        %v2269 = vpop.f32.mrf.mxu0
        %v2270 = vadd.f32 0.0, %v2269
        %v2271 = vpop.f32.mrf.mxu0
        %2272 = vdwg.mxu0
        %2273 = vrot.lane.b32.xlu0 %v1782, 104
        %v2274 = vpop.permute.xlu0 %2273
        %2275 = vrot.lane.b32.xlu0 %v1782, 72
        %v2276 = vpop.permute.xlu0 %2275
        %v2278 = vsel %vm835, %v2274, 0
        %v2281 = vsel %vm835, %v2276, 0
        %2283 = vmatpush.bf16.xpose.msra.mxu0 0
        %2284 = vmatpush.bf16.xpose.msra.mxu0 0
        %2285 = vmatpush.bf16.xpose.msra.mxu0 0
        %2286 = vmatpush.bf16.xpose.msra.mxu0 0
        %2287 = vmatpush.bf16.xpose.msra.mxu0 0
        %2288 = vmatpush.bf16.xpose.msra.mxu0 0
        %2289 = vmatpush.bf16.xpose.msra.mxu0 0
        %2290 = vmatpush.bf16.xpose.msra.mxu0 %v2281
        %2291 = vmatmul.bf16.gmra.mxu0 %v2278
        %v2292 = vpop.f32.mrf.mxu0
        %v2293 = vadd.f32 0.0, %v2292
        %v2294 = vpop.f32.mrf.mxu0
        %2295 = vdwg.mxu0
        %v2296 = vmul.f32 %v2270, 0.35355338
        %v2297 = vmul.f32 %v2293, 0.35355338
        %v2298 = vsel %vm835, %v2296, -inf
        %2299 = vmax.xlane.f32.xlu0 %v2298
        %v2300 = vpop.xlane.xlu0 %2299
        %v2301 = vsel %vm835, %v2297, -inf
        %2302 = vmax.xlane.f32.xlu0 %v2301
        %v2303 = vpop.xlane.xlu0 %2302
        %v2304 = vsub.f32 %v2296, %v2300
        %v2305 = vsub.f32 %v2297, %v2303
        %v2306 = vmul.f32 %v2304, 1.442695
        %v2307 = vpow.pop %v2306
        %v2308 = vmul.f32 %v2305, 1.442695
        %v2309 = vpow.pop %v2308
        %v2310 = vsel %vm835, %v2307, 0.0
        %2311 = vadd.xlane.f32.xlu0 %v2310
        %v2312 = vpop.xlane.xlu0 %2311
        %v2313 = vsel %vm835, %v2309, 0.0
        %2314 = vadd.xlane.f32.xlu0 %v2313
        %v2315 = vpop.xlane.xlu0 %2314
        %v2316 = vrcp.pop %v2312
        %v2317 = vmul.f32 %v2312, %v2316
        %v2318 = vsub.f32 1.0, %v2317
        %v2319 = vmul.f32 %v2316, %v2318
        %v2320 = vadd.f32 %v2316, %v2319
        %vm2321 = vweird.f32 %v2312
        %vm2322 = vweird.f32 %v2316
        %vm2323 = vmor %vm2321, %vm2322
        %v2324 = vsel %vm2323, %v2316, %v2320
        %v2325 = vand.u32 2147483647, %v2312
        %vm2326 = vcmp.eq.f32.partialorder %v2325, 8.507059e+37
        %v2327 = vand.u32 %v2312, 2147483648
        %v2328 = vor.u32 1.1754944e-38, %v2327
        %v2329 = vsel %vm2326, %v2328, %v2324
        %v2330 = vmul.f32 %v2307, %v2329
        %v2331 = vrcp.pop %v2315
        %v2332 = vmul.f32 %v2315, %v2331
        %v2333 = vsub.f32 1.0, %v2332
        %v2334 = vmul.f32 %v2331, %v2333
        %v2335 = vadd.f32 %v2331, %v2334
        %vm2336 = vweird.f32 %v2315
        %vm2337 = vweird.f32 %v2331
        %vm2338 = vmor %vm2336, %vm2337
        %v2339 = vsel %vm2338, %v2331, %v2335
        %v2340 = vand.u32 2147483647, %v2315
        %vm2341 = vcmp.eq.f32.partialorder %v2340, 8.507059e+37
        %v2342 = vand.u32 %v2315, 2147483648
        %v2343 = vor.u32 1.1754944e-38, %v2342
        %v2344 = vsel %vm2341, %v2343, %v2339
        %v2345 = vmul.f32 %v2309, %v2344
        %v2346 = vpack.c.bf16 %v2330, %v2330
        %v2347 = vpack.c.bf16 %v2345, %v2345
        %2348 = vrot.lane.b32.xlu0 %v1758, 40
        %v2349 = vpop.permute.xlu0 %2348
        %v2351 = vsel %vm835, %v2346, 0
        %v2354 = vsel %vm936, %v2349, 0
        %2356 = vmatpush.bf16.msra.mxu0 0
        %2357 = vmatpush.bf16.msra.mxu0 0
        %2358 = vmatpush.bf16.msra.mxu0 0
        %2359 = vmatpush.bf16.msra.mxu0 0
        %2360 = vmatpush.bf16.msra.mxu0 0
        %2361 = vmatpush.bf16.msra.mxu0 0
        %2362 = vmatpush.bf16.msra.mxu0 0
        %2363 = vmatpush.bf16.msra.mxu0 %v2354
        %2364 = vmatmul.bf16.gmra.mxu0 %v2351
        %v2365 = vpop.f32.mrf.mxu0
        %v2366 = vadd.f32 0.0, %v2365
        %v2367 = vpop.f32.mrf.mxu0
        %2368 = vdwg.mxu0
        %2369 = vrot.lane.b32.xlu0 %v1782, 40
        %v2370 = vpop.permute.xlu0 %2369
        %v2372 = vsel %vm835, %v2347, 0
        %v2375 = vsel %vm936, %v2370, 0
        %2377 = vmatpush.bf16.msra.mxu0 0
        %2378 = vmatpush.bf16.msra.mxu0 0
        %2379 = vmatpush.bf16.msra.mxu0 0
        %2380 = vmatpush.bf16.msra.mxu0 0
        %2381 = vmatpush.bf16.msra.mxu0 0
        %2382 = vmatpush.bf16.msra.mxu0 0
        %2383 = vmatpush.bf16.msra.mxu0 0
        %2384 = vmatpush.bf16.msra.mxu0 %v2375
        %2385 = vmatmul.bf16.gmra.mxu0 %v2372
        %v2386 = vpop.f32.mrf.mxu0
        %v2387 = vadd.f32 0.0, %v2386
        %v2388 = vpop.f32.mrf.mxu0
        %2389 = vdwg.mxu0
        %v2390 = vpack.c.bf16 %v2387, %v2366
        %v2392 = vsel %vm835, %v2390, 0
        %v2395 = vsel %vm936, %v1716, 0
        %2397 = vmatpush.bf16.msra.mxu0 0
        %2398 = vmatpush.bf16.msra.mxu0 0
        %2399 = vmatpush.bf16.msra.mxu0 0
        %2400 = vmatpush.bf16.msra.mxu0 0
        %2401 = vmatpush.bf16.msra.mxu0 0
        %2402 = vmatpush.bf16.msra.mxu0 0
        %2403 = vmatpush.bf16.msra.mxu0 0
        %2404 = vmatpush.bf16.msra.mxu0 %v2395
        %2405 = vmatmul.bf16.gmra.mxu0 %v2392
        %v2406 = vpop.f32.mrf.mxu0
        %v2407 = vadd.f32 0.0, %v2406
        %v2408 = vpop.f32.mrf.mxu0
        %v2409 = vadd.f32 0.0, %v2408
        %2410 = vdwg.mxu0
        %v2411 = vadd.f32 %v2248, %v2407
        %v2412 = vadd.f32 %v2249, %v2409
        %v2413 = vadd.f32 %v1705, %v2411
        %v2414 = vadd.f32 %v1706, %v2412
        %v2415 = vsel %vm809, %v2413, 0.0
        %2416 = vadd.xlane.f32.xlu0 %v2415
        %v2417 = vpop.xlane.xlu0 %2416
        %v2418 = vsel %vm809, %v2414, 0.0
        %2419 = vadd.xlane.f32.xlu0 %v2418
        %v2420 = vpop.xlane.xlu0 %2419
        %v2421 = vmul.f32 %v2417, %v1503
        %v2422 = vmul.f32 %v2420, %v1503
        %v2423 = vsub.f32 %v2413, %v2421
        %v2424 = vsub.f32 %v2414, %v2422
        %v2425 = vmul.f32 %v2423, %v2423
        %v2426 = vmul.f32 %v2424, %v2424
        %v2427 = vsel %vm809, %v2425, 0.0
        %2428 = vadd.xlane.f32.xlu0 %v2427
        %v2429 = vpop.xlane.xlu0 %2428
        %v2430 = vsel %vm809, %v2426, 0.0
        %2431 = vadd.xlane.f32.xlu0 %v2430
        %v2432 = vpop.xlane.xlu0 %2431
        %v2433 = vmul.f32 %v2429, %v1503
        %v2434 = vmul.f32 %v2432, %v1503
        %v2435 = vadd.f32 %v2433, 1e-05
        %v2436 = vadd.f32 %v2434, 1e-05
        %v2437 = vrsqrt.pop %v2435
        %v2438 = vmul.f32 %v2437, %v2435
        %v2439 = vmul.f32 %v2438, %v2437
        %v2440 = vmul.f32 0.5, %v2439
        %v2441 = vsub.f32 1.5, %v2440
        %v2442 = vmul.f32 %v2437, %v2441
        %vm2443 = vweird.f32 %v2435
        %vm2444 = vweird.f32 %v2437
        %vm2445 = vmor %vm2443, %vm2444
        %v2446 = vsel %vm2445, %v2437, %v2442
        %v2447 = vrsqrt.pop %v2436
        %v2448 = vmul.f32 %v2447, %v2436
        %v2449 = vmul.f32 %v2448, %v2447
        %v2450 = vmul.f32 0.5, %v2449
        %v2451 = vsub.f32 1.5, %v2450
        %v2452 = vmul.f32 %v2447, %v2451
        %vm2453 = vweird.f32 %v2436
        %vm2454 = vweird.f32 %v2447
        %vm2455 = vmor %vm2453, %vm2454
        %v2456 = vsel %vm2455, %v2447, %v2452
        %v2457 = vmul.f32 %v2423, %v2446
        %v2458 = vmul.f32 %v2424, %v2456
        %s2459 = scalar_lea.vmem %s7, 1
        %v2460 = vld [vmem:[%s2459] sm:$0x1]
        %v2462 = vperm.slane %v2460, 0
        %v2464 = vmul.f32 %v2457, %v2462
        %v2465 = vmul.f32 %v2458, %v2462
        %s2466 = scalar_lea.vmem %s8, 1
        %v2467 = vld [vmem:[%s2466] sm:$0x1]
        %v2469 = vperm.slane %v2467, 0
        %v2471 = vadd.f32 %v2464, %v2469
        %v2472 = vadd.f32 %v2465, %v2469
        %v2473 = vpack.c.bf16 %v2472, %v2471
        %s2474 = scalar_lea.vmem %s9, 16
        %v2475 = vld [vmem:[%s2474] sm:$0xf]
        %v2476 = vld [vmem:[%s2474 + $0x4] sm:$0xf]
        %v2477 = vld [vmem:[%s2474 + $0x8] sm:$0xf]
        %v2478 = vld [vmem:[%s2474 + $0xc] sm:$0xf]
        %s2479 = scalar_lea.vmem %s10, 1
        %v2480 = vld [vmem:[%s2479] sm:$0x1]
        %v2482 = vperm.slane %v2480, 0
        %v2488 = vunpack.c.l.b16 %v2475
        %v2489 = vunpack.c.l.b16 %v2476
        %v2490 = vunpack.c.l.b16 %v2477
        %v2491 = vunpack.c.l.b16 %v2478
        %v2492 = vpack.c.b16 %v2489, %v2488
        %v2493 = vpack.c.b16 %v2491, %v2490
        %v2497 = vsel %vm809, %v2473, 0
        %2499 = vmatpush.bf16.msra.mxu0 0
        %2500 = vmatpush.bf16.msra.mxu0 0
        %2501 = vmatpush.bf16.msra.mxu0 0
        %2502 = vmatpush.bf16.msra.mxu0 0
        %2503 = vmatpush.bf16.msra.mxu0 0
        %2504 = vmatpush.bf16.msra.mxu0 0
        %2505 = vmatpush.bf16.msra.mxu0 %v2493
        %2506 = vmatpush.bf16.msra.mxu0 %v2492
        %2507 = vmatmul.bf16.gmra.mxu0 %v2497
        %v2508 = vpop.f32.mrf.mxu0
        %v2509 = vadd.f32 %v2482, %v2508
        %v2510 = vpop.f32.mrf.mxu0
        %v2511 = vadd.f32 %v2482, %v2510
        %2512 = vdwg.mxu0
        %v2513 = vmax.f32 %v2509, 0.0
        %v2514 = vmax.f32 %v2511, 0.0
        %v2515 = vpack.c.bf16 %v2514, %v2513
        %s2516 = scalar_lea.vmem %s11, 32
        %v2517 = vld [vmem:[%s2516] sm:$0xf]
        %v2518 = vld [vmem:[%s2516 + $0x4] sm:$0xf]
        %v2519 = vld [vmem:[%s2516 + $0x8] sm:$0xf]
        %v2520 = vld [vmem:[%s2516 + $0xc] sm:$0xf]
        %v2521 = vld [vmem:[%s2516 + $0x10] sm:$0xf]
        %v2522 = vld [vmem:[%s2516 + $0x14] sm:$0xf]
        %v2523 = vld [vmem:[%s2516 + $0x18] sm:$0xf]
        %v2524 = vld [vmem:[%s2516 + $0x1c] sm:$0xf]
        %s2525 = scalar_lea.vmem %s12, 1
        %v2526 = vld [vmem:[%s2525] sm:$0x1]
        %v2528 = vperm.slane %v2526, 0
        %v2538 = vunpack.c.l.b16 %v2517
        %v2539 = vunpack.c.l.b16 %v2518
        %v2540 = vunpack.c.l.b16 %v2519
        %v2541 = vunpack.c.l.b16 %v2520
        %v2542 = vunpack.c.l.b16 %v2521
        %v2543 = vunpack.c.l.b16 %v2522
        %v2544 = vunpack.c.l.b16 %v2523
        %v2545 = vunpack.c.l.b16 %v2524
        %v2546 = vpack.c.b16 %v2539, %v2538
        %v2547 = vpack.c.b16 %v2541, %v2540
        %v2548 = vpack.c.b16 %v2543, %v2542
        %v2549 = vpack.c.b16 %v2545, %v2544
        %v2555 = vsel %vm1631, %v2515, 0
        %2557 = vmatpush.bf16.msra.mxu0 0
        %2558 = vmatpush.bf16.msra.mxu0 0
        %2559 = vmatpush.bf16.msra.mxu0 0
        %2560 = vmatpush.bf16.msra.mxu0 0
        %2561 = vmatpush.bf16.msra.mxu0 %v2549
        %2562 = vmatpush.bf16.msra.mxu0 %v2548
        %2563 = vmatpush.bf16.msra.mxu0 %v2547
        %2564 = vmatpush.bf16.msra.mxu0 %v2546
        %2565 = vmatmul.bf16.gmra.mxu0 %v2555
        %v2566 = vpop.f32.mrf.mxu0
        %v2567 = vadd.f32 %v2528, %v2566
        %v2568 = vpop.f32.mrf.mxu0
        %v2569 = vadd.f32 %v2528, %v2568
        %2570 = vdwg.mxu0
        %v2571 = vadd.f32 %v2471, %v2567
        %v2572 = vadd.f32 %v2472, %v2569
        %v2573 = vsel %vm809, %v2571, 0.0
        %2574 = vadd.xlane.f32.xlu0 %v2573
        %v2575 = vpop.xlane.xlu0 %2574
        %v2576 = vsel %vm809, %v2572, 0.0
        %2577 = vadd.xlane.f32.xlu0 %v2576
        %v2578 = vpop.xlane.xlu0 %2577
        %v2579 = vmul.f32 %v2575, %v1503
        %v2580 = vmul.f32 %v2578, %v1503
        %v2581 = vsub.f32 %v2571, %v2579
        %v2582 = vsub.f32 %v2572, %v2580
        %v2583 = vmul.f32 %v2581, %v2581
        %v2584 = vmul.f32 %v2582, %v2582
        %v2585 = vsel %vm809, %v2583, 0.0
        %2586 = vadd.xlane.f32.xlu0 %v2585
        %v2587 = vpop.xlane.xlu0 %2586
        %v2588 = vsel %vm809, %v2584, 0.0
        %2589 = vadd.xlane.f32.xlu0 %v2588
        %v2590 = vpop.xlane.xlu0 %2589
        %v2591 = vmul.f32 %v2587, %v1503
        %v2592 = vmul.f32 %v2590, %v1503
        %v2593 = vadd.f32 %v2591, 1e-05
        %v2594 = vadd.f32 %v2592, 1e-05
        %v2595 = vrsqrt.pop %v2593
        %v2596 = vmul.f32 %v2595, %v2593
        %v2597 = vmul.f32 %v2596, %v2595
        %v2598 = vmul.f32 0.5, %v2597
        %v2599 = vsub.f32 1.5, %v2598
        %v2600 = vmul.f32 %v2595, %v2599
        %vm2601 = vweird.f32 %v2593
        %vm2602 = vweird.f32 %v2595
        %vm2603 = vmor %vm2601, %vm2602
        %v2604 = vsel %vm2603, %v2595, %v2600
        %v2605 = vrsqrt.pop %v2594
        %v2606 = vmul.f32 %v2605, %v2594
        %v2607 = vmul.f32 %v2606, %v2605
        %v2608 = vmul.f32 0.5, %v2607
        %v2609 = vsub.f32 1.5, %v2608
        %v2610 = vmul.f32 %v2605, %v2609
        %vm2611 = vweird.f32 %v2594
        %vm2612 = vweird.f32 %v2605
        %vm2613 = vmor %vm2611, %vm2612
        %v2614 = vsel %vm2613, %v2605, %v2610
        %v2615 = vmul.f32 %v2581, %v2604
        %v2616 = vmul.f32 %v2582, %v2614
        %s2617 = scalar_lea.vmem %s13, 1
        %v2618 = vld [vmem:[%s2617] sm:$0x1]
        %v2620 = vperm.slane %v2618, 0
        %v2622 = vmul.f32 %v2615, %v2620
        %v2623 = vmul.f32 %v2616, %v2620
        %s2624 = scalar_lea.vmem %s14, 1
        %v2625 = vld [vmem:[%s2624] sm:$0x1]
        %v2627 = vperm.slane %v2625, 0
        %v2629 = vadd.f32 %v2622, %v2627
        %v2630 = vadd.f32 %v2623, %v2627
        %v2631 = vld [vmem:[%s15] sm:$0xff]
        %v2632 = vmul.f32 %v2631, %v2629
        %v2633 = vmul.f32 %v2631, %v2630
        %v2634 = vsel %vm809, %v2632, 0.0
        %v2635 = vrot.slane %v2634, 4
        %v2636 = vadd.f32 %v2634, %v2635
        %v2637 = vrot.slane %v2636, 2
        %v2638 = vadd.f32 %v2636, %v2637
        %v2639 = vrot.slane %v2638, 1
        %v2640 = vadd.f32 %v2638, %v2639
        %v2641 = vsel %vm809, %v2633, 0.0
        %v2642 = vrot.slane %v2641, 4
        %v2643 = vadd.f32 %v2641, %v2642
        %v2644 = vrot.slane %v2643, 2
        %v2645 = vadd.f32 %v2643, %v2644
        %v2646 = vrot.slane %v2645, 1
        %v2647 = vadd.f32 %v2645, %v2646
        %v2648 = vld [vmem:[%s16] sm:$0x1]
        %v2649 = vadd.f32 %v2640, %v2648
        %v2650 = vadd.f32 %v2647, %v2648
        %vm2651 = vcmask 253952
        %2652 = vst.msk [vmem:[%s772] sm:$0x1] %vm2651, %v2649
        %2653 = vst.msk [vmem:[%s772 + $0x1] sm:$0x1] %vm2651, %v2650
        %v2654 = vld [vmem:[%s17] sm:$0xff]
        %v2655 = vld [vmem:[%s761] sm:$0xf]
        %v2656 = vld [vmem:[%s18] sm:$0xff]
        %vm2657 = vcmask 31744
        %v2659 = vsel %vm2657, %v2654, 0
        %v2662 = vsel %vm936, %v2655, 0
        %2664 = vmatpush.msra.mxu0 0.0
        %2665 = vmatpush.msra.mxu0 0.0
        %2666 = vmatpush.msra.mxu0 0.0
        %2667 = vmatpush.msra.mxu0 0.0
        %2668 = vmatpush.msra.mxu0 0.0
        %2669 = vmatpush.msra.mxu0 0.0
        %2670 = vmatpush.msra.mxu0 0.0
        %2671 = vmatpush.msra.mxu0 0.0
        %2672 = vmatpush.msra.mxu0 0.0
        %2673 = vmatpush.msra.mxu0 0.0
        %2674 = vmatpush.msra.mxu0 0.0
        %2675 = vmatpush.msra.mxu0 0.0
        %2676 = vmatpush.msra.mxu0 0.0
        %2677 = vmatpush.msra.mxu0 0.0
        %2678 = vmatpush.msra.mxu0 0.0
        %2679 = vmatpush.msra.mxu0 %v2662
        %2680 = vmatmul.f32.gmra.mxu0 %v2659
        %v2681 = vpop.f32.mrf.mxu0
        %v2682 = vadd.f32 %v2656, %v2681
        %2683 = vdwg.mxu0
        %v2684 = vxor.u32 %v2682, 2147483648
        %v2685 = vmul.f32 %v2684, 1.442695
        %v2686 = vpow.pop %v2685
        %v2687 = vadd.f32 %v2686, 1.0
        %v2688 = vrcp.pop %v2687
        %v2689 = vmul.f32 %v2687, %v2688
        %v2690 = vsub.f32 1.0, %v2689
        %v2691 = vmul.f32 %v2688, %v2690
        %v2692 = vadd.f32 %v2688, %v2691
        %vm2693 = vweird.f32 %v2687
        %vm2694 = vweird.f32 %v2688
        %vm2695 = vmor %vm2693, %vm2694
        %v2696 = vsel %vm2695, %v2688, %v2692
        %v2697 = vand.u32 2147483647, %v2687
        %vm2698 = vcmp.eq.f32.partialorder %v2697, 8.507059e+37
        %v2699 = vand.u32 %v2687, 2147483648
        %v2700 = vor.u32 1.1754944e-38, %v2699
        %v2701 = vsel %vm2698, %v2700, %v2696
        %v2702 = vmul.f32 1.0, %v2701
        %v2703 = vld [vmem:[%s767] sm:$0xff]
        %v2704 = vmul.f32 %v2703, %v2702
        %v2705 = vtanh.pop %v2682
        %v2706 = vmul.f32 %v2702, %v2705
        %v2707 = vadd.f32 %v2704, %v2706
        %2708 = vst.msk [vmem:[%s778] sm:$0xff] %vm809, %v2707
        %v2709 = vld [vmem:[%s17] sm:$0xff]
        %s2710 = scalar_lea.vmem %s761, 4
        %v2711 = vld [vmem:[%s2710] sm:$0xf]
        %v2712 = vld [vmem:[%s18] sm:$0xff]
        %v2714 = vsel %vm2657, %v2709, 0
        %v2717 = vsel %vm936, %v2711, 0
        %2719 = vmatpush.msra.mxu0 0.0
        %2720 = vmatpush.msra.mxu0 0.0
        %2721 = vmatpush.msra.mxu0 0.0
        %2722 = vmatpush.msra.mxu0 0.0
        %2723 = vmatpush.msra.mxu0 0.0
        %2724 = vmatpush.msra.mxu0 0.0
        %2725 = vmatpush.msra.mxu0 0.0
        %2726 = vmatpush.msra.mxu0 0.0
        %2727 = vmatpush.msra.mxu0 0.0
        %2728 = vmatpush.msra.mxu0 0.0
        %2729 = vmatpush.msra.mxu0 0.0
        %2730 = vmatpush.msra.mxu0 0.0
        %2731 = vmatpush.msra.mxu0 0.0
        %2732 = vmatpush.msra.mxu0 0.0
        %2733 = vmatpush.msra.mxu0 0.0
        %2734 = vmatpush.msra.mxu0 %v2717
        %2735 = vmatmul.f32.gmra.mxu0 %v2714
        %v2736 = vpop.f32.mrf.mxu0
        %v2737 = vadd.f32 %v2712, %v2736
        %2738 = vdwg.mxu0
        %v2739 = vxor.u32 %v2737, 2147483648
        %v2740 = vmul.f32 %v2739, 1.442695
        %v2741 = vpow.pop %v2740
        %v2742 = vadd.f32 %v2741, 1.0
        %v2743 = vrcp.pop %v2742
        %v2744 = vmul.f32 %v2742, %v2743
        %v2745 = vsub.f32 1.0, %v2744
        %v2746 = vmul.f32 %v2743, %v2745
        %v2747 = vadd.f32 %v2743, %v2746
        %vm2748 = vweird.f32 %v2742
        %vm2749 = vweird.f32 %v2743
        %vm2750 = vmor %vm2748, %vm2749
        %v2751 = vsel %vm2750, %v2743, %v2747
        %v2752 = vand.u32 2147483647, %v2742
        %vm2753 = vcmp.eq.f32.partialorder %v2752, 8.507059e+37
        %v2754 = vand.u32 %v2742, 2147483648
        %v2755 = vor.u32 1.1754944e-38, %v2754
        %v2756 = vsel %vm2753, %v2755, %v2751
        %v2757 = vmul.f32 1.0, %v2756
        %s2758 = scalar_lea.vmem %s767, 8
        %v2759 = vld [vmem:[%s2758] sm:$0xff]
        %v2760 = vmul.f32 %v2759, %v2757
        %v2761 = vtanh.pop %v2737
        %v2762 = vmul.f32 %v2757, %v2761
        %v2763 = vadd.f32 %v2760, %v2762
        %s2764 = scalar_lea.vmem %s778, 8
        %2765 = vst.msk [vmem:[%s2764] sm:$0xff] %vm809, %v2763
        %v2766 = vsel %vm809, %v2629, 0.0
        %v2767 = vrot.slane %v2766, 4
        %v2768 = vadd.f32 %v2766, %v2767
        %v2769 = vrot.slane %v2768, 2
        %v2770 = vadd.f32 %v2768, %v2769
        %v2771 = vrot.slane %v2770, 1
        %v2772 = vadd.f32 %v2770, %v2771
        %v2773 = vsel %vm809, %v2630, 0.0
        %v2774 = vrot.slane %v2773, 4
        %v2775 = vadd.f32 %v2773, %v2774
        %v2776 = vrot.slane %v2775, 2
        %v2777 = vadd.f32 %v2775, %v2776
        %v2778 = vrot.slane %v2777, 1
        %v2779 = vadd.f32 %v2777, %v2778
        %v2780 = vrcp.pop 8.0
        %v2781 = vmul.f32 8.0, %v2780
        %v2782 = vsub.f32 1.0, %v2781
        %v2783 = vmul.f32 %v2780, %v2782
        %v2784 = vadd.f32 %v2780, %v2783
        %vm2785 = vweird.f32 %v2780
        %v2786 = vsel %vm2785, %v2780, %v2784
        %v2787 = vmul.f32 %v2772, %v2786
        %v2788 = vmul.f32 %v2779, %v2786
        %v2789 = vpack.c.bf16 %v2787, %v2787
        %v2790 = vpack.c.bf16 %v2788, %v2788
        %v2791 = vld [vmem:[%s19] sm:$0xf]
        %v2792 = vld [vmem:[%s19 + $0x4] sm:$0xf]
        %v2793 = vld [vmem:[%s19 + $0x8] sm:$0xf]
        %v2794 = vld [vmem:[%s19 + $0xc] sm:$0xf]
        %v2795 = vld [vmem:[%s20] sm:$0x1]
        %v2797 = vperm.slane %v2795, 0
        %v2801 = vunpack.c.l.b16 %v2789
        %v2802 = vunpack.c.l.b16 %v2790
        %vm2803 = vcmask 1041409
        %v2804 = vsel %vm2803, %v2802, %v2801
        %v2805 = vpack.c.b16 %v2804, %v2804
        %v2810 = vunpack.c.l.b16 %v2791
        %v2811 = vunpack.c.l.b16 %v2792
        %v2812 = vunpack.c.l.b16 %v2793
        %v2813 = vunpack.c.l.b16 %v2794
        %v2814 = vpack.c.b16 %v2811, %v2810
        %v2815 = vpack.c.b16 %v2813, %v2812
        %v2819 = vsel %vm809, %v2805, 0
        %2821 = vmatpush.bf16.msra.mxu0 0
        %2822 = vmatpush.bf16.msra.mxu0 0
        %2823 = vmatpush.bf16.msra.mxu0 0
        %2824 = vmatpush.bf16.msra.mxu0 0
        %2825 = vmatpush.bf16.msra.mxu0 0
        %2826 = vmatpush.bf16.msra.mxu0 0
        %2827 = vmatpush.bf16.msra.mxu0 %v2815
        %2828 = vmatpush.bf16.msra.mxu0 %v2814
        %2829 = vmatmul.bf16.gmra.mxu0 %v2819
        %v2830 = vpop.f32.mrf.mxu0
        %v2831 = vadd.f32 %v2797, %v2830
        %v2832 = vpop.f32.mrf.mxu0
        %2833 = vdwg.mxu0
        %vm2834 = vcmask 1041408
        %v2835 = vsel %vm2834, %v2831, -inf
        %2836 = vmax.xlane.f32.xlu0 %v2835
        %v2837 = vpop.xlane.xlu0 %2836
        %v2838 = vsub.f32 %v2831, %v2837
        %v2839 = vmul.f32 %v2838, 1.442695
        %v2840 = vpow.pop %v2839
        %v2841 = vsel %vm2834, %v2840, 0.0
        %2842 = vadd.xlane.f32.xlu0 %v2841
        %v2843 = vpop.xlane.xlu0 %2842
        %v2844 = vrcp.pop %v2843
        %v2845 = vmul.f32 %v2843, %v2844
        %v2846 = vsub.f32 1.0, %v2845
        %v2847 = vmul.f32 %v2844, %v2846
        %v2848 = vadd.f32 %v2844, %v2847
        %vm2849 = vweird.f32 %v2843
        %vm2850 = vweird.f32 %v2844
        %vm2851 = vmor %vm2849, %vm2850
        %v2852 = vsel %vm2851, %v2844, %v2848
        %v2853 = vand.u32 2147483647, %v2843
        %vm2854 = vcmp.eq.f32.partialorder %v2853, 8.507059e+37
        %v2855 = vand.u32 %v2843, 2147483648
        %v2856 = vor.u32 1.1754944e-38, %v2855
        %v2857 = vsel %vm2854, %v2856, %v2852
        %v2858 = vmul.f32 %v2840, %v2857
        %v2860 = vrot.slane %v2858, 1
        %2862 = vst [vmem:[%s750] sm:$0x1] %v2858
        %2863 = vst [vmem:[%s750 + $0x1] sm:$0x1] %v2860
        %s2864 = smul.u32 2, %s38
        %p2865 = scmp.lt.s32.totalorder %s2864, 3
        %s2866 = scalar_select %p2865, %s2864, 3
        %s2867 = scalar_lea.vmem %s21, %s2866
        %s2868 = smul.u32 2, %s38
        %p2869 = scmp.lt.s32.totalorder %s2868, 3
        %s2870 = scalar_select %p2869, %s2868, 3
        %s2871 = smul.addr %s2870, 8
        %s2872 = scalar_lea.vmem %s22, %s2871
        %s2873 = sand.u32 %s554, 1
        %s2874 = scalar_lea.sflag [#allocation3], %s2873
        %s2875 = sand.u32 %s554, 1
        %s2876 = smul.addr %s2875, 2
        %s2877 = scalar_lea.vmem [#allocation2], %s2876
        // Predicated region
        $region105: #{_forward_core.1} parent=103 // pred_check
          %p2878 = pneg %p512
        $region106: #{_forward_core.1} parent=103 // pred_check_branch
          %2880 = sbr.rel (%p2878) target = $region108
        $region107: #{_forward_core.1} parent=103 // pred_region
          %s2881 = smul.u32 2, %s38
        $region108: #{_forward_core.1} parent=103 // pred_fallthru
          _
        // Predicated region
        $region109: #{_forward_core.1} parent=103 // pred_check
          %p2882 = pneg %p538
        $region110: #{_forward_core.1} parent=103 // pred_check_branch
          %2884 = sbr.rel (%p2882) target = $region112
        $region111: #{_forward_core.1} parent=103 // pred_region
          %s2885 = smul.u32 2, %s38
        $region112: #{_forward_core.1} parent=103 // pred_fallthru
          _
        // Predicated region
        $region113: #{_forward_core.1} parent=103 // pred_check
          %p2886 = pneg %p564
        $region114: #{_forward_core.1} parent=103 // pred_check_branch
          %2888 = sbr.rel (%p2886) target = $region116
        $region115: #{_forward_core.1} parent=103 // pred_region
          %s2889 = smul.u32 2, %s38
          %2891 = vsyncadd %s2874, 0
          %s2892 = scalar_lea.hbm %s23, %s2889
          %s2893 = sshll.u32 %s2877, 4
          %s2894 = int_to_ptr.vmem [resolvable:$true] %s2893
          %s2895 = sshll.u32 %s2892, 4
          %s2896 = int_to_ptr.hbm [resolvable:$true] %s2895
          %2901 = dma.vmem_to_hbm [thread:$0]  %s2894, 32, %s2896, %s2874, 16, 16, 1
        $region116: #{_forward_core.1} parent=103 // pred_fallthru
          _
      $region104: #{_forward_core.1} parent=5 // pred_fallthru
        _
      %p2902 = scmp.le.s32.totalorder 2, %s33
      // Predicated region
      $region117: #{_forward_core.1} parent=5 // pred_check
        %p2903 = pneg %p2902
      $region118: #{_forward_core.1} parent=5 // pred_check_branch
        %2905 = sbr.rel (%p2903) target = $region120
      $region119: #{_forward_core.1} parent=5 // pred_region
        %s2906 = ssub.s32 %s33, 2
        // Predicated region
        $region121: #{_forward_core.1} parent=119 // pred_check
          %p2907 = pneg %p518
        $region122: #{_forward_core.1} parent=119 // pred_check_branch
          %2909 = sbr.rel (%p2907) target = $region124
        $region123: #{_forward_core.1} parent=119 // pred_region
          %s2910 = smul.u32 2, %s39
          %p2911 = scmp.lt.s32.totalorder %s2910, 3
          %s2912 = scalar_select %p2911, %s2910, 3
          %s2913 = scalar_lea.vmem %s21, %s2912
        $region124: #{_forward_core.1} parent=119 // pred_fallthru
          _
        // Predicated region
        $region125: #{_forward_core.1} parent=119 // pred_check
          %p2914 = pneg %p544
        $region126: #{_forward_core.1} parent=119 // pred_check_branch
          %2916 = sbr.rel (%p2914) target = $region128
        $region127: #{_forward_core.1} parent=119 // pred_region
          %s2917 = smul.u32 2, %s39
          %p2918 = scmp.lt.s32.totalorder %s2917, 3
          %s2919 = scalar_select %p2918, %s2917, 3
          %s2920 = smul.addr %s2919, 8
          %s2921 = scalar_lea.vmem %s22, %s2920
        $region128: #{_forward_core.1} parent=119 // pred_fallthru
          _
        // Predicated region
        $region129: #{_forward_core.1} parent=119 // pred_check
          %p2922 = pneg %p570
        $region130: #{_forward_core.1} parent=119 // pred_check_branch
          %2924 = sbr.rel (%p2922) target = $region132
        $region131: #{_forward_core.1} parent=119 // pred_region
          %s2925 = sand.u32 %s555, 1
          %s2926 = scalar_lea.sflag [#allocation3], %s2925
          %s2927 = sand.u32 %s555, 1
          %s2928 = smul.addr %s2927, 2
          %s2929 = scalar_lea.vmem [#allocation2], %s2928
          %2931 = dma.done %s2926, 32
        $region132: #{_forward_core.1} parent=119 // pred_fallthru
          _
      $region120: #{_forward_core.1} parent=5 // pred_fallthru
        _
    $region6: #{_forward_core.1} parent=1 // loop_footer
      %s37 = sadd.s32 1, %s33
    $region7: #{_forward_core.1} parent=1 // loop_footer_branch
      %32 = sbr.rel target = $region3
    $region8: #{_forward_core.1} parent=1 // loop_exit
      _
    %2932 = vsyncpa [#allocation3], 1
    %s2933 = scalar_lea.sflag [#allocation3], 1
    %2934 = vsyncpa %s2933, 1

</llo_original>
